<compile_context>
chip_gen: v5e
topology: v5e:2x2
jax: 0.10.0
libtpu: 0.0.40
codegen_flags: <defaults>
</compile_context>

<pallas_src>
import functools
import math

import numpy as np
import jax
import jax.numpy as jnp
from jax.experimental import pallas as pl
from jax.experimental.pallas import tpu as pltpu


# ---------------------------------------------------------------------------
# Fused Pallas kernel
# ---------------------------------------------------------------------------

def _wide_basic_kernel(*refs, H, W, stride, has_shortcut, nb):
    it = iter(refs)
    x_ref = next(it)                              # (nb, Cin, H*W)
    m_ref = next(it)                              # (9, H*W)  0/1 boundary masks
    s1_ref = next(it)                             # (Cin, 1)
    b1_ref = next(it)                             # (Cin, 1)
    w1_ref = next(it)                             # (Cmid, 9*Cin)
    s2_ref = next(it)                             # (Cmid, 1)
    b2_ref = next(it)                             # (Cmid, 1)
    w2_ref = next(it)                             # (Cout, 9*Cmid)
    wsc_ref = next(it) if has_shortcut else None  # (Cout, Cin)
    bsc_ref = next(it) if has_shortcut else None  # (Cout, 1)
    sel_ref = next(it) if stride > 1 else None    # (H*W, Ho*Wo) 0/1 subsample
    o_ref = next(it)                              # (nb, Cout, Ho*Wo)
    col1_ref = next(it)                           # (9*Cin,  nb*H*W) scratch
    col2_ref = next(it)                           # (9*Cmid, nb*H*W) scratch

    HW = H * W
    Cin = x_ref.shape[1]
    Cmid = w1_ref.shape[0]

    s1 = s1_ref[...]
    b1 = b1_ref[...]
    s2 = s2_ref[...]
    b2 = b2_ref[...]

    def pack_taps(act, col_ref, c, i):
        # act: (c, HW) activation of image i.  Write its 9 shifted / masked
        # 3x3 windows into col_ref[:, i*HW:(i+1)*HW]; every store lands at a
        # (multiple-of-8 sublane, multiple-of-256 lane) offset -> dense.
        for t in range(9):
            dy, dx = t // 3 - 1, t % 3 - 1
            d = dy * W + dx
            tap = act if d == 0 else pltpu.roll(act, shift=(-d) % HW, axis=1)
            if t != 4:  # boundary taps: zero what zero-padding would have read
                tap = tap * m_ref[t:t + 1, :]
            col_ref[t * c:(t + 1) * c, i * HW:(i + 1) * HW] = tap

    # ---- stage 1+2: BN1 (folded) + ReLU, tap packing, conv1 (3x3, stride 1)
    for i in range(nb):
        a1 = jnp.maximum(x_ref[i] * s1 + b1, 0.0)
        pack_taps(a1, col1_ref, Cin, i)
    mid = jnp.dot(w1_ref[...], col1_ref[...],
                  preferred_element_type=jnp.float32)          # (Cmid, nb*HW)
    # TODO(synk): training-mode stochastic Dropout not implemented (eval identity).

    # ---- stage 3+4: BN2 (folded) + ReLU, tap packing, conv2 (3x3)
    for i in range(nb):
        a2 = jnp.maximum(mid[:, i * HW:(i + 1) * HW] * s2 + b2, 0.0)
        pack_taps(a2, col2_ref, Cmid, i)
    out = jnp.dot(w2_ref[...], col2_ref[...],
                  preferred_element_type=jnp.float32)          # (Cout, nb*HW)

    # ---- stage 5: stride subsample, shortcut, residual add, lane-dense store
    for i in range(nb):
        oi = out[:, i * HW:(i + 1) * HW]
        if stride > 1:
            oi = jnp.dot(oi, sel_ref[...], preferred_element_type=jnp.float32)
        if has_shortcut:
            xi = x_ref[i]
            if stride > 1:
                xi = jnp.dot(xi, sel_ref[...],
                             preferred_element_type=jnp.float32)
            sc = jnp.dot(wsc_ref[...], xi,
                         preferred_element_type=jnp.float32) + bsc_ref[...]
        else:
            sc = x_ref[i]                   # identity: Cin == Cout, stride == 1
        o_ref[i] = oi + sc


# ---------------------------------------------------------------------------
# Wrapper
# ---------------------------------------------------------------------------

def _bn_affine(bn, eps=1e-5):
    scale = bn["gamma"] / jnp.sqrt(bn["var"] + eps)
    bias = bn["beta"] - bn["mean"] * scale
    return scale, bias


def _oihw_to_kmajor(w_oihw):
    # OIHW -> (Cout, kh*kw*Cin); K ordering (kh, kw, ci) matches tap packing.
    co, ci, kh, kw = w_oihw.shape
    return jnp.transpose(w_oihw, (0, 2, 3, 1)).reshape(co, kh * kw * ci)


def _boundary_masks(H, W):
    yy, xx = np.meshgrid(np.arange(H), np.arange(W), indexing="ij")
    m = np.zeros((9, H * W), np.float32)
    for t in range(9):
        dy, dx = t // 3 - 1, t % 3 - 1
        ok = (yy + dy >= 0) & (yy + dy < H) & (xx + dx >= 0) & (xx + dx < W)
        m[t] = ok.reshape(-1).astype(np.float32)
    return m


def _stride_select(H, W, stride):
    Ho = (H - 1) // stride + 1
    Wo = (W - 1) // stride + 1
    S = np.zeros((H * W, Ho * Wo), np.float32)
    for y in range(Ho):
        for x in range(Wo):
            S[(stride * y) * W + stride * x, y * Wo + x] = 1.0
    return S


def _const_spec(shape):
    nd = len(shape)

    def idx(n):
        return (0,) * nd

    return pl.BlockSpec(shape, idx)


def wide_basic_forward(params, x_nchw, *, batch_block=4):
    x = x_nchw.astype(jnp.float32)
    N, Cin, H, W = x.shape
    HW = H * W
    stride = int(params["stride"])
    Ho = (H - 1) // stride + 1
    Wo = (W - 1) // stride + 1

    s1, b1 = _bn_affine(params["bn1"])
    s2, b2 = _bn_affine(params["bn2"])
    w1 = _oihw_to_kmajor(params["conv1_w"])      # (Cmid, 9*Cin)
    w2 = _oihw_to_kmajor(params["conv2_w"])      # (Cout, 9*Cmid)
    Cmid, Cout = w1.shape[0], w2.shape[0]
    has_shortcut = "sc_w" in params

    # Batch block: largest nb <= batch_block dividing N while keeping >= 2 grid
    # steps, so both v7x TensorCores get work on the "parallel" grid axis.
    nb = 1
    for cand in range(min(batch_block, N), 0, -1):
        if N % cand == 0 and N // cand >= min(2, N):
            nb = cand
            break

    inputs = [x.reshape(N, Cin, HW), jnp.asarray(_boundary_masks(H, W)),
              s1.reshape(Cin, 1), b1.reshape(Cin, 1), w1,
              s2.reshape(Cmid, 1), b2.reshape(Cmid, 1), w2]
    in_specs = [pl.BlockSpec((nb, Cin, HW), lambda n: (n, 0, 0))]
    in_specs += [_const_spec(a.shape) for a in inputs[1:]]

    if has_shortcut:
        wsc = params["sc_w"][:, :, 0, 0]         # (Cout, Cin)
        bsc = params["sc_b"].reshape(Cout, 1)
        inputs += [wsc, bsc]
        in_specs += [_const_spec(wsc.shape), _const_spec(bsc.shape)]
    if stride > 1:
        sel = jnp.asarray(_stride_select(H, W, stride))
        inputs += [sel]
        in_specs += [_const_spec(sel.shape)]

    kern = functools.partial(_wide_basic_kernel, H=H, W=W, stride=stride,
                             has_shortcut=has_shortcut, nb=nb)
    out = pl.pallas_call(
        kern,
        out_shape=jax.ShapeDtypeStruct((N, Cout, Ho * Wo), jnp.float32),
        grid=(N // nb,),
        in_specs=in_specs,
        out_specs=pl.BlockSpec((nb, Cout, Ho * Wo), lambda n: (n, 0, 0)),
        scratch_shapes=[
            pltpu.VMEM((9 * Cin, nb * HW), jnp.float32),     # conv1 im2col
            pltpu.VMEM((9 * Cmid, nb * HW), jnp.float32),    # conv2 im2col
        ],
        compiler_params=pltpu.CompilerParams(
            dimension_semantics=("parallel",),
            # ~2 MiB actually used at these shapes; 32 MiB is valid on every
            # generation (incl. v7x's 64 MiB physical VMEM).
            vmem_limit_bytes=32 * 1024 * 1024),
    )(*inputs)

    # (N, Cout, Ho*Wo) is already NCHW order: reshape is free.
    return out.reshape(N, Cout, Ho, Wo)


# ---------------------------------------------------------------------------
# Parameter construction (mirrors the PyTorch __init__ shapes / expander mask)
# ---------------------------------------------------------------------------

def expander_mask(outdim, indim, expand_size, rng):
    mask = np.zeros((outdim, indim), dtype=np.float32)
    if indim > outdim:
        for i in range(outdim):
            x = rng.permutation(indim)
            mask[i, x[:expand_size]] = 1.0
    else:
        for i in range(indim):
            x = rng.permutation(outdim)
            mask[x[:expand_size], i] = 1.0
    return mask


def init_wide_basic_params(key, in_planes, planes, stride=1, expandsize=8):
    rng = np.random.default_rng(0)
    ks = jax.random.split(key, 12)

    def kaiming_oihw(k, o, i, kh, kw):
        # kaiming_normal_(mode='fan_out'): std = sqrt(2 / (o*kh*kw))
        std = math.sqrt(2.0 / (o * kh * kw))
        return std * jax.random.normal(k, (o, i, kh, kw), jnp.float32)

    def bn_params(k0, k1, k2, k3, c):
        return dict(
            gamma=jax.random.uniform(k0, (c,), jnp.float32, 0.5, 1.5),
            beta=0.1 * jax.random.normal(k1, (c,), jnp.float32),
            mean=0.1 * jax.random.normal(k2, (c,), jnp.float32),
            var=jax.random.uniform(k3, (c,), jnp.float32, 0.5, 1.5),
        )

    params = {"stride": stride}
    params["bn1"] = bn_params(ks[0], ks[1], ks[2], ks[3], in_planes)

    w1 = kaiming_oihw(ks[4], planes, in_planes, 3, 3)
    m1 = expander_mask(planes, in_planes, in_planes // expandsize, rng)
    params["conv1_w"] = w1 * jnp.asarray(m1)[:, :, None, None]

    params["bn2"] = bn_params(ks[5], ks[6], ks[7], ks[8], planes)

    w2 = kaiming_oihw(ks[9], planes, planes, 3, 3)
    m2 = expander_mask(planes, planes, planes // expandsize, rng)
    params["conv2_w"] = w2 * jnp.asarray(m2)[:, :, None, None]

    if stride != 1 or in_planes != planes:
        params["sc_w"] = 0.1 * jax.random.normal(ks[10], (planes, in_planes, 1, 1),
                                                 jnp.float32)
        params["sc_b"] = 0.1 * jax.random.normal(ks[11], (planes,), jnp.float32)
    return params


# ---------------------------------------------------------------------------
# Pure-JAX reference
# ---------------------------------------------------------------------------

def reference_forward(params, x, eps=1e-5):
    stride = params["stride"]

    def bn(t, p):
        return ((t - p["mean"][None, :, None, None])
                / jnp.sqrt(p["var"][None, :, None, None] + eps)
                * p["gamma"][None, :, None, None] + p["beta"][None, :, None, None])

    def conv(t, w, s, pad):
        return jax.lax.conv_general_dilated(
            t, w, (s, s), [(pad, pad), (pad, pad)],
            dimension_numbers=("NCHW", "OIHW", "NCHW"))

    out = conv(jnp.maximum(bn(x, params["bn1"]), 0.0), params["conv1_w"], 1, 1)
    out = conv(jnp.maximum(bn(out, params["bn2"]), 0.0), params["conv2_w"], stride, 1)
    if "sc_w" in params:
        sc = conv(x, params["sc_w"], stride, 0) + params["sc_b"][None, :, None, None]
    else:
        sc = x
    return out + sc


# ---------------------------------------------------------------------------

if __name__ == "__main__":
    key = jax.random.PRNGKey(0)
    ks = jax.random.split(key, 6)
    tol = 5e-3

    # Config A: channel-expanding block (8 -> 16), 1x1-conv shortcut, stride 1,
    # batch blocked (nb=4, grid=2).
    N, in_planes, planes, H, W = 8, 8, 16, 16, 16
    x = jax.random.normal(ks[0], (N, in_planes, H, W), jnp.float32)
    p = init_wide_basic_params(ks[1], in_planes, planes, stride=1, expandsize=8)
    out = jax.block_until_ready(wide_basic_forward(p, x))
    ref = reference_forward(p, x)
    assert out.shape == (N, planes, H, W), out.shape
    err_a = float(jnp.max(jnp.abs(out - ref)))
    assert err_a < tol, f"config A mismatch vs reference: max abs err = {err_a}"

    # Config B: identity-shortcut block (in == out, stride 1).
    x2 = jax.random.normal(ks[2], (4, planes, H, W), jnp.float32)
    p2 = init_wide_basic_params(ks[3], planes, planes, stride=1, expandsize=8)
    out2 = jax.block_until_ready(wide_basic_forward(p2, x2))
    ref2 = reference_forward(p2, x2)
    assert out2.shape == (4, planes, H, W), out2.shape
    err_b = float(jnp.max(jnp.abs(out2 - ref2)))
    assert err_b < tol, f"config B mismatch vs reference: max abs err = {err_b}"

    # Config C: stride-2 downsampling block with 1x1-conv shortcut.
    x3 = jax.random.normal(ks[4], (4, planes, H, W), jnp.float32)
    p3 = init_wide_basic_params(ks[5], planes, planes, stride=2, expandsize=8)
    out3 = jax.block_until_ready(wide_basic_forward(p3, x3))
    ref3 = reference_forward(p3, x3)
    assert out3.shape == (4, planes, H // 2, W // 2), out3.shape
    err_c = float(jnp.max(jnp.abs(out3 - ref3)))
    assert err_c < tol, f"config C mismatch vs reference: max abs err = {err_c}"

    print("KERNEL_OK")
</pallas_src>

<mosaic_0001>
module attributes {stable_mosaic.version = 11 : i64} {
  func.func @_wide_basic_kernel(%arg0: i32, %arg1: memref<4x8x256xf32, #tpu.memory_space<vmem>>, %arg2: memref<9x256xf32, #tpu.memory_space<vmem>>, %arg3: memref<8x1xf32, #tpu.memory_space<vmem>>, %arg4: memref<8x1xf32, #tpu.memory_space<vmem>>, %arg5: memref<16x72xf32, #tpu.memory_space<vmem>>, %arg6: memref<16x1xf32, #tpu.memory_space<vmem>>, %arg7: memref<16x1xf32, #tpu.memory_space<vmem>>, %arg8: memref<16x144xf32, #tpu.memory_space<vmem>>, %arg9: memref<16x8xf32, #tpu.memory_space<vmem>>, %arg10: memref<16x1xf32, #tpu.memory_space<vmem>>, %arg11: memref<4x16x256xf32, #tpu.memory_space<vmem>>, %arg12: memref<72x1024xf32, #tpu.memory_space<vmem>>, %arg13: memref<144x1024xf32, #tpu.memory_space<vmem>>) attributes {dimension_semantics = [#tpu.dimension_semantics<parallel>], iteration_bounds = array<i64: 2>, scalar_prefetch = 0 : i64, scratch_operands = 2 : i64, tpu.core_type = #tpu.core_type<tc>, window_params = [{transform_indices = @transform_0, window_bounds = array<i64: 4, 8, 256>}, {pipeline_mode = #tpu.pipeline_mode<synchronous>, transform_indices = @transform_1, window_bounds = array<i64: 9, 256>}, {pipeline_mode = #tpu.pipeline_mode<synchronous>, transform_indices = @transform_2, window_bounds = array<i64: 8, 1>}, {pipeline_mode = #tpu.pipeline_mode<synchronous>, transform_indices = @transform_3, window_bounds = array<i64: 8, 1>}, {pipeline_mode = #tpu.pipeline_mode<synchronous>, transform_indices = @transform_4, window_bounds = array<i64: 16, 72>}, {pipeline_mode = #tpu.pipeline_mode<synchronous>, transform_indices = @transform_5, window_bounds = array<i64: 16, 1>}, {pipeline_mode = #tpu.pipeline_mode<synchronous>, transform_indices = @transform_6, window_bounds = array<i64: 16, 1>}, {pipeline_mode = #tpu.pipeline_mode<synchronous>, transform_indices = @transform_7, window_bounds = array<i64: 16, 144>}, {pipeline_mode = #tpu.pipeline_mode<synchronous>, transform_indices = @transform_8, window_bounds = array<i64: 16, 8>}, {pipeline_mode = #tpu.pipeline_mode<synchronous>, transform_indices = @transform_9, window_bounds = array<i64: 16, 1>}, {transform_indices = @transform_10, window_bounds = array<i64: 4, 16, 256>}]} {
    %c0 = arith.constant 0 : index
    %c0_0 = arith.constant 0 : index
    %0 = vector.load %arg3[%c0, %c0_0] : memref<8x1xf32, #tpu.memory_space<vmem>>, vector<8x1xf32>
    %c0_1 = arith.constant 0 : index
    %c0_2 = arith.constant 0 : index
    %1 = vector.load %arg4[%c0_1, %c0_2] : memref<8x1xf32, #tpu.memory_space<vmem>>, vector<8x1xf32>
    %c0_3 = arith.constant 0 : index
    %c0_4 = arith.constant 0 : index
    %2 = vector.load %arg6[%c0_3, %c0_4] : memref<16x1xf32, #tpu.memory_space<vmem>>, vector<16x1xf32>
    %c0_5 = arith.constant 0 : index
    %c0_6 = arith.constant 0 : index
    %3 = vector.load %arg7[%c0_5, %c0_6] : memref<16x1xf32, #tpu.memory_space<vmem>>, vector<16x1xf32>
    %c0_7 = arith.constant 0 : index
    %c0_8 = arith.constant 0 : index
    %c0_9 = arith.constant 0 : index
    %4 = vector.load %arg1[%c0_7, %c0_8, %c0_9] : memref<4x8x256xf32, #tpu.memory_space<vmem>>, vector<1x8x256xf32>
    %5 = vector.shape_cast %4 : vector<1x8x256xf32> to vector<8x256xf32>
    %6 = vector.broadcast %0 : vector<8x1xf32> to vector<8x256xf32>
    %7 = arith.mulf %5, %6 : vector<8x256xf32>
    %8 = vector.broadcast %1 : vector<8x1xf32> to vector<8x256xf32>
    %9 = arith.addf %7, %8 : vector<8x256xf32>
    %cst = arith.constant 0.000000e+00 : f32
    %10 = vector.broadcast %cst : f32 to vector<8x256xf32>
    %11 = arith.maximumf %9, %10 : vector<8x256xf32>
    %c17_i32 = arith.constant 17 : i32
    %12 = tpu.dynamic_rotate %11 by %c17_i32 dim 1 : vector<8x256xf32>, i32 -> vector<8x256xf32>
    %c0_10 = arith.constant 0 : index
    %c0_11 = arith.constant 0 : index
    %13 = vector.load %arg2[%c0_10, %c0_11] : memref<9x256xf32, #tpu.memory_space<vmem>>, vector<1x256xf32>
    %14 = vector.broadcast %13 : vector<1x256xf32> to vector<8x256xf32>
    %15 = arith.mulf %12, %14 : vector<8x256xf32>
    %c0_12 = arith.constant 0 : index
    %c0_13 = arith.constant 0 : index
    %16 = vector.load %arg12[%c0_12, %c0_13] : memref<72x1024xf32, #tpu.memory_space<vmem>>, vector<8x256xf32>
    tpu.vector_store %arg12[%c0_12, %c0_13], %15 {strides = array<i32>} : memref<72x1024xf32, #tpu.memory_space<vmem>>, vector<8x256xf32>,
    %c16_i32 = arith.constant 16 : i32
    %17 = tpu.dynamic_rotate %11 by %c16_i32 dim 1 : vector<8x256xf32>, i32 -> vector<8x256xf32>
    %c1 = arith.constant 1 : index
    %c0_14 = arith.constant 0 : index
    %18 = vector.load %arg2[%c1, %c0_14] : memref<9x256xf32, #tpu.memory_space<vmem>>, vector<1x256xf32>
    %19 = vector.broadcast %18 : vector<1x256xf32> to vector<8x256xf32>
    %20 = arith.mulf %17, %19 : vector<8x256xf32>
    %c8 = arith.constant 8 : index
    %c0_15 = arith.constant 0 : index
    %21 = vector.load %arg12[%c8, %c0_15] : memref<72x1024xf32, #tpu.memory_space<vmem>>, vector<8x256xf32>
    tpu.vector_store %arg12[%c8, %c0_15], %20 {strides = array<i32>} : memref<72x1024xf32, #tpu.memory_space<vmem>>, vector<8x256xf32>,
    %c15_i32 = arith.constant 15 : i32
    %22 = tpu.dynamic_rotate %11 by %c15_i32 dim 1 : vector<8x256xf32>, i32 -> vector<8x256xf32>
    %c2 = arith.constant 2 : index
    %c0_16 = arith.constant 0 : index
    %23 = vector.load %arg2[%c2, %c0_16] : memref<9x256xf32, #tpu.memory_space<vmem>>, vector<1x256xf32>
    %24 = vector.broadcast %23 : vector<1x256xf32> to vector<8x256xf32>
    %25 = arith.mulf %22, %24 : vector<8x256xf32>
    %c16 = arith.constant 16 : index
    %c0_17 = arith.constant 0 : index
    %26 = vector.load %arg12[%c16, %c0_17] : memref<72x1024xf32, #tpu.memory_space<vmem>>, vector<8x256xf32>
    tpu.vector_store %arg12[%c16, %c0_17], %25 {strides = array<i32>} : memref<72x1024xf32, #tpu.memory_space<vmem>>, vector<8x256xf32>,
    %c1_i32 = arith.constant 1 : i32
    %27 = tpu.dynamic_rotate %11 by %c1_i32 dim 1 : vector<8x256xf32>, i32 -> vector<8x256xf32>
    %c3 = arith.constant 3 : index
    %c0_18 = arith.constant 0 : index
    %28 = vector.load %arg2[%c3, %c0_18] : memref<9x256xf32, #tpu.memory_space<vmem>>, vector<1x256xf32>
    %29 = vector.broadcast %28 : vector<1x256xf32> to vector<8x256xf32>
    %30 = arith.mulf %27, %29 : vector<8x256xf32>
    %c24 = arith.constant 24 : index
    %c0_19 = arith.constant 0 : index
    %31 = vector.load %arg12[%c24, %c0_19] : memref<72x1024xf32, #tpu.memory_space<vmem>>, vector<8x256xf32>
    tpu.vector_store %arg12[%c24, %c0_19], %30 {strides = array<i32>} : memref<72x1024xf32, #tpu.memory_space<vmem>>, vector<8x256xf32>,
    %c32 = arith.constant 32 : index
    %c0_20 = arith.constant 0 : index
    %32 = vector.load %arg12[%c32, %c0_20] : memref<72x1024xf32, #tpu.memory_space<vmem>>, vector<8x256xf32>
    tpu.vector_store %arg12[%c32, %c0_20], %11 {strides = array<i32>} : memref<72x1024xf32, #tpu.memory_space<vmem>>, vector<8x256xf32>,
    %c255_i32 = arith.constant 255 : i32
    %33 = tpu.dynamic_rotate %11 by %c255_i32 dim 1 : vector<8x256xf32>, i32 -> vector<8x256xf32>
    %c5 = arith.constant 5 : index
    %c0_21 = arith.constant 0 : index
    %34 = vector.load %arg2[%c5, %c0_21] : memref<9x256xf32, #tpu.memory_space<vmem>>, vector<1x256xf32>
    %35 = vector.broadcast %34 : vector<1x256xf32> to vector<8x256xf32>
    %36 = arith.mulf %33, %35 : vector<8x256xf32>
    %c40 = arith.constant 40 : index
    %c0_22 = arith.constant 0 : index
    %37 = vector.load %arg12[%c40, %c0_22] : memref<72x1024xf32, #tpu.memory_space<vmem>>, vector<8x256xf32>
    tpu.vector_store %arg12[%c40, %c0_22], %36 {strides = array<i32>} : memref<72x1024xf32, #tpu.memory_space<vmem>>, vector<8x256xf32>,
    %c241_i32 = arith.constant 241 : i32
    %38 = tpu.dynamic_rotate %11 by %c241_i32 dim 1 : vector<8x256xf32>, i32 -> vector<8x256xf32>
    %c6 = arith.constant 6 : index
    %c0_23 = arith.constant 0 : index
    %39 = vector.load %arg2[%c6, %c0_23] : memref<9x256xf32, #tpu.memory_space<vmem>>, vector<1x256xf32>
    %40 = vector.broadcast %39 : vector<1x256xf32> to vector<8x256xf32>
    %41 = arith.mulf %38, %40 : vector<8x256xf32>
    %c48 = arith.constant 48 : index
    %c0_24 = arith.constant 0 : index
    %42 = vector.load %arg12[%c48, %c0_24] : memref<72x1024xf32, #tpu.memory_space<vmem>>, vector<8x256xf32>
    tpu.vector_store %arg12[%c48, %c0_24], %41 {strides = array<i32>} : memref<72x1024xf32, #tpu.memory_space<vmem>>, vector<8x256xf32>,
    %c240_i32 = arith.constant 240 : i32
    %43 = tpu.dynamic_rotate %11 by %c240_i32 dim 1 : vector<8x256xf32>, i32 -> vector<8x256xf32>
    %c7 = arith.constant 7 : index
    %c0_25 = arith.constant 0 : index
    %44 = vector.load %arg2[%c7, %c0_25] : memref<9x256xf32, #tpu.memory_space<vmem>>, vector<1x256xf32>
    %45 = vector.broadcast %44 : vector<1x256xf32> to vector<8x256xf32>
    %46 = arith.mulf %43, %45 : vector<8x256xf32>
    %c56 = arith.constant 56 : index
    %c0_26 = arith.constant 0 : index
    %47 = vector.load %arg12[%c56, %c0_26] : memref<72x1024xf32, #tpu.memory_space<vmem>>, vector<8x256xf32>
    tpu.vector_store %arg12[%c56, %c0_26], %46 {strides = array<i32>} : memref<72x1024xf32, #tpu.memory_space<vmem>>, vector<8x256xf32>,
    %c239_i32 = arith.constant 239 : i32
    %48 = tpu.dynamic_rotate %11 by %c239_i32 dim 1 : vector<8x256xf32>, i32 -> vector<8x256xf32>
    %c8_27 = arith.constant 8 : index
    %c0_28 = arith.constant 0 : index
    %49 = vector.load %arg2[%c8_27, %c0_28] : memref<9x256xf32, #tpu.memory_space<vmem>>, vector<1x256xf32>
    %50 = vector.broadcast %49 : vector<1x256xf32> to vector<8x256xf32>
    %51 = arith.mulf %48, %50 : vector<8x256xf32>
    %c64 = arith.constant 64 : index
    %c0_29 = arith.constant 0 : index
    %52 = vector.load %arg12[%c64, %c0_29] : memref<72x1024xf32, #tpu.memory_space<vmem>>, vector<8x256xf32>
    tpu.vector_store %arg12[%c64, %c0_29], %51 {strides = array<i32>} : memref<72x1024xf32, #tpu.memory_space<vmem>>, vector<8x256xf32>,
    %c1_30 = arith.constant 1 : index
    %c0_31 = arith.constant 0 : index
    %c0_32 = arith.constant 0 : index
    %53 = vector.load %arg1[%c1_30, %c0_31, %c0_32] : memref<4x8x256xf32, #tpu.memory_space<vmem>>, vector<1x8x256xf32>
    %54 = vector.shape_cast %53 : vector<1x8x256xf32> to vector<8x256xf32>
    %55 = vector.broadcast %0 : vector<8x1xf32> to vector<8x256xf32>
    %56 = arith.mulf %54, %55 : vector<8x256xf32>
    %57 = vector.broadcast %1 : vector<8x1xf32> to vector<8x256xf32>
    %58 = arith.addf %56, %57 : vector<8x256xf32>
    %cst_33 = arith.constant 0.000000e+00 : f32
    %59 = vector.broadcast %cst_33 : f32 to vector<8x256xf32>
    %60 = arith.maximumf %58, %59 : vector<8x256xf32>
    %c17_i32_34 = arith.constant 17 : i32
    %61 = tpu.dynamic_rotate %60 by %c17_i32_34 dim 1 : vector<8x256xf32>, i32 -> vector<8x256xf32>
    %c0_35 = arith.constant 0 : index
    %c0_36 = arith.constant 0 : index
    %62 = vector.load %arg2[%c0_35, %c0_36] : memref<9x256xf32, #tpu.memory_space<vmem>>, vector<1x256xf32>
    %63 = vector.broadcast %62 : vector<1x256xf32> to vector<8x256xf32>
    %64 = arith.mulf %61, %63 : vector<8x256xf32>
    %c0_37 = arith.constant 0 : index
    %c256 = arith.constant 256 : index
    %65 = vector.load %arg12[%c0_37, %c256] : memref<72x1024xf32, #tpu.memory_space<vmem>>, vector<8x256xf32>
    tpu.vector_store %arg12[%c0_37, %c256], %64 {strides = array<i32>} : memref<72x1024xf32, #tpu.memory_space<vmem>>, vector<8x256xf32>,
    %c16_i32_38 = arith.constant 16 : i32
    %66 = tpu.dynamic_rotate %60 by %c16_i32_38 dim 1 : vector<8x256xf32>, i32 -> vector<8x256xf32>
    %c1_39 = arith.constant 1 : index
    %c0_40 = arith.constant 0 : index
    %67 = vector.load %arg2[%c1_39, %c0_40] : memref<9x256xf32, #tpu.memory_space<vmem>>, vector<1x256xf32>
    %68 = vector.broadcast %67 : vector<1x256xf32> to vector<8x256xf32>
    %69 = arith.mulf %66, %68 : vector<8x256xf32>
    %c8_41 = arith.constant 8 : index
    %c256_42 = arith.constant 256 : index
    %70 = vector.load %arg12[%c8_41, %c256_42] : memref<72x1024xf32, #tpu.memory_space<vmem>>, vector<8x256xf32>
    tpu.vector_store %arg12[%c8_41, %c256_42], %69 {strides = array<i32>} : memref<72x1024xf32, #tpu.memory_space<vmem>>, vector<8x256xf32>,
    %c15_i32_43 = arith.constant 15 : i32
    %71 = tpu.dynamic_rotate %60 by %c15_i32_43 dim 1 : vector<8x256xf32>, i32 -> vector<8x256xf32>
    %c2_44 = arith.constant 2 : index
    %c0_45 = arith.constant 0 : index
    %72 = vector.load %arg2[%c2_44, %c0_45] : memref<9x256xf32, #tpu.memory_space<vmem>>, vector<1x256xf32>
    %73 = vector.broadcast %72 : vector<1x256xf32> to vector<8x256xf32>
    %74 = arith.mulf %71, %73 : vector<8x256xf32>
    %c16_46 = arith.constant 16 : index
    %c256_47 = arith.constant 256 : index
    %75 = vector.load %arg12[%c16_46, %c256_47] : memref<72x1024xf32, #tpu.memory_space<vmem>>, vector<8x256xf32>
    tpu.vector_store %arg12[%c16_46, %c256_47], %74 {strides = array<i32>} : memref<72x1024xf32, #tpu.memory_space<vmem>>, vector<8x256xf32>,
    %c1_i32_48 = arith.constant 1 : i32
    %76 = tpu.dynamic_rotate %60 by %c1_i32_48 dim 1 : vector<8x256xf32>, i32 -> vector<8x256xf32>
    %c3_49 = arith.constant 3 : index
    %c0_50 = arith.constant 0 : index
    %77 = vector.load %arg2[%c3_49, %c0_50] : memref<9x256xf32, #tpu.memory_space<vmem>>, vector<1x256xf32>
    %78 = vector.broadcast %77 : vector<1x256xf32> to vector<8x256xf32>
    %79 = arith.mulf %76, %78 : vector<8x256xf32>
    %c24_51 = arith.constant 24 : index
    %c256_52 = arith.constant 256 : index
    %80 = vector.load %arg12[%c24_51, %c256_52] : memref<72x1024xf32, #tpu.memory_space<vmem>>, vector<8x256xf32>
    tpu.vector_store %arg12[%c24_51, %c256_52], %79 {strides = array<i32>} : memref<72x1024xf32, #tpu.memory_space<vmem>>, vector<8x256xf32>,
    %c32_53 = arith.constant 32 : index
    %c256_54 = arith.constant 256 : index
    %81 = vector.load %arg12[%c32_53, %c256_54] : memref<72x1024xf32, #tpu.memory_space<vmem>>, vector<8x256xf32>
    tpu.vector_store %arg12[%c32_53, %c256_54], %60 {strides = array<i32>} : memref<72x1024xf32, #tpu.memory_space<vmem>>, vector<8x256xf32>,
    %c255_i32_55 = arith.constant 255 : i32
    %82 = tpu.dynamic_rotate %60 by %c255_i32_55 dim 1 : vector<8x256xf32>, i32 -> vector<8x256xf32>
    %c5_56 = arith.constant 5 : index
    %c0_57 = arith.constant 0 : index
    %83 = vector.load %arg2[%c5_56, %c0_57] : memref<9x256xf32, #tpu.memory_space<vmem>>, vector<1x256xf32>
    %84 = vector.broadcast %83 : vector<1x256xf32> to vector<8x256xf32>
    %85 = arith.mulf %82, %84 : vector<8x256xf32>
    %c40_58 = arith.constant 40 : index
    %c256_59 = arith.constant 256 : index
    %86 = vector.load %arg12[%c40_58, %c256_59] : memref<72x1024xf32, #tpu.memory_space<vmem>>, vector<8x256xf32>
    tpu.vector_store %arg12[%c40_58, %c256_59], %85 {strides = array<i32>} : memref<72x1024xf32, #tpu.memory_space<vmem>>, vector<8x256xf32>,
    %c241_i32_60 = arith.constant 241 : i32
    %87 = tpu.dynamic_rotate %60 by %c241_i32_60 dim 1 : vector<8x256xf32>, i32 -> vector<8x256xf32>
    %c6_61 = arith.constant 6 : index
    %c0_62 = arith.constant 0 : index
    %88 = vector.load %arg2[%c6_61, %c0_62] : memref<9x256xf32, #tpu.memory_space<vmem>>, vector<1x256xf32>
    %89 = vector.broadcast %88 : vector<1x256xf32> to vector<8x256xf32>
    %90 = arith.mulf %87, %89 : vector<8x256xf32>
    %c48_63 = arith.constant 48 : index
    %c256_64 = arith.constant 256 : index
    %91 = vector.load %arg12[%c48_63, %c256_64] : memref<72x1024xf32, #tpu.memory_space<vmem>>, vector<8x256xf32>
    tpu.vector_store %arg12[%c48_63, %c256_64], %90 {strides = array<i32>} : memref<72x1024xf32, #tpu.memory_space<vmem>>, vector<8x256xf32>,
    %c240_i32_65 = arith.constant 240 : i32
    %92 = tpu.dynamic_rotate %60 by %c240_i32_65 dim 1 : vector<8x256xf32>, i32 -> vector<8x256xf32>
    %c7_66 = arith.constant 7 : index
    %c0_67 = arith.constant 0 : index
    %93 = vector.load %arg2[%c7_66, %c0_67] : memref<9x256xf32, #tpu.memory_space<vmem>>, vector<1x256xf32>
    %94 = vector.broadcast %93 : vector<1x256xf32> to vector<8x256xf32>
    %95 = arith.mulf %92, %94 : vector<8x256xf32>
    %c56_68 = arith.constant 56 : index
    %c256_69 = arith.constant 256 : index
    %96 = vector.load %arg12[%c56_68, %c256_69] : memref<72x1024xf32, #tpu.memory_space<vmem>>, vector<8x256xf32>
    tpu.vector_store %arg12[%c56_68, %c256_69], %95 {strides = array<i32>} : memref<72x1024xf32, #tpu.memory_space<vmem>>, vector<8x256xf32>,
    %c239_i32_70 = arith.constant 239 : i32
    %97 = tpu.dynamic_rotate %60 by %c239_i32_70 dim 1 : vector<8x256xf32>, i32 -> vector<8x256xf32>
    %c8_71 = arith.constant 8 : index
    %c0_72 = arith.constant 0 : index
    %98 = vector.load %arg2[%c8_71, %c0_72] : memref<9x256xf32, #tpu.memory_space<vmem>>, vector<1x256xf32>
    %99 = vector.broadcast %98 : vector<1x256xf32> to vector<8x256xf32>
    %100 = arith.mulf %97, %99 : vector<8x256xf32>
    %c64_73 = arith.constant 64 : index
    %c256_74 = arith.constant 256 : index
    %101 = vector.load %arg12[%c64_73, %c256_74] : memref<72x1024xf32, #tpu.memory_space<vmem>>, vector<8x256xf32>
    tpu.vector_store %arg12[%c64_73, %c256_74], %100 {strides = array<i32>} : memref<72x1024xf32, #tpu.memory_space<vmem>>, vector<8x256xf32>,
    %c2_75 = arith.constant 2 : index
    %c0_76 = arith.constant 0 : index
    %c0_77 = arith.constant 0 : index
    %102 = vector.load %arg1[%c2_75, %c0_76, %c0_77] : memref<4x8x256xf32, #tpu.memory_space<vmem>>, vector<1x8x256xf32>
    %103 = vector.shape_cast %102 : vector<1x8x256xf32> to vector<8x256xf32>
    %104 = vector.broadcast %0 : vector<8x1xf32> to vector<8x256xf32>
    %105 = arith.mulf %103, %104 : vector<8x256xf32>
    %106 = vector.broadcast %1 : vector<8x1xf32> to vector<8x256xf32>
    %107 = arith.addf %105, %106 : vector<8x256xf32>
    %cst_78 = arith.constant 0.000000e+00 : f32
    %108 = vector.broadcast %cst_78 : f32 to vector<8x256xf32>
    %109 = arith.maximumf %107, %108 : vector<8x256xf32>
    %c17_i32_79 = arith.constant 17 : i32
    %110 = tpu.dynamic_rotate %109 by %c17_i32_79 dim 1 : vector<8x256xf32>, i32 -> vector<8x256xf32>
    %c0_80 = arith.constant 0 : index
    %c0_81 = arith.constant 0 : index
    %111 = vector.load %arg2[%c0_80, %c0_81] : memref<9x256xf32, #tpu.memory_space<vmem>>, vector<1x256xf32>
    %112 = vector.broadcast %111 : vector<1x256xf32> to vector<8x256xf32>
    %113 = arith.mulf %110, %112 : vector<8x256xf32>
    %c0_82 = arith.constant 0 : index
    %c512 = arith.constant 512 : index
    %114 = vector.load %arg12[%c0_82, %c512] : memref<72x1024xf32, #tpu.memory_space<vmem>>, vector<8x256xf32>
    tpu.vector_store %arg12[%c0_82, %c512], %113 {strides = array<i32>} : memref<72x1024xf32, #tpu.memory_space<vmem>>, vector<8x256xf32>,
    %c16_i32_83 = arith.constant 16 : i32
    %115 = tpu.dynamic_rotate %109 by %c16_i32_83 dim 1 : vector<8x256xf32>, i32 -> vector<8x256xf32>
    %c1_84 = arith.constant 1 : index
    %c0_85 = arith.constant 0 : index
    %116 = vector.load %arg2[%c1_84, %c0_85] : memref<9x256xf32, #tpu.memory_space<vmem>>, vector<1x256xf32>
    %117 = vector.broadcast %116 : vector<1x256xf32> to vector<8x256xf32>
    %118 = arith.mulf %115, %117 : vector<8x256xf32>
    %c8_86 = arith.constant 8 : index
    %c512_87 = arith.constant 512 : index
    %119 = vector.load %arg12[%c8_86, %c512_87] : memref<72x1024xf32, #tpu.memory_space<vmem>>, vector<8x256xf32>
    tpu.vector_store %arg12[%c8_86, %c512_87], %118 {strides = array<i32>} : memref<72x1024xf32, #tpu.memory_space<vmem>>, vector<8x256xf32>,
    %c15_i32_88 = arith.constant 15 : i32
    %120 = tpu.dynamic_rotate %109 by %c15_i32_88 dim 1 : vector<8x256xf32>, i32 -> vector<8x256xf32>
    %c2_89 = arith.constant 2 : index
    %c0_90 = arith.constant 0 : index
    %121 = vector.load %arg2[%c2_89, %c0_90] : memref<9x256xf32, #tpu.memory_space<vmem>>, vector<1x256xf32>
    %122 = vector.broadcast %121 : vector<1x256xf32> to vector<8x256xf32>
    %123 = arith.mulf %120, %122 : vector<8x256xf32>
    %c16_91 = arith.constant 16 : index
    %c512_92 = arith.constant 512 : index
    %124 = vector.load %arg12[%c16_91, %c512_92] : memref<72x1024xf32, #tpu.memory_space<vmem>>, vector<8x256xf32>
    tpu.vector_store %arg12[%c16_91, %c512_92], %123 {strides = array<i32>} : memref<72x1024xf32, #tpu.memory_space<vmem>>, vector<8x256xf32>,
    %c1_i32_93 = arith.constant 1 : i32
    %125 = tpu.dynamic_rotate %109 by %c1_i32_93 dim 1 : vector<8x256xf32>, i32 -> vector<8x256xf32>
    %c3_94 = arith.constant 3 : index
    %c0_95 = arith.constant 0 : index
    %126 = vector.load %arg2[%c3_94, %c0_95] : memref<9x256xf32, #tpu.memory_space<vmem>>, vector<1x256xf32>
    %127 = vector.broadcast %126 : vector<1x256xf32> to vector<8x256xf32>
    %128 = arith.mulf %125, %127 : vector<8x256xf32>
    %c24_96 = arith.constant 24 : index
    %c512_97 = arith.constant 512 : index
    %129 = vector.load %arg12[%c24_96, %c512_97] : memref<72x1024xf32, #tpu.memory_space<vmem>>, vector<8x256xf32>
    tpu.vector_store %arg12[%c24_96, %c512_97], %128 {strides = array<i32>} : memref<72x1024xf32, #tpu.memory_space<vmem>>, vector<8x256xf32>,
    %c32_98 = arith.constant 32 : index
    %c512_99 = arith.constant 512 : index
    %130 = vector.load %arg12[%c32_98, %c512_99] : memref<72x1024xf32, #tpu.memory_space<vmem>>, vector<8x256xf32>
    tpu.vector_store %arg12[%c32_98, %c512_99], %109 {strides = array<i32>} : memref<72x1024xf32, #tpu.memory_space<vmem>>, vector<8x256xf32>,
    %c255_i32_100 = arith.constant 255 : i32
    %131 = tpu.dynamic_rotate %109 by %c255_i32_100 dim 1 : vector<8x256xf32>, i32 -> vector<8x256xf32>
    %c5_101 = arith.constant 5 : index
    %c0_102 = arith.constant 0 : index
    %132 = vector.load %arg2[%c5_101, %c0_102] : memref<9x256xf32, #tpu.memory_space<vmem>>, vector<1x256xf32>
    %133 = vector.broadcast %132 : vector<1x256xf32> to vector<8x256xf32>
    %134 = arith.mulf %131, %133 : vector<8x256xf32>
    %c40_103 = arith.constant 40 : index
    %c512_104 = arith.constant 512 : index
    %135 = vector.load %arg12[%c40_103, %c512_104] : memref<72x1024xf32, #tpu.memory_space<vmem>>, vector<8x256xf32>
    tpu.vector_store %arg12[%c40_103, %c512_104], %134 {strides = array<i32>} : memref<72x1024xf32, #tpu.memory_space<vmem>>, vector<8x256xf32>,
    %c241_i32_105 = arith.constant 241 : i32
    %136 = tpu.dynamic_rotate %109 by %c241_i32_105 dim 1 : vector<8x256xf32>, i32 -> vector<8x256xf32>
    %c6_106 = arith.constant 6 : index
    %c0_107 = arith.constant 0 : index
    %137 = vector.load %arg2[%c6_106, %c0_107] : memref<9x256xf32, #tpu.memory_space<vmem>>, vector<1x256xf32>
    %138 = vector.broadcast %137 : vector<1x256xf32> to vector<8x256xf32>
    %139 = arith.mulf %136, %138 : vector<8x256xf32>
    %c48_108 = arith.constant 48 : index
    %c512_109 = arith.constant 512 : index
    %140 = vector.load %arg12[%c48_108, %c512_109] : memref<72x1024xf32, #tpu.memory_space<vmem>>, vector<8x256xf32>
    tpu.vector_store %arg12[%c48_108, %c512_109], %139 {strides = array<i32>} : memref<72x1024xf32, #tpu.memory_space<vmem>>, vector<8x256xf32>,
    %c240_i32_110 = arith.constant 240 : i32
    %141 = tpu.dynamic_rotate %109 by %c240_i32_110 dim 1 : vector<8x256xf32>, i32 -> vector<8x256xf32>
    %c7_111 = arith.constant 7 : index
    %c0_112 = arith.constant 0 : index
    %142 = vector.load %arg2[%c7_111, %c0_112] : memref<9x256xf32, #tpu.memory_space<vmem>>, vector<1x256xf32>
    %143 = vector.broadcast %142 : vector<1x256xf32> to vector<8x256xf32>
    %144 = arith.mulf %141, %143 : vector<8x256xf32>
    %c56_113 = arith.constant 56 : index
    %c512_114 = arith.constant 512 : index
    %145 = vector.load %arg12[%c56_113, %c512_114] : memref<72x1024xf32, #tpu.memory_space<vmem>>, vector<8x256xf32>
    tpu.vector_store %arg12[%c56_113, %c512_114], %144 {strides = array<i32>} : memref<72x1024xf32, #tpu.memory_space<vmem>>, vector<8x256xf32>,
    %c239_i32_115 = arith.constant 239 : i32
    %146 = tpu.dynamic_rotate %109 by %c239_i32_115 dim 1 : vector<8x256xf32>, i32 -> vector<8x256xf32>
    %c8_116 = arith.constant 8 : index
    %c0_117 = arith.constant 0 : index
    %147 = vector.load %arg2[%c8_116, %c0_117] : memref<9x256xf32, #tpu.memory_space<vmem>>, vector<1x256xf32>
    %148 = vector.broadcast %147 : vector<1x256xf32> to vector<8x256xf32>
    %149 = arith.mulf %146, %148 : vector<8x256xf32>
    %c64_118 = arith.constant 64 : index
    %c512_119 = arith.constant 512 : index
    %150 = vector.load %arg12[%c64_118, %c512_119] : memref<72x1024xf32, #tpu.memory_space<vmem>>, vector<8x256xf32>
    tpu.vector_store %arg12[%c64_118, %c512_119], %149 {strides = array<i32>} : memref<72x1024xf32, #tpu.memory_space<vmem>>, vector<8x256xf32>,
    %c3_120 = arith.constant 3 : index
    %c0_121 = arith.constant 0 : index
    %c0_122 = arith.constant 0 : index
    %151 = vector.load %arg1[%c3_120, %c0_121, %c0_122] : memref<4x8x256xf32, #tpu.memory_space<vmem>>, vector<1x8x256xf32>
    %152 = vector.shape_cast %151 : vector<1x8x256xf32> to vector<8x256xf32>
    %153 = vector.broadcast %0 : vector<8x1xf32> to vector<8x256xf32>
    %154 = arith.mulf %152, %153 : vector<8x256xf32>
    %155 = vector.broadcast %1 : vector<8x1xf32> to vector<8x256xf32>
    %156 = arith.addf %154, %155 : vector<8x256xf32>
    %cst_123 = arith.constant 0.000000e+00 : f32
    %157 = vector.broadcast %cst_123 : f32 to vector<8x256xf32>
    %158 = arith.maximumf %156, %157 : vector<8x256xf32>
    %c17_i32_124 = arith.constant 17 : i32
    %159 = tpu.dynamic_rotate %158 by %c17_i32_124 dim 1 : vector<8x256xf32>, i32 -> vector<8x256xf32>
    %c0_125 = arith.constant 0 : index
    %c0_126 = arith.constant 0 : index
    %160 = vector.load %arg2[%c0_125, %c0_126] : memref<9x256xf32, #tpu.memory_space<vmem>>, vector<1x256xf32>
    %161 = vector.broadcast %160 : vector<1x256xf32> to vector<8x256xf32>
    %162 = arith.mulf %159, %161 : vector<8x256xf32>
    %c0_127 = arith.constant 0 : index
    %c768 = arith.constant 768 : index
    %163 = vector.load %arg12[%c0_127, %c768] : memref<72x1024xf32, #tpu.memory_space<vmem>>, vector<8x256xf32>
    tpu.vector_store %arg12[%c0_127, %c768], %162 {strides = array<i32>} : memref<72x1024xf32, #tpu.memory_space<vmem>>, vector<8x256xf32>,
    %c16_i32_128 = arith.constant 16 : i32
    %164 = tpu.dynamic_rotate %158 by %c16_i32_128 dim 1 : vector<8x256xf32>, i32 -> vector<8x256xf32>
    %c1_129 = arith.constant 1 : index
    %c0_130 = arith.constant 0 : index
    %165 = vector.load %arg2[%c1_129, %c0_130] : memref<9x256xf32, #tpu.memory_space<vmem>>, vector<1x256xf32>
    %166 = vector.broadcast %165 : vector<1x256xf32> to vector<8x256xf32>
    %167 = arith.mulf %164, %166 : vector<8x256xf32>
    %c8_131 = arith.constant 8 : index
    %c768_132 = arith.constant 768 : index
    %168 = vector.load %arg12[%c8_131, %c768_132] : memref<72x1024xf32, #tpu.memory_space<vmem>>, vector<8x256xf32>
    tpu.vector_store %arg12[%c8_131, %c768_132], %167 {strides = array<i32>} : memref<72x1024xf32, #tpu.memory_space<vmem>>, vector<8x256xf32>,
    %c15_i32_133 = arith.constant 15 : i32
    %169 = tpu.dynamic_rotate %158 by %c15_i32_133 dim 1 : vector<8x256xf32>, i32 -> vector<8x256xf32>
    %c2_134 = arith.constant 2 : index
    %c0_135 = arith.constant 0 : index
    %170 = vector.load %arg2[%c2_134, %c0_135] : memref<9x256xf32, #tpu.memory_space<vmem>>, vector<1x256xf32>
    %171 = vector.broadcast %170 : vector<1x256xf32> to vector<8x256xf32>
    %172 = arith.mulf %169, %171 : vector<8x256xf32>
    %c16_136 = arith.constant 16 : index
    %c768_137 = arith.constant 768 : index
    %173 = vector.load %arg12[%c16_136, %c768_137] : memref<72x1024xf32, #tpu.memory_space<vmem>>, vector<8x256xf32>
    tpu.vector_store %arg12[%c16_136, %c768_137], %172 {strides = array<i32>} : memref<72x1024xf32, #tpu.memory_space<vmem>>, vector<8x256xf32>,
    %c1_i32_138 = arith.constant 1 : i32
    %174 = tpu.dynamic_rotate %158 by %c1_i32_138 dim 1 : vector<8x256xf32>, i32 -> vector<8x256xf32>
    %c3_139 = arith.constant 3 : index
    %c0_140 = arith.constant 0 : index
    %175 = vector.load %arg2[%c3_139, %c0_140] : memref<9x256xf32, #tpu.memory_space<vmem>>, vector<1x256xf32>
    %176 = vector.broadcast %175 : vector<1x256xf32> to vector<8x256xf32>
    %177 = arith.mulf %174, %176 : vector<8x256xf32>
    %c24_141 = arith.constant 24 : index
    %c768_142 = arith.constant 768 : index
    %178 = vector.load %arg12[%c24_141, %c768_142] : memref<72x1024xf32, #tpu.memory_space<vmem>>, vector<8x256xf32>
    tpu.vector_store %arg12[%c24_141, %c768_142], %177 {strides = array<i32>} : memref<72x1024xf32, #tpu.memory_space<vmem>>, vector<8x256xf32>,
    %c32_143 = arith.constant 32 : index
    %c768_144 = arith.constant 768 : index
    %179 = vector.load %arg12[%c32_143, %c768_144] : memref<72x1024xf32, #tpu.memory_space<vmem>>, vector<8x256xf32>
    tpu.vector_store %arg12[%c32_143, %c768_144], %158 {strides = array<i32>} : memref<72x1024xf32, #tpu.memory_space<vmem>>, vector<8x256xf32>,
    %c255_i32_145 = arith.constant 255 : i32
    %180 = tpu.dynamic_rotate %158 by %c255_i32_145 dim 1 : vector<8x256xf32>, i32 -> vector<8x256xf32>
    %c5_146 = arith.constant 5 : index
    %c0_147 = arith.constant 0 : index
    %181 = vector.load %arg2[%c5_146, %c0_147] : memref<9x256xf32, #tpu.memory_space<vmem>>, vector<1x256xf32>
    %182 = vector.broadcast %181 : vector<1x256xf32> to vector<8x256xf32>
    %183 = arith.mulf %180, %182 : vector<8x256xf32>
    %c40_148 = arith.constant 40 : index
    %c768_149 = arith.constant 768 : index
    %184 = vector.load %arg12[%c40_148, %c768_149] : memref<72x1024xf32, #tpu.memory_space<vmem>>, vector<8x256xf32>
    tpu.vector_store %arg12[%c40_148, %c768_149], %183 {strides = array<i32>} : memref<72x1024xf32, #tpu.memory_space<vmem>>, vector<8x256xf32>,
    %c241_i32_150 = arith.constant 241 : i32
    %185 = tpu.dynamic_rotate %158 by %c241_i32_150 dim 1 : vector<8x256xf32>, i32 -> vector<8x256xf32>
    %c6_151 = arith.constant 6 : index
    %c0_152 = arith.constant 0 : index
    %186 = vector.load %arg2[%c6_151, %c0_152] : memref<9x256xf32, #tpu.memory_space<vmem>>, vector<1x256xf32>
    %187 = vector.broadcast %186 : vector<1x256xf32> to vector<8x256xf32>
    %188 = arith.mulf %185, %187 : vector<8x256xf32>
    %c48_153 = arith.constant 48 : index
    %c768_154 = arith.constant 768 : index
    %189 = vector.load %arg12[%c48_153, %c768_154] : memref<72x1024xf32, #tpu.memory_space<vmem>>, vector<8x256xf32>
    tpu.vector_store %arg12[%c48_153, %c768_154], %188 {strides = array<i32>} : memref<72x1024xf32, #tpu.memory_space<vmem>>, vector<8x256xf32>,
    %c240_i32_155 = arith.constant 240 : i32
    %190 = tpu.dynamic_rotate %158 by %c240_i32_155 dim 1 : vector<8x256xf32>, i32 -> vector<8x256xf32>
    %c7_156 = arith.constant 7 : index
    %c0_157 = arith.constant 0 : index
    %191 = vector.load %arg2[%c7_156, %c0_157] : memref<9x256xf32, #tpu.memory_space<vmem>>, vector<1x256xf32>
    %192 = vector.broadcast %191 : vector<1x256xf32> to vector<8x256xf32>
    %193 = arith.mulf %190, %192 : vector<8x256xf32>
    %c56_158 = arith.constant 56 : index
    %c768_159 = arith.constant 768 : index
    %194 = vector.load %arg12[%c56_158, %c768_159] : memref<72x1024xf32, #tpu.memory_space<vmem>>, vector<8x256xf32>
    tpu.vector_store %arg12[%c56_158, %c768_159], %193 {strides = array<i32>} : memref<72x1024xf32, #tpu.memory_space<vmem>>, vector<8x256xf32>,
    %c239_i32_160 = arith.constant 239 : i32
    %195 = tpu.dynamic_rotate %158 by %c239_i32_160 dim 1 : vector<8x256xf32>, i32 -> vector<8x256xf32>
    %c8_161 = arith.constant 8 : index
    %c0_162 = arith.constant 0 : index
    %196 = vector.load %arg2[%c8_161, %c0_162] : memref<9x256xf32, #tpu.memory_space<vmem>>, vector<1x256xf32>
    %197 = vector.broadcast %196 : vector<1x256xf32> to vector<8x256xf32>
    %198 = arith.mulf %195, %197 : vector<8x256xf32>
    %c64_163 = arith.constant 64 : index
    %c768_164 = arith.constant 768 : index
    %199 = vector.load %arg12[%c64_163, %c768_164] : memref<72x1024xf32, #tpu.memory_space<vmem>>, vector<8x256xf32>
    tpu.vector_store %arg12[%c64_163, %c768_164], %198 {strides = array<i32>} : memref<72x1024xf32, #tpu.memory_space<vmem>>, vector<8x256xf32>,
    %c0_165 = arith.constant 0 : index
    %c0_166 = arith.constant 0 : index
    %200 = vector.load %arg5[%c0_165, %c0_166] : memref<16x72xf32, #tpu.memory_space<vmem>>, vector<16x72xf32>
    %c0_167 = arith.constant 0 : index
    %c0_168 = arith.constant 0 : index
    %201 = vector.load %arg12[%c0_167, %c0_168] : memref<72x1024xf32, #tpu.memory_space<vmem>>, vector<72x1024xf32>
    %cst_169 = arith.constant dense<0.000000e+00> : vector<16x1024xf32>
    %202 = tpu.matmul %200, %201, %cst_169 {dimension_numbers = #tpu.dot_dimension_numbers<[1], [0], [0], [1], [0, 0, 1, 1], [], []>} : vector<16x72xf32>, vector<72x1024xf32>, vector<16x1024xf32> -> vector<16x1024xf32>
    %203 = vector.extract_strided_slice %202 {offsets = [0, 0], sizes = [16, 256], strides = [1, 1]} : vector<16x1024xf32> to vector<16x256xf32>
    %204 = vector.broadcast %2 : vector<16x1xf32> to vector<16x256xf32>
    %205 = arith.mulf %203, %204 : vector<16x256xf32>
    %206 = vector.broadcast %3 : vector<16x1xf32> to vector<16x256xf32>
    %207 = arith.addf %205, %206 : vector<16x256xf32>
    %cst_170 = arith.constant 0.000000e+00 : f32
    %208 = vector.broadcast %cst_170 : f32 to vector<16x256xf32>
    %209 = arith.maximumf %207, %208 : vector<16x256xf32>
    %c17_i32_171 = arith.constant 17 : i32
    %210 = tpu.dynamic_rotate %209 by %c17_i32_171 dim 1 : vector<16x256xf32>, i32 -> vector<16x256xf32>
    %c0_172 = arith.constant 0 : index
    %c0_173 = arith.constant 0 : index
    %211 = vector.load %arg2[%c0_172, %c0_173] : memref<9x256xf32, #tpu.memory_space<vmem>>, vector<1x256xf32>
    %212 = vector.broadcast %211 : vector<1x256xf32> to vector<16x256xf32>
    %213 = arith.mulf %210, %212 : vector<16x256xf32>
    %c0_174 = arith.constant 0 : index
    %c0_175 = arith.constant 0 : index
    %214 = vector.load %arg13[%c0_174, %c0_175] : memref<144x1024xf32, #tpu.memory_space<vmem>>, vector<16x256xf32>
    tpu.vector_store %arg13[%c0_174, %c0_175], %213 {strides = array<i32>} : memref<144x1024xf32, #tpu.memory_space<vmem>>, vector<16x256xf32>,
    %c16_i32_176 = arith.constant 16 : i32
    %215 = tpu.dynamic_rotate %209 by %c16_i32_176 dim 1 : vector<16x256xf32>, i32 -> vector<16x256xf32>
    %c1_177 = arith.constant 1 : index
    %c0_178 = arith.constant 0 : index
    %216 = vector.load %arg2[%c1_177, %c0_178] : memref<9x256xf32, #tpu.memory_space<vmem>>, vector<1x256xf32>
    %217 = vector.broadcast %216 : vector<1x256xf32> to vector<16x256xf32>
    %218 = arith.mulf %215, %217 : vector<16x256xf32>
    %c16_179 = arith.constant 16 : index
    %c0_180 = arith.constant 0 : index
    %219 = vector.load %arg13[%c16_179, %c0_180] : memref<144x1024xf32, #tpu.memory_space<vmem>>, vector<16x256xf32>
    tpu.vector_store %arg13[%c16_179, %c0_180], %218 {strides = array<i32>} : memref<144x1024xf32, #tpu.memory_space<vmem>>, vector<16x256xf32>,
    %c15_i32_181 = arith.constant 15 : i32
    %220 = tpu.dynamic_rotate %209 by %c15_i32_181 dim 1 : vector<16x256xf32>, i32 -> vector<16x256xf32>
    %c2_182 = arith.constant 2 : index
    %c0_183 = arith.constant 0 : index
    %221 = vector.load %arg2[%c2_182, %c0_183] : memref<9x256xf32, #tpu.memory_space<vmem>>, vector<1x256xf32>
    %222 = vector.broadcast %221 : vector<1x256xf32> to vector<16x256xf32>
    %223 = arith.mulf %220, %222 : vector<16x256xf32>
    %c32_184 = arith.constant 32 : index
    %c0_185 = arith.constant 0 : index
    %224 = vector.load %arg13[%c32_184, %c0_185] : memref<144x1024xf32, #tpu.memory_space<vmem>>, vector<16x256xf32>
    tpu.vector_store %arg13[%c32_184, %c0_185], %223 {strides = array<i32>} : memref<144x1024xf32, #tpu.memory_space<vmem>>, vector<16x256xf32>,
    %c1_i32_186 = arith.constant 1 : i32
    %225 = tpu.dynamic_rotate %209 by %c1_i32_186 dim 1 : vector<16x256xf32>, i32 -> vector<16x256xf32>
    %c3_187 = arith.constant 3 : index
    %c0_188 = arith.constant 0 : index
    %226 = vector.load %arg2[%c3_187, %c0_188] : memref<9x256xf32, #tpu.memory_space<vmem>>, vector<1x256xf32>
    %227 = vector.broadcast %226 : vector<1x256xf32> to vector<16x256xf32>
    %228 = arith.mulf %225, %227 : vector<16x256xf32>
    %c48_189 = arith.constant 48 : index
    %c0_190 = arith.constant 0 : index
    %229 = vector.load %arg13[%c48_189, %c0_190] : memref<144x1024xf32, #tpu.memory_space<vmem>>, vector<16x256xf32>
    tpu.vector_store %arg13[%c48_189, %c0_190], %228 {strides = array<i32>} : memref<144x1024xf32, #tpu.memory_space<vmem>>, vector<16x256xf32>,
    %c64_191 = arith.constant 64 : index
    %c0_192 = arith.constant 0 : index
    %230 = vector.load %arg13[%c64_191, %c0_192] : memref<144x1024xf32, #tpu.memory_space<vmem>>, vector<16x256xf32>
    tpu.vector_store %arg13[%c64_191, %c0_192], %209 {strides = array<i32>} : memref<144x1024xf32, #tpu.memory_space<vmem>>, vector<16x256xf32>,
    %c255_i32_193 = arith.constant 255 : i32
    %231 = tpu.dynamic_rotate %209 by %c255_i32_193 dim 1 : vector<16x256xf32>, i32 -> vector<16x256xf32>
    %c5_194 = arith.constant 5 : index
    %c0_195 = arith.constant 0 : index
    %232 = vector.load %arg2[%c5_194, %c0_195] : memref<9x256xf32, #tpu.memory_space<vmem>>, vector<1x256xf32>
    %233 = vector.broadcast %232 : vector<1x256xf32> to vector<16x256xf32>
    %234 = arith.mulf %231, %233 : vector<16x256xf32>
    %c80 = arith.constant 80 : index
    %c0_196 = arith.constant 0 : index
    %235 = vector.load %arg13[%c80, %c0_196] : memref<144x1024xf32, #tpu.memory_space<vmem>>, vector<16x256xf32>
    tpu.vector_store %arg13[%c80, %c0_196], %234 {strides = array<i32>} : memref<144x1024xf32, #tpu.memory_space<vmem>>, vector<16x256xf32>,
    %c241_i32_197 = arith.constant 241 : i32
    %236 = tpu.dynamic_rotate %209 by %c241_i32_197 dim 1 : vector<16x256xf32>, i32 -> vector<16x256xf32>
    %c6_198 = arith.constant 6 : index
    %c0_199 = arith.constant 0 : index
    %237 = vector.load %arg2[%c6_198, %c0_199] : memref<9x256xf32, #tpu.memory_space<vmem>>, vector<1x256xf32>
    %238 = vector.broadcast %237 : vector<1x256xf32> to vector<16x256xf32>
    %239 = arith.mulf %236, %238 : vector<16x256xf32>
    %c96 = arith.constant 96 : index
    %c0_200 = arith.constant 0 : index
    %240 = vector.load %arg13[%c96, %c0_200] : memref<144x1024xf32, #tpu.memory_space<vmem>>, vector<16x256xf32>
    tpu.vector_store %arg13[%c96, %c0_200], %239 {strides = array<i32>} : memref<144x1024xf32, #tpu.memory_space<vmem>>, vector<16x256xf32>,
    %c240_i32_201 = arith.constant 240 : i32
    %241 = tpu.dynamic_rotate %209 by %c240_i32_201 dim 1 : vector<16x256xf32>, i32 -> vector<16x256xf32>
    %c7_202 = arith.constant 7 : index
    %c0_203 = arith.constant 0 : index
    %242 = vector.load %arg2[%c7_202, %c0_203] : memref<9x256xf32, #tpu.memory_space<vmem>>, vector<1x256xf32>
    %243 = vector.broadcast %242 : vector<1x256xf32> to vector<16x256xf32>
    %244 = arith.mulf %241, %243 : vector<16x256xf32>
    %c112 = arith.constant 112 : index
    %c0_204 = arith.constant 0 : index
    %245 = vector.load %arg13[%c112, %c0_204] : memref<144x1024xf32, #tpu.memory_space<vmem>>, vector<16x256xf32>
    tpu.vector_store %arg13[%c112, %c0_204], %244 {strides = array<i32>} : memref<144x1024xf32, #tpu.memory_space<vmem>>, vector<16x256xf32>,
    %c239_i32_205 = arith.constant 239 : i32
    %246 = tpu.dynamic_rotate %209 by %c239_i32_205 dim 1 : vector<16x256xf32>, i32 -> vector<16x256xf32>
    %c8_206 = arith.constant 8 : index
    %c0_207 = arith.constant 0 : index
    %247 = vector.load %arg2[%c8_206, %c0_207] : memref<9x256xf32, #tpu.memory_space<vmem>>, vector<1x256xf32>
    %248 = vector.broadcast %247 : vector<1x256xf32> to vector<16x256xf32>
    %249 = arith.mulf %246, %248 : vector<16x256xf32>
    %c128 = arith.constant 128 : index
    %c0_208 = arith.constant 0 : index
    %250 = vector.load %arg13[%c128, %c0_208] : memref<144x1024xf32, #tpu.memory_space<vmem>>, vector<16x256xf32>
    tpu.vector_store %arg13[%c128, %c0_208], %249 {strides = array<i32>} : memref<144x1024xf32, #tpu.memory_space<vmem>>, vector<16x256xf32>,
    %251 = vector.extract_strided_slice %202 {offsets = [0, 256], sizes = [16, 256], strides = [1, 1]} : vector<16x1024xf32> to vector<16x256xf32>
    %252 = vector.broadcast %2 : vector<16x1xf32> to vector<16x256xf32>
    %253 = arith.mulf %251, %252 : vector<16x256xf32>
    %254 = vector.broadcast %3 : vector<16x1xf32> to vector<16x256xf32>
    %255 = arith.addf %253, %254 : vector<16x256xf32>
    %cst_209 = arith.constant 0.000000e+00 : f32
    %256 = vector.broadcast %cst_209 : f32 to vector<16x256xf32>
    %257 = arith.maximumf %255, %256 : vector<16x256xf32>
    %c17_i32_210 = arith.constant 17 : i32
    %258 = tpu.dynamic_rotate %257 by %c17_i32_210 dim 1 : vector<16x256xf32>, i32 -> vector<16x256xf32>
    %c0_211 = arith.constant 0 : index
    %c0_212 = arith.constant 0 : index
    %259 = vector.load %arg2[%c0_211, %c0_212] : memref<9x256xf32, #tpu.memory_space<vmem>>, vector<1x256xf32>
    %260 = vector.broadcast %259 : vector<1x256xf32> to vector<16x256xf32>
    %261 = arith.mulf %258, %260 : vector<16x256xf32>
    %c0_213 = arith.constant 0 : index
    %c256_214 = arith.constant 256 : index
    %262 = vector.load %arg13[%c0_213, %c256_214] : memref<144x1024xf32, #tpu.memory_space<vmem>>, vector<16x256xf32>
    tpu.vector_store %arg13[%c0_213, %c256_214], %261 {strides = array<i32>} : memref<144x1024xf32, #tpu.memory_space<vmem>>, vector<16x256xf32>,
    %c16_i32_215 = arith.constant 16 : i32
    %263 = tpu.dynamic_rotate %257 by %c16_i32_215 dim 1 : vector<16x256xf32>, i32 -> vector<16x256xf32>
    %c1_216 = arith.constant 1 : index
    %c0_217 = arith.constant 0 : index
    %264 = vector.load %arg2[%c1_216, %c0_217] : memref<9x256xf32, #tpu.memory_space<vmem>>, vector<1x256xf32>
    %265 = vector.broadcast %264 : vector<1x256xf32> to vector<16x256xf32>
    %266 = arith.mulf %263, %265 : vector<16x256xf32>
    %c16_218 = arith.constant 16 : index
    %c256_219 = arith.constant 256 : index
    %267 = vector.load %arg13[%c16_218, %c256_219] : memref<144x1024xf32, #tpu.memory_space<vmem>>, vector<16x256xf32>
    tpu.vector_store %arg13[%c16_218, %c256_219], %266 {strides = array<i32>} : memref<144x1024xf32, #tpu.memory_space<vmem>>, vector<16x256xf32>,
    %c15_i32_220 = arith.constant 15 : i32
    %268 = tpu.dynamic_rotate %257 by %c15_i32_220 dim 1 : vector<16x256xf32>, i32 -> vector<16x256xf32>
    %c2_221 = arith.constant 2 : index
    %c0_222 = arith.constant 0 : index
    %269 = vector.load %arg2[%c2_221, %c0_222] : memref<9x256xf32, #tpu.memory_space<vmem>>, vector<1x256xf32>
    %270 = vector.broadcast %269 : vector<1x256xf32> to vector<16x256xf32>
    %271 = arith.mulf %268, %270 : vector<16x256xf32>
    %c32_223 = arith.constant 32 : index
    %c256_224 = arith.constant 256 : index
    %272 = vector.load %arg13[%c32_223, %c256_224] : memref<144x1024xf32, #tpu.memory_space<vmem>>, vector<16x256xf32>
    tpu.vector_store %arg13[%c32_223, %c256_224], %271 {strides = array<i32>} : memref<144x1024xf32, #tpu.memory_space<vmem>>, vector<16x256xf32>,
    %c1_i32_225 = arith.constant 1 : i32
    %273 = tpu.dynamic_rotate %257 by %c1_i32_225 dim 1 : vector<16x256xf32>, i32 -> vector<16x256xf32>
    %c3_226 = arith.constant 3 : index
    %c0_227 = arith.constant 0 : index
    %274 = vector.load %arg2[%c3_226, %c0_227] : memref<9x256xf32, #tpu.memory_space<vmem>>, vector<1x256xf32>
    %275 = vector.broadcast %274 : vector<1x256xf32> to vector<16x256xf32>
    %276 = arith.mulf %273, %275 : vector<16x256xf32>
    %c48_228 = arith.constant 48 : index
    %c256_229 = arith.constant 256 : index
    %277 = vector.load %arg13[%c48_228, %c256_229] : memref<144x1024xf32, #tpu.memory_space<vmem>>, vector<16x256xf32>
    tpu.vector_store %arg13[%c48_228, %c256_229], %276 {strides = array<i32>} : memref<144x1024xf32, #tpu.memory_space<vmem>>, vector<16x256xf32>,
    %c64_230 = arith.constant 64 : index
    %c256_231 = arith.constant 256 : index
    %278 = vector.load %arg13[%c64_230, %c256_231] : memref<144x1024xf32, #tpu.memory_space<vmem>>, vector<16x256xf32>
    tpu.vector_store %arg13[%c64_230, %c256_231], %257 {strides = array<i32>} : memref<144x1024xf32, #tpu.memory_space<vmem>>, vector<16x256xf32>,
    %c255_i32_232 = arith.constant 255 : i32
    %279 = tpu.dynamic_rotate %257 by %c255_i32_232 dim 1 : vector<16x256xf32>, i32 -> vector<16x256xf32>
    %c5_233 = arith.constant 5 : index
    %c0_234 = arith.constant 0 : index
    %280 = vector.load %arg2[%c5_233, %c0_234] : memref<9x256xf32, #tpu.memory_space<vmem>>, vector<1x256xf32>
    %281 = vector.broadcast %280 : vector<1x256xf32> to vector<16x256xf32>
    %282 = arith.mulf %279, %281 : vector<16x256xf32>
    %c80_235 = arith.constant 80 : index
    %c256_236 = arith.constant 256 : index
    %283 = vector.load %arg13[%c80_235, %c256_236] : memref<144x1024xf32, #tpu.memory_space<vmem>>, vector<16x256xf32>
    tpu.vector_store %arg13[%c80_235, %c256_236], %282 {strides = array<i32>} : memref<144x1024xf32, #tpu.memory_space<vmem>>, vector<16x256xf32>,
    %c241_i32_237 = arith.constant 241 : i32
    %284 = tpu.dynamic_rotate %257 by %c241_i32_237 dim 1 : vector<16x256xf32>, i32 -> vector<16x256xf32>
    %c6_238 = arith.constant 6 : index
    %c0_239 = arith.constant 0 : index
    %285 = vector.load %arg2[%c6_238, %c0_239] : memref<9x256xf32, #tpu.memory_space<vmem>>, vector<1x256xf32>
    %286 = vector.broadcast %285 : vector<1x256xf32> to vector<16x256xf32>
    %287 = arith.mulf %284, %286 : vector<16x256xf32>
    %c96_240 = arith.constant 96 : index
    %c256_241 = arith.constant 256 : index
    %288 = vector.load %arg13[%c96_240, %c256_241] : memref<144x1024xf32, #tpu.memory_space<vmem>>, vector<16x256xf32>
    tpu.vector_store %arg13[%c96_240, %c256_241], %287 {strides = array<i32>} : memref<144x1024xf32, #tpu.memory_space<vmem>>, vector<16x256xf32>,
    %c240_i32_242 = arith.constant 240 : i32
    %289 = tpu.dynamic_rotate %257 by %c240_i32_242 dim 1 : vector<16x256xf32>, i32 -> vector<16x256xf32>
    %c7_243 = arith.constant 7 : index
    %c0_244 = arith.constant 0 : index
    %290 = vector.load %arg2[%c7_243, %c0_244] : memref<9x256xf32, #tpu.memory_space<vmem>>, vector<1x256xf32>
    %291 = vector.broadcast %290 : vector<1x256xf32> to vector<16x256xf32>
    %292 = arith.mulf %289, %291 : vector<16x256xf32>
    %c112_245 = arith.constant 112 : index
    %c256_246 = arith.constant 256 : index
    %293 = vector.load %arg13[%c112_245, %c256_246] : memref<144x1024xf32, #tpu.memory_space<vmem>>, vector<16x256xf32>
    tpu.vector_store %arg13[%c112_245, %c256_246], %292 {strides = array<i32>} : memref<144x1024xf32, #tpu.memory_space<vmem>>, vector<16x256xf32>,
    %c239_i32_247 = arith.constant 239 : i32
    %294 = tpu.dynamic_rotate %257 by %c239_i32_247 dim 1 : vector<16x256xf32>, i32 -> vector<16x256xf32>
    %c8_248 = arith.constant 8 : index
    %c0_249 = arith.constant 0 : index
    %295 = vector.load %arg2[%c8_248, %c0_249] : memref<9x256xf32, #tpu.memory_space<vmem>>, vector<1x256xf32>
    %296 = vector.broadcast %295 : vector<1x256xf32> to vector<16x256xf32>
    %297 = arith.mulf %294, %296 : vector<16x256xf32>
    %c128_250 = arith.constant 128 : index
    %c256_251 = arith.constant 256 : index
    %298 = vector.load %arg13[%c128_250, %c256_251] : memref<144x1024xf32, #tpu.memory_space<vmem>>, vector<16x256xf32>
    tpu.vector_store %arg13[%c128_250, %c256_251], %297 {strides = array<i32>} : memref<144x1024xf32, #tpu.memory_space<vmem>>, vector<16x256xf32>,
    %299 = vector.extract_strided_slice %202 {offsets = [0, 512], sizes = [16, 256], strides = [1, 1]} : vector<16x1024xf32> to vector<16x256xf32>
    %300 = vector.broadcast %2 : vector<16x1xf32> to vector<16x256xf32>
    %301 = arith.mulf %299, %300 : vector<16x256xf32>
    %302 = vector.broadcast %3 : vector<16x1xf32> to vector<16x256xf32>
    %303 = arith.addf %301, %302 : vector<16x256xf32>
    %cst_252 = arith.constant 0.000000e+00 : f32
    %304 = vector.broadcast %cst_252 : f32 to vector<16x256xf32>
    %305 = arith.maximumf %303, %304 : vector<16x256xf32>
    %c17_i32_253 = arith.constant 17 : i32
    %306 = tpu.dynamic_rotate %305 by %c17_i32_253 dim 1 : vector<16x256xf32>, i32 -> vector<16x256xf32>
    %c0_254 = arith.constant 0 : index
    %c0_255 = arith.constant 0 : index
    %307 = vector.load %arg2[%c0_254, %c0_255] : memref<9x256xf32, #tpu.memory_space<vmem>>, vector<1x256xf32>
    %308 = vector.broadcast %307 : vector<1x256xf32> to vector<16x256xf32>
    %309 = arith.mulf %306, %308 : vector<16x256xf32>
    %c0_256 = arith.constant 0 : index
    %c512_257 = arith.constant 512 : index
    %310 = vector.load %arg13[%c0_256, %c512_257] : memref<144x1024xf32, #tpu.memory_space<vmem>>, vector<16x256xf32>
    tpu.vector_store %arg13[%c0_256, %c512_257], %309 {strides = array<i32>} : memref<144x1024xf32, #tpu.memory_space<vmem>>, vector<16x256xf32>,
    %c16_i32_258 = arith.constant 16 : i32
    %311 = tpu.dynamic_rotate %305 by %c16_i32_258 dim 1 : vector<16x256xf32>, i32 -> vector<16x256xf32>
    %c1_259 = arith.constant 1 : index
    %c0_260 = arith.constant 0 : index
    %312 = vector.load %arg2[%c1_259, %c0_260] : memref<9x256xf32, #tpu.memory_space<vmem>>, vector<1x256xf32>
    %313 = vector.broadcast %312 : vector<1x256xf32> to vector<16x256xf32>
    %314 = arith.mulf %311, %313 : vector<16x256xf32>
    %c16_261 = arith.constant 16 : index
    %c512_262 = arith.constant 512 : index
    %315 = vector.load %arg13[%c16_261, %c512_262] : memref<144x1024xf32, #tpu.memory_space<vmem>>, vector<16x256xf32>
    tpu.vector_store %arg13[%c16_261, %c512_262], %314 {strides = array<i32>} : memref<144x1024xf32, #tpu.memory_space<vmem>>, vector<16x256xf32>,
    %c15_i32_263 = arith.constant 15 : i32
    %316 = tpu.dynamic_rotate %305 by %c15_i32_263 dim 1 : vector<16x256xf32>, i32 -> vector<16x256xf32>
    %c2_264 = arith.constant 2 : index
    %c0_265 = arith.constant 0 : index
    %317 = vector.load %arg2[%c2_264, %c0_265] : memref<9x256xf32, #tpu.memory_space<vmem>>, vector<1x256xf32>
    %318 = vector.broadcast %317 : vector<1x256xf32> to vector<16x256xf32>
    %319 = arith.mulf %316, %318 : vector<16x256xf32>
    %c32_266 = arith.constant 32 : index
    %c512_267 = arith.constant 512 : index
    %320 = vector.load %arg13[%c32_266, %c512_267] : memref<144x1024xf32, #tpu.memory_space<vmem>>, vector<16x256xf32>
    tpu.vector_store %arg13[%c32_266, %c512_267], %319 {strides = array<i32>} : memref<144x1024xf32, #tpu.memory_space<vmem>>, vector<16x256xf32>,
    %c1_i32_268 = arith.constant 1 : i32
    %321 = tpu.dynamic_rotate %305 by %c1_i32_268 dim 1 : vector<16x256xf32>, i32 -> vector<16x256xf32>
    %c3_269 = arith.constant 3 : index
    %c0_270 = arith.constant 0 : index
    %322 = vector.load %arg2[%c3_269, %c0_270] : memref<9x256xf32, #tpu.memory_space<vmem>>, vector<1x256xf32>
    %323 = vector.broadcast %322 : vector<1x256xf32> to vector<16x256xf32>
    %324 = arith.mulf %321, %323 : vector<16x256xf32>
    %c48_271 = arith.constant 48 : index
    %c512_272 = arith.constant 512 : index
    %325 = vector.load %arg13[%c48_271, %c512_272] : memref<144x1024xf32, #tpu.memory_space<vmem>>, vector<16x256xf32>
    tpu.vector_store %arg13[%c48_271, %c512_272], %324 {strides = array<i32>} : memref<144x1024xf32, #tpu.memory_space<vmem>>, vector<16x256xf32>,
    %c64_273 = arith.constant 64 : index
    %c512_274 = arith.constant 512 : index
    %326 = vector.load %arg13[%c64_273, %c512_274] : memref<144x1024xf32, #tpu.memory_space<vmem>>, vector<16x256xf32>
    tpu.vector_store %arg13[%c64_273, %c512_274], %305 {strides = array<i32>} : memref<144x1024xf32, #tpu.memory_space<vmem>>, vector<16x256xf32>,
    %c255_i32_275 = arith.constant 255 : i32
    %327 = tpu.dynamic_rotate %305 by %c255_i32_275 dim 1 : vector<16x256xf32>, i32 -> vector<16x256xf32>
    %c5_276 = arith.constant 5 : index
    %c0_277 = arith.constant 0 : index
    %328 = vector.load %arg2[%c5_276, %c0_277] : memref<9x256xf32, #tpu.memory_space<vmem>>, vector<1x256xf32>
    %329 = vector.broadcast %328 : vector<1x256xf32> to vector<16x256xf32>
    %330 = arith.mulf %327, %329 : vector<16x256xf32>
    %c80_278 = arith.constant 80 : index
    %c512_279 = arith.constant 512 : index
    %331 = vector.load %arg13[%c80_278, %c512_279] : memref<144x1024xf32, #tpu.memory_space<vmem>>, vector<16x256xf32>
    tpu.vector_store %arg13[%c80_278, %c512_279], %330 {strides = array<i32>} : memref<144x1024xf32, #tpu.memory_space<vmem>>, vector<16x256xf32>,
    %c241_i32_280 = arith.constant 241 : i32
    %332 = tpu.dynamic_rotate %305 by %c241_i32_280 dim 1 : vector<16x256xf32>, i32 -> vector<16x256xf32>
    %c6_281 = arith.constant 6 : index
    %c0_282 = arith.constant 0 : index
    %333 = vector.load %arg2[%c6_281, %c0_282] : memref<9x256xf32, #tpu.memory_space<vmem>>, vector<1x256xf32>
    %334 = vector.broadcast %333 : vector<1x256xf32> to vector<16x256xf32>
    %335 = arith.mulf %332, %334 : vector<16x256xf32>
    %c96_283 = arith.constant 96 : index
    %c512_284 = arith.constant 512 : index
    %336 = vector.load %arg13[%c96_283, %c512_284] : memref<144x1024xf32, #tpu.memory_space<vmem>>, vector<16x256xf32>
    tpu.vector_store %arg13[%c96_283, %c512_284], %335 {strides = array<i32>} : memref<144x1024xf32, #tpu.memory_space<vmem>>, vector<16x256xf32>,
    %c240_i32_285 = arith.constant 240 : i32
    %337 = tpu.dynamic_rotate %305 by %c240_i32_285 dim 1 : vector<16x256xf32>, i32 -> vector<16x256xf32>
    %c7_286 = arith.constant 7 : index
    %c0_287 = arith.constant 0 : index
    %338 = vector.load %arg2[%c7_286, %c0_287] : memref<9x256xf32, #tpu.memory_space<vmem>>, vector<1x256xf32>
    %339 = vector.broadcast %338 : vector<1x256xf32> to vector<16x256xf32>
    %340 = arith.mulf %337, %339 : vector<16x256xf32>
    %c112_288 = arith.constant 112 : index
    %c512_289 = arith.constant 512 : index
    %341 = vector.load %arg13[%c112_288, %c512_289] : memref<144x1024xf32, #tpu.memory_space<vmem>>, vector<16x256xf32>
    tpu.vector_store %arg13[%c112_288, %c512_289], %340 {strides = array<i32>} : memref<144x1024xf32, #tpu.memory_space<vmem>>, vector<16x256xf32>,
    %c239_i32_290 = arith.constant 239 : i32
    %342 = tpu.dynamic_rotate %305 by %c239_i32_290 dim 1 : vector<16x256xf32>, i32 -> vector<16x256xf32>
    %c8_291 = arith.constant 8 : index
    %c0_292 = arith.constant 0 : index
    %343 = vector.load %arg2[%c8_291, %c0_292] : memref<9x256xf32, #tpu.memory_space<vmem>>, vector<1x256xf32>
    %344 = vector.broadcast %343 : vector<1x256xf32> to vector<16x256xf32>
    %345 = arith.mulf %342, %344 : vector<16x256xf32>
    %c128_293 = arith.constant 128 : index
    %c512_294 = arith.constant 512 : index
    %346 = vector.load %arg13[%c128_293, %c512_294] : memref<144x1024xf32, #tpu.memory_space<vmem>>, vector<16x256xf32>
    tpu.vector_store %arg13[%c128_293, %c512_294], %345 {strides = array<i32>} : memref<144x1024xf32, #tpu.memory_space<vmem>>, vector<16x256xf32>,
    %347 = vector.extract_strided_slice %202 {offsets = [0, 768], sizes = [16, 256], strides = [1, 1]} : vector<16x1024xf32> to vector<16x256xf32>
    %348 = vector.broadcast %2 : vector<16x1xf32> to vector<16x256xf32>
    %349 = arith.mulf %347, %348 : vector<16x256xf32>
    %350 = vector.broadcast %3 : vector<16x1xf32> to vector<16x256xf32>
    %351 = arith.addf %349, %350 : vector<16x256xf32>
    %cst_295 = arith.constant 0.000000e+00 : f32
    %352 = vector.broadcast %cst_295 : f32 to vector<16x256xf32>
    %353 = arith.maximumf %351, %352 : vector<16x256xf32>
    %c17_i32_296 = arith.constant 17 : i32
    %354 = tpu.dynamic_rotate %353 by %c17_i32_296 dim 1 : vector<16x256xf32>, i32 -> vector<16x256xf32>
    %c0_297 = arith.constant 0 : index
    %c0_298 = arith.constant 0 : index
    %355 = vector.load %arg2[%c0_297, %c0_298] : memref<9x256xf32, #tpu.memory_space<vmem>>, vector<1x256xf32>
    %356 = vector.broadcast %355 : vector<1x256xf32> to vector<16x256xf32>
    %357 = arith.mulf %354, %356 : vector<16x256xf32>
    %c0_299 = arith.constant 0 : index
    %c768_300 = arith.constant 768 : index
    %358 = vector.load %arg13[%c0_299, %c768_300] : memref<144x1024xf32, #tpu.memory_space<vmem>>, vector<16x256xf32>
    tpu.vector_store %arg13[%c0_299, %c768_300], %357 {strides = array<i32>} : memref<144x1024xf32, #tpu.memory_space<vmem>>, vector<16x256xf32>,
    %c16_i32_301 = arith.constant 16 : i32
    %359 = tpu.dynamic_rotate %353 by %c16_i32_301 dim 1 : vector<16x256xf32>, i32 -> vector<16x256xf32>
    %c1_302 = arith.constant 1 : index
    %c0_303 = arith.constant 0 : index
    %360 = vector.load %arg2[%c1_302, %c0_303] : memref<9x256xf32, #tpu.memory_space<vmem>>, vector<1x256xf32>
    %361 = vector.broadcast %360 : vector<1x256xf32> to vector<16x256xf32>
    %362 = arith.mulf %359, %361 : vector<16x256xf32>
    %c16_304 = arith.constant 16 : index
    %c768_305 = arith.constant 768 : index
    %363 = vector.load %arg13[%c16_304, %c768_305] : memref<144x1024xf32, #tpu.memory_space<vmem>>, vector<16x256xf32>
    tpu.vector_store %arg13[%c16_304, %c768_305], %362 {strides = array<i32>} : memref<144x1024xf32, #tpu.memory_space<vmem>>, vector<16x256xf32>,
    %c15_i32_306 = arith.constant 15 : i32
    %364 = tpu.dynamic_rotate %353 by %c15_i32_306 dim 1 : vector<16x256xf32>, i32 -> vector<16x256xf32>
    %c2_307 = arith.constant 2 : index
    %c0_308 = arith.constant 0 : index
    %365 = vector.load %arg2[%c2_307, %c0_308] : memref<9x256xf32, #tpu.memory_space<vmem>>, vector<1x256xf32>
    %366 = vector.broadcast %365 : vector<1x256xf32> to vector<16x256xf32>
    %367 = arith.mulf %364, %366 : vector<16x256xf32>
    %c32_309 = arith.constant 32 : index
    %c768_310 = arith.constant 768 : index
    %368 = vector.load %arg13[%c32_309, %c768_310] : memref<144x1024xf32, #tpu.memory_space<vmem>>, vector<16x256xf32>
    tpu.vector_store %arg13[%c32_309, %c768_310], %367 {strides = array<i32>} : memref<144x1024xf32, #tpu.memory_space<vmem>>, vector<16x256xf32>,
    %c1_i32_311 = arith.constant 1 : i32
    %369 = tpu.dynamic_rotate %353 by %c1_i32_311 dim 1 : vector<16x256xf32>, i32 -> vector<16x256xf32>
    %c3_312 = arith.constant 3 : index
    %c0_313 = arith.constant 0 : index
    %370 = vector.load %arg2[%c3_312, %c0_313] : memref<9x256xf32, #tpu.memory_space<vmem>>, vector<1x256xf32>
    %371 = vector.broadcast %370 : vector<1x256xf32> to vector<16x256xf32>
    %372 = arith.mulf %369, %371 : vector<16x256xf32>
    %c48_314 = arith.constant 48 : index
    %c768_315 = arith.constant 768 : index
    %373 = vector.load %arg13[%c48_314, %c768_315] : memref<144x1024xf32, #tpu.memory_space<vmem>>, vector<16x256xf32>
    tpu.vector_store %arg13[%c48_314, %c768_315], %372 {strides = array<i32>} : memref<144x1024xf32, #tpu.memory_space<vmem>>, vector<16x256xf32>,
    %c64_316 = arith.constant 64 : index
    %c768_317 = arith.constant 768 : index
    %374 = vector.load %arg13[%c64_316, %c768_317] : memref<144x1024xf32, #tpu.memory_space<vmem>>, vector<16x256xf32>
    tpu.vector_store %arg13[%c64_316, %c768_317], %353 {strides = array<i32>} : memref<144x1024xf32, #tpu.memory_space<vmem>>, vector<16x256xf32>,
    %c255_i32_318 = arith.constant 255 : i32
    %375 = tpu.dynamic_rotate %353 by %c255_i32_318 dim 1 : vector<16x256xf32>, i32 -> vector<16x256xf32>
    %c5_319 = arith.constant 5 : index
    %c0_320 = arith.constant 0 : index
    %376 = vector.load %arg2[%c5_319, %c0_320] : memref<9x256xf32, #tpu.memory_space<vmem>>, vector<1x256xf32>
    %377 = vector.broadcast %376 : vector<1x256xf32> to vector<16x256xf32>
    %378 = arith.mulf %375, %377 : vector<16x256xf32>
    %c80_321 = arith.constant 80 : index
    %c768_322 = arith.constant 768 : index
    %379 = vector.load %arg13[%c80_321, %c768_322] : memref<144x1024xf32, #tpu.memory_space<vmem>>, vector<16x256xf32>
    tpu.vector_store %arg13[%c80_321, %c768_322], %378 {strides = array<i32>} : memref<144x1024xf32, #tpu.memory_space<vmem>>, vector<16x256xf32>,
    %c241_i32_323 = arith.constant 241 : i32
    %380 = tpu.dynamic_rotate %353 by %c241_i32_323 dim 1 : vector<16x256xf32>, i32 -> vector<16x256xf32>
    %c6_324 = arith.constant 6 : index
    %c0_325 = arith.constant 0 : index
    %381 = vector.load %arg2[%c6_324, %c0_325] : memref<9x256xf32, #tpu.memory_space<vmem>>, vector<1x256xf32>
    %382 = vector.broadcast %381 : vector<1x256xf32> to vector<16x256xf32>
    %383 = arith.mulf %380, %382 : vector<16x256xf32>
    %c96_326 = arith.constant 96 : index
    %c768_327 = arith.constant 768 : index
    %384 = vector.load %arg13[%c96_326, %c768_327] : memref<144x1024xf32, #tpu.memory_space<vmem>>, vector<16x256xf32>
    tpu.vector_store %arg13[%c96_326, %c768_327], %383 {strides = array<i32>} : memref<144x1024xf32, #tpu.memory_space<vmem>>, vector<16x256xf32>,
    %c240_i32_328 = arith.constant 240 : i32
    %385 = tpu.dynamic_rotate %353 by %c240_i32_328 dim 1 : vector<16x256xf32>, i32 -> vector<16x256xf32>
    %c7_329 = arith.constant 7 : index
    %c0_330 = arith.constant 0 : index
    %386 = vector.load %arg2[%c7_329, %c0_330] : memref<9x256xf32, #tpu.memory_space<vmem>>, vector<1x256xf32>
    %387 = vector.broadcast %386 : vector<1x256xf32> to vector<16x256xf32>
    %388 = arith.mulf %385, %387 : vector<16x256xf32>
    %c112_331 = arith.constant 112 : index
    %c768_332 = arith.constant 768 : index
    %389 = vector.load %arg13[%c112_331, %c768_332] : memref<144x1024xf32, #tpu.memory_space<vmem>>, vector<16x256xf32>
    tpu.vector_store %arg13[%c112_331, %c768_332], %388 {strides = array<i32>} : memref<144x1024xf32, #tpu.memory_space<vmem>>, vector<16x256xf32>,
    %c239_i32_333 = arith.constant 239 : i32
    %390 = tpu.dynamic_rotate %353 by %c239_i32_333 dim 1 : vector<16x256xf32>, i32 -> vector<16x256xf32>
    %c8_334 = arith.constant 8 : index
    %c0_335 = arith.constant 0 : index
    %391 = vector.load %arg2[%c8_334, %c0_335] : memref<9x256xf32, #tpu.memory_space<vmem>>, vector<1x256xf32>
    %392 = vector.broadcast %391 : vector<1x256xf32> to vector<16x256xf32>
    %393 = arith.mulf %390, %392 : vector<16x256xf32>
    %c128_336 = arith.constant 128 : index
    %c768_337 = arith.constant 768 : index
    %394 = vector.load %arg13[%c128_336, %c768_337] : memref<144x1024xf32, #tpu.memory_space<vmem>>, vector<16x256xf32>
    tpu.vector_store %arg13[%c128_336, %c768_337], %393 {strides = array<i32>} : memref<144x1024xf32, #tpu.memory_space<vmem>>, vector<16x256xf32>,
    %c0_338 = arith.constant 0 : index
    %c0_339 = arith.constant 0 : index
    %395 = vector.load %arg8[%c0_338, %c0_339] : memref<16x144xf32, #tpu.memory_space<vmem>>, vector<16x144xf32>
    %c0_340 = arith.constant 0 : index
    %c0_341 = arith.constant 0 : index
    %396 = vector.load %arg13[%c0_340, %c0_341] : memref<144x1024xf32, #tpu.memory_space<vmem>>, vector<144x1024xf32>
    %cst_342 = arith.constant dense<0.000000e+00> : vector<16x1024xf32>
    %397 = tpu.matmul %395, %396, %cst_342 {dimension_numbers = #tpu.dot_dimension_numbers<[1], [0], [0], [1], [0, 0, 1, 1], [], []>} : vector<16x144xf32>, vector<144x1024xf32>, vector<16x1024xf32> -> vector<16x1024xf32>
    %398 = vector.extract_strided_slice %397 {offsets = [0, 0], sizes = [16, 256], strides = [1, 1]} : vector<16x1024xf32> to vector<16x256xf32>
    %c0_343 = arith.constant 0 : index
    %c0_344 = arith.constant 0 : index
    %c0_345 = arith.constant 0 : index
    %399 = vector.load %arg1[%c0_343, %c0_344, %c0_345] : memref<4x8x256xf32, #tpu.memory_space<vmem>>, vector<1x8x256xf32>
    %400 = vector.shape_cast %399 : vector<1x8x256xf32> to vector<8x256xf32>
    %c0_346 = arith.constant 0 : index
    %c0_347 = arith.constant 0 : index
    %401 = vector.load %arg9[%c0_346, %c0_347] : memref<16x8xf32, #tpu.memory_space<vmem>>, vector<16x8xf32>
    %cst_348 = arith.constant dense<0.000000e+00> : vector<16x256xf32>
    %402 = tpu.matmul %401, %400, %cst_348 {dimension_numbers = #tpu.dot_dimension_numbers<[1], [0], [0], [1], [0, 0, 1, 1], [], []>} : vector<16x8xf32>, vector<8x256xf32>, vector<16x256xf32> -> vector<16x256xf32>
    %c0_349 = arith.constant 0 : index
    %c0_350 = arith.constant 0 : index
    %403 = vector.load %arg10[%c0_349, %c0_350] : memref<16x1xf32, #tpu.memory_space<vmem>>, vector<16x1xf32>
    %404 = vector.broadcast %403 : vector<16x1xf32> to vector<16x256xf32>
    %405 = arith.addf %402, %404 : vector<16x256xf32>
    %406 = arith.addf %398, %405 : vector<16x256xf32>
    %c0_351 = arith.constant 0 : index
    %c0_352 = arith.constant 0 : index
    %c0_353 = arith.constant 0 : index
    %407 = vector.load %arg11[%c0_351, %c0_352, %c0_353] : memref<4x16x256xf32, #tpu.memory_space<vmem>>, vector<1x16x256xf32>
    %408 = vector.shape_cast %407 : vector<1x16x256xf32> to vector<16x256xf32>
    %409 = vector.shape_cast %406 : vector<16x256xf32> to vector<1x16x256xf32>
    tpu.vector_store %arg11[%c0_351, %c0_352, %c0_353], %409 {strides = array<i32>} : memref<4x16x256xf32, #tpu.memory_space<vmem>>, vector<1x16x256xf32>,
    %410 = vector.extract_strided_slice %397 {offsets = [0, 256], sizes = [16, 256], strides = [1, 1]} : vector<16x1024xf32> to vector<16x256xf32>
    %c1_354 = arith.constant 1 : index
    %c0_355 = arith.constant 0 : index
    %c0_356 = arith.constant 0 : index
    %411 = vector.load %arg1[%c1_354, %c0_355, %c0_356] : memref<4x8x256xf32, #tpu.memory_space<vmem>>, vector<1x8x256xf32>
    %412 = vector.shape_cast %411 : vector<1x8x256xf32> to vector<8x256xf32>
    %c0_357 = arith.constant 0 : index
    %c0_358 = arith.constant 0 : index
    %413 = vector.load %arg9[%c0_357, %c0_358] : memref<16x8xf32, #tpu.memory_space<vmem>>, vector<16x8xf32>
    %cst_359 = arith.constant dense<0.000000e+00> : vector<16x256xf32>
    %414 = tpu.matmul %413, %412, %cst_359 {dimension_numbers = #tpu.dot_dimension_numbers<[1], [0], [0], [1], [0, 0, 1, 1], [], []>} : vector<16x8xf32>, vector<8x256xf32>, vector<16x256xf32> -> vector<16x256xf32>
    %c0_360 = arith.constant 0 : index
    %c0_361 = arith.constant 0 : index
    %415 = vector.load %arg10[%c0_360, %c0_361] : memref<16x1xf32, #tpu.memory_space<vmem>>, vector<16x1xf32>
    %416 = vector.broadcast %415 : vector<16x1xf32> to vector<16x256xf32>
    %417 = arith.addf %414, %416 : vector<16x256xf32>
    %418 = arith.addf %410, %417 : vector<16x256xf32>
    %c1_362 = arith.constant 1 : index
    %c0_363 = arith.constant 0 : index
    %c0_364 = arith.constant 0 : index
    %419 = vector.load %arg11[%c1_362, %c0_363, %c0_364] : memref<4x16x256xf32, #tpu.memory_space<vmem>>, vector<1x16x256xf32>
    %420 = vector.shape_cast %419 : vector<1x16x256xf32> to vector<16x256xf32>
    %421 = vector.shape_cast %418 : vector<16x256xf32> to vector<1x16x256xf32>
    tpu.vector_store %arg11[%c1_362, %c0_363, %c0_364], %421 {strides = array<i32>} : memref<4x16x256xf32, #tpu.memory_space<vmem>>, vector<1x16x256xf32>,
    %422 = vector.extract_strided_slice %397 {offsets = [0, 512], sizes = [16, 256], strides = [1, 1]} : vector<16x1024xf32> to vector<16x256xf32>
    %c2_365 = arith.constant 2 : index
    %c0_366 = arith.constant 0 : index
    %c0_367 = arith.constant 0 : index
    %423 = vector.load %arg1[%c2_365, %c0_366, %c0_367] : memref<4x8x256xf32, #tpu.memory_space<vmem>>, vector<1x8x256xf32>
    %424 = vector.shape_cast %423 : vector<1x8x256xf32> to vector<8x256xf32>
    %c0_368 = arith.constant 0 : index
    %c0_369 = arith.constant 0 : index
    %425 = vector.load %arg9[%c0_368, %c0_369] : memref<16x8xf32, #tpu.memory_space<vmem>>, vector<16x8xf32>
    %cst_370 = arith.constant dense<0.000000e+00> : vector<16x256xf32>
    %426 = tpu.matmul %425, %424, %cst_370 {dimension_numbers = #tpu.dot_dimension_numbers<[1], [0], [0], [1], [0, 0, 1, 1], [], []>} : vector<16x8xf32>, vector<8x256xf32>, vector<16x256xf32> -> vector<16x256xf32>
    %c0_371 = arith.constant 0 : index
    %c0_372 = arith.constant 0 : index
    %427 = vector.load %arg10[%c0_371, %c0_372] : memref<16x1xf32, #tpu.memory_space<vmem>>, vector<16x1xf32>
    %428 = vector.broadcast %427 : vector<16x1xf32> to vector<16x256xf32>
    %429 = arith.addf %426, %428 : vector<16x256xf32>
    %430 = arith.addf %422, %429 : vector<16x256xf32>
    %c2_373 = arith.constant 2 : index
    %c0_374 = arith.constant 0 : index
    %c0_375 = arith.constant 0 : index
    %431 = vector.load %arg11[%c2_373, %c0_374, %c0_375] : memref<4x16x256xf32, #tpu.memory_space<vmem>>, vector<1x16x256xf32>
    %432 = vector.shape_cast %431 : vector<1x16x256xf32> to vector<16x256xf32>
    %433 = vector.shape_cast %430 : vector<16x256xf32> to vector<1x16x256xf32>
    tpu.vector_store %arg11[%c2_373, %c0_374, %c0_375], %433 {strides = array<i32>} : memref<4x16x256xf32, #tpu.memory_space<vmem>>, vector<1x16x256xf32>,
    %434 = vector.extract_strided_slice %397 {offsets = [0, 768], sizes = [16, 256], strides = [1, 1]} : vector<16x1024xf32> to vector<16x256xf32>
    %c3_376 = arith.constant 3 : index
    %c0_377 = arith.constant 0 : index
    %c0_378 = arith.constant 0 : index
    %435 = vector.load %arg1[%c3_376, %c0_377, %c0_378] : memref<4x8x256xf32, #tpu.memory_space<vmem>>, vector<1x8x256xf32>
    %436 = vector.shape_cast %435 : vector<1x8x256xf32> to vector<8x256xf32>
    %c0_379 = arith.constant 0 : index
    %c0_380 = arith.constant 0 : index
    %437 = vector.load %arg9[%c0_379, %c0_380] : memref<16x8xf32, #tpu.memory_space<vmem>>, vector<16x8xf32>
    %cst_381 = arith.constant dense<0.000000e+00> : vector<16x256xf32>
    %438 = tpu.matmul %437, %436, %cst_381 {dimension_numbers = #tpu.dot_dimension_numbers<[1], [0], [0], [1], [0, 0, 1, 1], [], []>} : vector<16x8xf32>, vector<8x256xf32>, vector<16x256xf32> -> vector<16x256xf32>
    %c0_382 = arith.constant 0 : index
    %c0_383 = arith.constant 0 : index
    %439 = vector.load %arg10[%c0_382, %c0_383] : memref<16x1xf32, #tpu.memory_space<vmem>>, vector<16x1xf32>
    %440 = vector.broadcast %439 : vector<16x1xf32> to vector<16x256xf32>
    %441 = arith.addf %438, %440 : vector<16x256xf32>
    %442 = arith.addf %434, %441 : vector<16x256xf32>
    %c3_384 = arith.constant 3 : index
    %c0_385 = arith.constant 0 : index
    %c0_386 = arith.constant 0 : index
    %443 = vector.load %arg11[%c3_384, %c0_385, %c0_386] : memref<4x16x256xf32, #tpu.memory_space<vmem>>, vector<1x16x256xf32>
    %444 = vector.shape_cast %443 : vector<1x16x256xf32> to vector<16x256xf32>
    %445 = vector.shape_cast %442 : vector<16x256xf32> to vector<1x16x256xf32>
    tpu.vector_store %arg11[%c3_384, %c0_385, %c0_386], %445 {strides = array<i32>} : memref<4x16x256xf32, #tpu.memory_space<vmem>>, vector<1x16x256xf32>,
    return
  }
  func.func @transform_0(%arg0: i32) -> (i32, i32, i32) {
    %c0_i32 = arith.constant 0 : i32
    %c0_i32_0 = arith.constant 0 : i32
    %c0_i32_1 = arith.constant 0 : i32
    return %arg0, %c0_i32, %c0_i32_0 : i32, i32, i32
  }
  func.func @transform_1(%arg0: i32) -> (i32, i32) {
    %c0_i32 = arith.constant 0 : i32
    %c0_i32_0 = arith.constant 0 : i32
    %c0_i32_1 = arith.constant 0 : i32
    return %c0_i32, %c0_i32_0 : i32, i32
  }
  func.func @transform_2(%arg0: i32) -> (i32, i32) {
    %c0_i32 = arith.constant 0 : i32
    %c0_i32_0 = arith.constant 0 : i32
    %c0_i32_1 = arith.constant 0 : i32
    return %c0_i32, %c0_i32_0 : i32, i32
  }
  func.func @transform_3(%arg0: i32) -> (i32, i32) {
    %c0_i32 = arith.constant 0 : i32
    %c0_i32_0 = arith.constant 0 : i32
    %c0_i32_1 = arith.constant 0 : i32
    return %c0_i32, %c0_i32_0 : i32, i32
  }
  func.func @transform_4(%arg0: i32) -> (i32, i32) {
    %c0_i32 = arith.constant 0 : i32
    %c0_i32_0 = arith.constant 0 : i32
    %c0_i32_1 = arith.constant 0 : i32
    return %c0_i32, %c0_i32_0 : i32, i32
  }
  func.func @transform_5(%arg0: i32) -> (i32, i32) {
    %c0_i32 = arith.constant 0 : i32
    %c0_i32_0 = arith.constant 0 : i32
    %c0_i32_1 = arith.constant 0 : i32
    return %c0_i32, %c0_i32_0 : i32, i32
  }
  func.func @transform_6(%arg0: i32) -> (i32, i32) {
    %c0_i32 = arith.constant 0 : i32
    %c0_i32_0 = arith.constant 0 : i32
    %c0_i32_1 = arith.constant 0 : i32
    return %c0_i32, %c0_i32_0 : i32, i32
  }
  func.func @transform_7(%arg0: i32) -> (i32, i32) {
    %c0_i32 = arith.constant 0 : i32
    %c0_i32_0 = arith.constant 0 : i32
    %c0_i32_1 = arith.constant 0 : i32
    return %c0_i32, %c0_i32_0 : i32, i32
  }
  func.func @transform_8(%arg0: i32) -> (i32, i32) {
    %c0_i32 = arith.constant 0 : i32
    %c0_i32_0 = arith.constant 0 : i32
    %c0_i32_1 = arith.constant 0 : i32
    return %c0_i32, %c0_i32_0 : i32, i32
  }
  func.func @transform_9(%arg0: i32) -> (i32, i32) {
    %c0_i32 = arith.constant 0 : i32
    %c0_i32_0 = arith.constant 0 : i32
    %c0_i32_1 = arith.constant 0 : i32
    return %c0_i32, %c0_i32_0 : i32, i32
  }
  func.func @transform_10(%arg0: i32) -> (i32, i32, i32) {
    %c0_i32 = arith.constant 0 : i32
    %c0_i32_0 = arith.constant 0 : i32
    %c0_i32_1 = arith.constant 0 : i32
    return %arg0, %c0_i32, %c0_i32_0 : i32, i32, i32
  }
}

</mosaic_0001>

<llo_original>
// kernel: tpu_custom_call.1
$region0: #{tpu_custom_call.1}
  #allocation0 [shape = 'u32[]', space=smem, size = 0x4, offset = 0x4, fixed_abs, tag = 'smem constant byte address 0x4 - core index']
  #allocation1 [shape = 'u32[72,128]{1,0:T(1,128)}', space=vmem, size = 0x9000, scoped, tag = 'internal scratch']
  #allocation2 [shape = 'f32[72,1024]{1,0:T(8,128)}', space=vmem, size = 0x48000, scoped, tag = 'scratch operand']
  #allocation3 [shape = 'f32[144,1024]{1,0:T(8,128)}', space=vmem, size = 0x90000, scoped, tag = 'scratch operand']
  %s0 = inlined_call_operand.hbm [shape: f32[8,8,256], index: 0, kind: input, shape index: {}]
  %s1 = inlined_call_operand.vmem [shape: f32[9,256], index: 1, kind: input, shape index: {}]
  %s2 = inlined_call_operand.vmem [shape: f32[8,1], index: 2, kind: input, shape index: {}]
  %s3 = inlined_call_operand.vmem [shape: f32[8,1], index: 3, kind: input, shape index: {}]
  %s4 = inlined_call_operand.vmem [shape: f32[16,72], index: 4, kind: input, shape index: {}]
  %s5 = inlined_call_operand.vmem [shape: f32[16,1], index: 5, kind: input, shape index: {}]
  %s6 = inlined_call_operand.vmem [shape: f32[16,1], index: 6, kind: input, shape index: {}]
  %s7 = inlined_call_operand.hbm [shape: f32[16,144], index: 7, kind: input, shape index: {}]
  %s8 = inlined_call_operand.vmem [shape: f32[16,8], index: 8, kind: input, shape index: {}]
  %s9 = inlined_call_operand.vmem [shape: f32[16,1], index: 9, kind: input, shape index: {}]
  %s10 = inlined_call_operand.hbm [shape: f32[8,16,256], index: 10, kind: output, shape index: {}]
  %s11 = sld [smem:[#allocation0]]
  $region81: #{tpu_custom_call.1} parent=0
    _
  %s13 = ssub.s32 1, %s11
  %s14 = scalar_select 0, %s13, %s11
  $region1: #{tpu_custom_call.1} parent=0
    #allocation4 [shape = 'u8[65536]{0}', space=vmem, size = 0x10000, scoped, tag = 'input window, operand 0']
    #allocation5 [shape = 's32[2]{0}', space=sflag, size = 0x8, scoped, tag = 'scoped memory for tpu_custom_call.1']
    #allocation6 [shape = 's32[2]{0}', space=sflag, size = 0x8, scoped, tag = 'scoped memory for tpu_custom_call.1']
    #allocation7 [shape = 'u8[16384]{0}', space=vmem, size = 0x4000, scoped, tag = 'input window, operand 7, single buffered']
    #allocation8 [shape = 's32[1]{0}', space=sflag, size = 0x4, scoped, tag = 'scoped memory for tpu_custom_call.1']
    #allocation9 [shape = 'u8[131072]{0}', space=vmem, size = 0x20000, scoped, tag = 'output window, operand 0']
    %15 = vsyncpa [#allocation5], 0
    %s16 = scalar_lea.sflag [#allocation5], 1
    %17 = vsyncpa %s16, 0
    %18 = vsyncpa [#allocation8], 0
    %19 = vsyncpa [#allocation6], 0
    %s20 = scalar_lea.sflag [#allocation6], 1
    %21 = vsyncpa %s20, 0
    loop: start=0, step=1, limit=4
    $region2: #{tpu_custom_call.1} parent=1 // loop_pre_header
      _
    $region3: #{tpu_custom_call.1} parent=1 // loop_header
      %s23 = sphi 0, %s27
      %p24 = scmp.ge.s32.totalorder %s23, 4
      %s33 = sphi 0, %s35
      %s36 = sphi 0, %s33
      %s37 = sphi 0, %s36
      %s53 = sphi 0, %s37
      %s57 = sphi 0, %s57
      %s59 = sphi 0, %s57
      %s60 = sphi 0, %s59
      %s74 = sphi 0, %s60
      %s78 = sphi 0, %s78
      %s80 = sphi 0, %s78
      %s81 = sphi 0, %s80
      %s95 = sphi 0, %s81
      %s99 = sphi 0, %s99
      %s101 = sphi 0, %s99
      %s102 = sphi 0, %s101
      %s116 = sphi 0, %s102
      %s120 = sphi 0, %s120
      %s122 = sphi 0, %s120
      %s123 = sphi 0, %s122
      %s137 = sphi 0, %s123
      %s141 = sphi 0, %s141
      %s143 = sphi 0, %s141
      %s144 = sphi 0, %s143
      %s158 = sphi 0, %s144
      %s162 = sphi 0, %s162
      %s164 = sphi 0, %s162
      %s165 = sphi 0, %s164
      %s179 = sphi 0, %s165
      %s183 = sphi 0, %s183
      %s185 = sphi 0, %s183
      %s186 = sphi 0, %s185
      %s200 = sphi 0, %s186
      %s204 = sphi 0, %s204
      %s206 = sphi 0, %s204
      %s207 = sphi 0, %s206
      %s221 = sphi 0, %s207
      %s225 = sphi 0, %s225
      %s227 = sphi 0, %s225
      %s228 = sphi 0, %s227
      %s242 = sphi 0, %s228
      %s248 = sphi 0, %s250
      %s251 = sphi 0, %s248
      %s252 = sphi 0, %s251
      %s268 = sphi 0, %s252
    $region4: #{tpu_custom_call.1} parent=1 // loop_header_branch
      %26 = sbr.rel (%p24) target = $region8
    $region5: #{tpu_custom_call.1} parent=1 // loop_body
      %s28 = ssub.s32 %s23, 1
      %s29 = ssub.s32 %s23, 2
      %s30 = sadd.s32 %s23, 1
      %s31 = ssub.s32 %s23, %s30
      %p32 = scmp.eq.s32.totalorder %s31, 0
      %s34 = sadd.s32 %s33, 1
      %s35 = scalar_select %p32, %s33, %s34
      %p38 = pneg %p32
      %p39 = scmp.eq.s32.totalorder %s23, 1
      %p40 = por %p38, %p39
      %p41 = scmp.ne.s32.totalorder %s33, %s36
      %p42 = scmp.eq.s32.totalorder %s23, 0
      %p43 = por %p41, %p42
      %p44 = scmp.ne.s32.totalorder %s33, %s36
      %p45 = scmp.eq.s32.totalorder %s28, 1
      %p46 = por %p44, %p45
      %p47 = scmp.ne.s32.totalorder %s36, %s37
      %p48 = scmp.eq.s32.totalorder %s28, 0
      %p49 = por %p47, %p48
      %p50 = scmp.ne.s32.totalorder %s36, %s37
      %p51 = scmp.eq.s32.totalorder %s29, 1
      %p52 = por %p50, %p51
      %p54 = scmp.ne.s32.totalorder %s37, %s53
      %p55 = scmp.eq.s32.totalorder %s29, 0
      %p56 = por %p54, %p55
      %s58 = sadd.s32 %s57, 1
      %p61 = scmp.eq.s32.totalorder %s23, 1
      %p62 = scmp.ne.s32.totalorder %s57, %s59
      %p63 = scmp.eq.s32.totalorder %s23, 0
      %p64 = por %p62, %p63
      %p65 = scmp.ne.s32.totalorder %s57, %s59
      %p66 = scmp.eq.s32.totalorder %s28, 1
      %p67 = por %p65, %p66
      %p68 = scmp.ne.s32.totalorder %s59, %s60
      %p69 = scmp.eq.s32.totalorder %s28, 0
      %p70 = por %p68, %p69
      %p71 = scmp.ne.s32.totalorder %s59, %s60
      %p72 = scmp.eq.s32.totalorder %s29, 1
      %p73 = por %p71, %p72
      %p75 = scmp.ne.s32.totalorder %s60, %s74
      %p76 = scmp.eq.s32.totalorder %s29, 0
      %p77 = por %p75, %p76
      %s79 = sadd.s32 %s78, 1
      %p82 = scmp.eq.s32.totalorder %s23, 1
      %p83 = scmp.ne.s32.totalorder %s78, %s80
      %p84 = scmp.eq.s32.totalorder %s23, 0
      %p85 = por %p83, %p84
      %p86 = scmp.ne.s32.totalorder %s78, %s80
      %p87 = scmp.eq.s32.totalorder %s28, 1
      %p88 = por %p86, %p87
      %p89 = scmp.ne.s32.totalorder %s80, %s81
      %p90 = scmp.eq.s32.totalorder %s28, 0
      %p91 = por %p89, %p90
      %p92 = scmp.ne.s32.totalorder %s80, %s81
      %p93 = scmp.eq.s32.totalorder %s29, 1
      %p94 = por %p92, %p93
      %p96 = scmp.ne.s32.totalorder %s81, %s95
      %p97 = scmp.eq.s32.totalorder %s29, 0
      %p98 = por %p96, %p97
      %s100 = sadd.s32 %s99, 1
      %p103 = scmp.eq.s32.totalorder %s23, 1
      %p104 = scmp.ne.s32.totalorder %s99, %s101
      %p105 = scmp.eq.s32.totalorder %s23, 0
      %p106 = por %p104, %p105
      %p107 = scmp.ne.s32.totalorder %s99, %s101
      %p108 = scmp.eq.s32.totalorder %s28, 1
      %p109 = por %p107, %p108
      %p110 = scmp.ne.s32.totalorder %s101, %s102
      %p111 = scmp.eq.s32.totalorder %s28, 0
      %p112 = por %p110, %p111
      %p113 = scmp.ne.s32.totalorder %s101, %s102
      %p114 = scmp.eq.s32.totalorder %s29, 1
      %p115 = por %p113, %p114
      %p117 = scmp.ne.s32.totalorder %s102, %s116
      %p118 = scmp.eq.s32.totalorder %s29, 0
      %p119 = por %p117, %p118
      %s121 = sadd.s32 %s120, 1
      %p124 = scmp.eq.s32.totalorder %s23, 1
      %p125 = scmp.ne.s32.totalorder %s120, %s122
      %p126 = scmp.eq.s32.totalorder %s23, 0
      %p127 = por %p125, %p126
      %p128 = scmp.ne.s32.totalorder %s120, %s122
      %p129 = scmp.eq.s32.totalorder %s28, 1
      %p130 = por %p128, %p129
      %p131 = scmp.ne.s32.totalorder %s122, %s123
      %p132 = scmp.eq.s32.totalorder %s28, 0
      %p133 = por %p131, %p132
      %p134 = scmp.ne.s32.totalorder %s122, %s123
      %p135 = scmp.eq.s32.totalorder %s29, 1
      %p136 = por %p134, %p135
      %p138 = scmp.ne.s32.totalorder %s123, %s137
      %p139 = scmp.eq.s32.totalorder %s29, 0
      %p140 = por %p138, %p139
      %s142 = sadd.s32 %s141, 1
      %p145 = scmp.eq.s32.totalorder %s23, 1
      %p146 = scmp.ne.s32.totalorder %s141, %s143
      %p147 = scmp.eq.s32.totalorder %s23, 0
      %p148 = por %p146, %p147
      %p149 = scmp.ne.s32.totalorder %s141, %s143
      %p150 = scmp.eq.s32.totalorder %s28, 1
      %p151 = por %p149, %p150
      %p152 = scmp.ne.s32.totalorder %s143, %s144
      %p153 = scmp.eq.s32.totalorder %s28, 0
      %p154 = por %p152, %p153
      %p155 = scmp.ne.s32.totalorder %s143, %s144
      %p156 = scmp.eq.s32.totalorder %s29, 1
      %p157 = por %p155, %p156
      %p159 = scmp.ne.s32.totalorder %s144, %s158
      %p160 = scmp.eq.s32.totalorder %s29, 0
      %p161 = por %p159, %p160
      %s163 = sadd.s32 %s162, 1
      %p166 = scmp.eq.s32.totalorder %s23, 1
      %p167 = scmp.ne.s32.totalorder %s162, %s164
      %p168 = scmp.eq.s32.totalorder %s23, 0
      %p169 = por %p167, %p168
      %p170 = scmp.ne.s32.totalorder %s162, %s164
      %p171 = scmp.eq.s32.totalorder %s28, 1
      %p172 = por %p170, %p171
      %p173 = scmp.ne.s32.totalorder %s164, %s165
      %p174 = scmp.eq.s32.totalorder %s28, 0
      %p175 = por %p173, %p174
      %p176 = scmp.ne.s32.totalorder %s164, %s165
      %p177 = scmp.eq.s32.totalorder %s29, 1
      %p178 = por %p176, %p177
      %p180 = scmp.ne.s32.totalorder %s165, %s179
      %p181 = scmp.eq.s32.totalorder %s29, 0
      %p182 = por %p180, %p181
      %s184 = sadd.s32 %s183, 1
      %p187 = scmp.eq.s32.totalorder %s23, 1
      %p188 = scmp.ne.s32.totalorder %s183, %s185
      %p189 = scmp.eq.s32.totalorder %s23, 0
      %p190 = por %p188, %p189
      %p191 = scmp.ne.s32.totalorder %s183, %s185
      %p192 = scmp.eq.s32.totalorder %s28, 1
      %p193 = por %p191, %p192
      %p194 = scmp.ne.s32.totalorder %s185, %s186
      %p195 = scmp.eq.s32.totalorder %s28, 0
      %p196 = por %p194, %p195
      %p197 = scmp.ne.s32.totalorder %s185, %s186
      %p198 = scmp.eq.s32.totalorder %s29, 1
      %p199 = por %p197, %p198
      %p201 = scmp.ne.s32.totalorder %s186, %s200
      %p202 = scmp.eq.s32.totalorder %s29, 0
      %p203 = por %p201, %p202
      %s205 = sadd.s32 %s204, 1
      %p208 = scmp.eq.s32.totalorder %s23, 1
      %p209 = scmp.ne.s32.totalorder %s204, %s206
      %p210 = scmp.eq.s32.totalorder %s23, 0
      %p211 = por %p209, %p210
      %p212 = scmp.ne.s32.totalorder %s204, %s206
      %p213 = scmp.eq.s32.totalorder %s28, 1
      %p214 = por %p212, %p213
      %p215 = scmp.ne.s32.totalorder %s206, %s207
      %p216 = scmp.eq.s32.totalorder %s28, 0
      %p217 = por %p215, %p216
      %p218 = scmp.ne.s32.totalorder %s206, %s207
      %p219 = scmp.eq.s32.totalorder %s29, 1
      %p220 = por %p218, %p219
      %p222 = scmp.ne.s32.totalorder %s207, %s221
      %p223 = scmp.eq.s32.totalorder %s29, 0
      %p224 = por %p222, %p223
      %s226 = sadd.s32 %s225, 1
      %p229 = scmp.eq.s32.totalorder %s23, 1
      %p230 = scmp.ne.s32.totalorder %s225, %s227
      %p231 = scmp.eq.s32.totalorder %s23, 0
      %p232 = por %p230, %p231
      %p233 = scmp.ne.s32.totalorder %s225, %s227
      %p234 = scmp.eq.s32.totalorder %s28, 1
      %p235 = por %p233, %p234
      %p236 = scmp.ne.s32.totalorder %s227, %s228
      %p237 = scmp.eq.s32.totalorder %s28, 0
      %p238 = por %p236, %p237
      %p239 = scmp.ne.s32.totalorder %s227, %s228
      %p240 = scmp.eq.s32.totalorder %s29, 1
      %p241 = por %p239, %p240
      %p243 = scmp.ne.s32.totalorder %s228, %s242
      %p244 = scmp.eq.s32.totalorder %s29, 0
      %p245 = por %p243, %p244
      %s246 = ssub.s32 %s23, %s30
      %p247 = scmp.eq.s32.totalorder %s246, 0
      %s249 = sadd.s32 %s248, 1
      %s250 = scalar_select %p247, %s248, %s249
      %p253 = pneg %p247
      %p254 = scmp.eq.s32.totalorder %s23, 1
      %p255 = por %p253, %p254
      %p256 = scmp.ne.s32.totalorder %s248, %s251
      %p257 = scmp.eq.s32.totalorder %s23, 0
      %p258 = por %p256, %p257
      %p259 = scmp.ne.s32.totalorder %s248, %s251
      %p260 = scmp.eq.s32.totalorder %s28, 1
      %p261 = por %p259, %p260
      %p262 = scmp.ne.s32.totalorder %s251, %s252
      %p263 = scmp.eq.s32.totalorder %s28, 0
      %p264 = por %p262, %p263
      %p265 = scmp.ne.s32.totalorder %s251, %s252
      %p266 = scmp.eq.s32.totalorder %s29, 1
      %p267 = por %p265, %p266
      %p269 = scmp.ne.s32.totalorder %s252, %s268
      %p270 = scmp.eq.s32.totalorder %s29, 0
      %p271 = por %p269, %p270
      %p272 = scmp.le.s32.totalorder 1, %s23
      %p273 = scmp.lt.s32.totalorder %s23, 3
      %p274 = pnand %p272, %p273
      %p275 = pneg %p274
      // Predicated region
      $region9: #{tpu_custom_call.1} parent=5 // pred_check
        _
      $region10: #{tpu_custom_call.1} parent=5 // pred_check_branch
        %277 = sbr.rel (%p274) target = $region12
      $region11: #{tpu_custom_call.1} parent=5 // pred_region
        %s278 = ssub.s32 %s23, 1
        // Predicated region
        $region13: #{tpu_custom_call.1} parent=11 // pred_check
          %p279 = pneg %p70
        $region14: #{tpu_custom_call.1} parent=11 // pred_check_branch
          %281 = sbr.rel (%p279) target = $region16
        $region15: #{tpu_custom_call.1} parent=11 // pred_region
          _
        $region16: #{tpu_custom_call.1} parent=11 // pred_fallthru
          _
        // Predicated region
        $region17: #{tpu_custom_call.1} parent=11 // pred_check
          %p282 = pneg %p91
        $region18: #{tpu_custom_call.1} parent=11 // pred_check_branch
          %284 = sbr.rel (%p282) target = $region20
        $region19: #{tpu_custom_call.1} parent=11 // pred_region
          _
        $region20: #{tpu_custom_call.1} parent=11 // pred_fallthru
          _
        // Predicated region
        $region21: #{tpu_custom_call.1} parent=11 // pred_check
          %p285 = pneg %p112
        $region22: #{tpu_custom_call.1} parent=11 // pred_check_branch
          %287 = sbr.rel (%p285) target = $region24
        $region23: #{tpu_custom_call.1} parent=11 // pred_region
          _
        $region24: #{tpu_custom_call.1} parent=11 // pred_fallthru
          _
        // Predicated region
        $region25: #{tpu_custom_call.1} parent=11 // pred_check
          %p288 = pneg %p133
        $region26: #{tpu_custom_call.1} parent=11 // pred_check_branch
          %290 = sbr.rel (%p288) target = $region28
        $region27: #{tpu_custom_call.1} parent=11 // pred_region
          _
        $region28: #{tpu_custom_call.1} parent=11 // pred_fallthru
          _
        // Predicated region
        $region29: #{tpu_custom_call.1} parent=11 // pred_check
          %p291 = pneg %p154
        $region30: #{tpu_custom_call.1} parent=11 // pred_check_branch
          %293 = sbr.rel (%p291) target = $region32
        $region31: #{tpu_custom_call.1} parent=11 // pred_region
          _
        $region32: #{tpu_custom_call.1} parent=11 // pred_fallthru
          _
        // Predicated region
        $region33: #{tpu_custom_call.1} parent=11 // pred_check
          %p294 = pneg %p175
        $region34: #{tpu_custom_call.1} parent=11 // pred_check_branch
          %296 = sbr.rel (%p294) target = $region36
        $region35: #{tpu_custom_call.1} parent=11 // pred_region
          _
        $region36: #{tpu_custom_call.1} parent=11 // pred_fallthru
          _
        // Predicated region
        $region37: #{tpu_custom_call.1} parent=11 // pred_check
          %p297 = pneg %p196
        $region38: #{tpu_custom_call.1} parent=11 // pred_check_branch
          %299 = sbr.rel (%p297) target = $region40
        $region39: #{tpu_custom_call.1} parent=11 // pred_region
          %301 = vsyncadd [#allocation8], 0
          %s302 = sshll.u32 %s7, 4
          %s303 = int_to_ptr.hbm [resolvable:$true] %s302
          %s304 = sshll.u32 [#allocation7], 4
          %s305 = int_to_ptr.vmem [resolvable:$true] %s304
          %310 = dma.hbm_to_vmem [thread:$0]  %s303, 512, %s305, [#allocation8], 256, 256, 16
        $region40: #{tpu_custom_call.1} parent=11 // pred_fallthru
          _
        // Predicated region
        $region41: #{tpu_custom_call.1} parent=11 // pred_check
          %p311 = pneg %p217
        $region42: #{tpu_custom_call.1} parent=11 // pred_check_branch
          %313 = sbr.rel (%p311) target = $region44
        $region43: #{tpu_custom_call.1} parent=11 // pred_region
          _
        $region44: #{tpu_custom_call.1} parent=11 // pred_fallthru
          _
        // Predicated region
        $region45: #{tpu_custom_call.1} parent=11 // pred_check
          %p314 = pneg %p238
        $region46: #{tpu_custom_call.1} parent=11 // pred_check_branch
          %316 = sbr.rel (%p314) target = $region48
        $region47: #{tpu_custom_call.1} parent=11 // pred_region
          _
        $region48: #{tpu_custom_call.1} parent=11 // pred_fallthru
          _
      $region12: #{tpu_custom_call.1} parent=5 // pred_fallthru
        _
      %p317 = scmp.lt.s32.totalorder %s23, 2
      // Predicated region
      $region49: #{tpu_custom_call.1} parent=5 // pred_check
        %p318 = pneg %p317
      $region50: #{tpu_custom_call.1} parent=5 // pred_check_branch
        %320 = sbr.rel (%p318) target = $region52
      $region51: #{tpu_custom_call.1} parent=5 // pred_region
        // Predicated region
        $region53: #{tpu_custom_call.1} parent=51 // pred_check
          %p321 = pneg %p43
        $region54: #{tpu_custom_call.1} parent=51 // pred_check_branch
          %323 = sbr.rel (%p321) target = $region56
        $region55: #{tpu_custom_call.1} parent=51 // pred_region
          %s324 = sand.u32 %s33, 1
          %s325 = scalar_lea.sflag [#allocation5], %s324
          %s326 = sand.u32 %s33, 1
          %s327 = smul.addr %s326, 64
          %s328 = scalar_lea.vmem [#allocation4], %s327
          %s329 = smul.u32 4, %s23
          %331 = vsyncadd %s325, 0
          %s332 = smul.addr %s329, 2
          %s333 = smul.addr %s332, 8
          %s334 = scalar_lea.hbm %s0, %s333
          %s335 = sshll.u32 %s334, 4
          %s336 = int_to_ptr.hbm [resolvable:$true] %s335
          %s337 = sshll.u32 %s328, 4
          %s338 = int_to_ptr.vmem [resolvable:$true] %s337
          %343 = dma.hbm_to_vmem [thread:$0]  %s336, 1024, %s338, %s325, 256, 256, 16
        $region56: #{tpu_custom_call.1} parent=51 // pred_fallthru
          _
      $region52: #{tpu_custom_call.1} parent=5 // pred_fallthru
        _
      %p344 = scmp.le.s32.totalorder 1, %s23
      %p345 = scmp.lt.s32.totalorder %s23, 3
      %p346 = pnand %p344, %p345
      %p347 = pneg %p346
      // Predicated region
      $region57: #{tpu_custom_call.1} parent=5 // pred_check
        _
      $region58: #{tpu_custom_call.1} parent=5 // pred_check_branch
        %349 = sbr.rel (%p346) target = $region60
      $region59: #{tpu_custom_call.1} parent=5 // pred_region
        %s350 = ssub.s32 %s23, 1
        %s351 = sand.u32 %s36, 1
        %s352 = scalar_lea.sflag [#allocation5], %s351
        %s353 = sand.u32 %s36, 1
        %s354 = smul.addr %s353, 64
        %s355 = scalar_lea.vmem [#allocation4], %s354
        // Predicated region
        $region61: #{tpu_custom_call.1} parent=59 // pred_check
          %p356 = pneg %p49
        $region62: #{tpu_custom_call.1} parent=59 // pred_check_branch
          %358 = sbr.rel (%p356) target = $region64
        $region63: #{tpu_custom_call.1} parent=59 // pred_region
          %360 = dma.done %s352, 1024
        $region64: #{tpu_custom_call.1} parent=59 // pred_fallthru
          _
        // Predicated region
        $region65: #{tpu_custom_call.1} parent=59 // pred_check
          %p361 = pneg %p196
        $region66: #{tpu_custom_call.1} parent=59 // pred_check_branch
          %363 = sbr.rel (%p361) target = $region68
        $region67: #{tpu_custom_call.1} parent=59 // pred_region
          %365 = dma.done [#allocation8], 512
        $region68: #{tpu_custom_call.1} parent=59 // pred_fallthru
          _
        %s366 = sand.u32 %s36, 1
        %s367 = scalar_lea.sflag [#allocation5], %s366
        %s368 = sand.u32 %s36, 1
        %s369 = smul.addr %s368, 64
        %s370 = scalar_lea.vmem [#allocation4], %s369
        %p371 = pneg %p49
        %p372 = pneg %p46
        %p373 = pneg %p70
        %p374 = pneg %p67
        %p375 = pneg %p91
        %p376 = pneg %p88
        %p377 = pneg %p112
        %p378 = pneg %p109
        %p379 = pneg %p133
        %p380 = pneg %p130
        %p381 = pneg %p154
        %p382 = pneg %p151
        %p383 = pneg %p175
        %p384 = pneg %p172
        %p385 = pneg %p196
        %p386 = pneg %p193
        %p387 = pneg %p217
        %p388 = pneg %p214
        %p389 = pneg %p238
        %p390 = pneg %p235
        %p391 = pneg %p264
        %p392 = pneg %p261
        %s393 = sand.u32 %s251, 1
        %s394 = scalar_lea.sflag [#allocation6], %s393
        %s395 = sand.u32 %s251, 1
        %s396 = smul.addr %s395, 128
        %s397 = scalar_lea.vmem [#allocation9], %s396
        %s398 = smul.u32 4, %s28
        %s399 = smul.u32 4, %s28
        %v400 = vld [vmem:[%s2] sm:$0xff]
        %v401 = vld [vmem:[%s3] sm:$0xff]
        %v402 = vld [vmem:[%s5] sm:$0xff]
        %v403 = vld [vmem:[%s5 + $0x8] sm:$0xff]
        %v404 = vld [vmem:[%s6] sm:$0xff]
        %v405 = vld [vmem:[%s6 + $0x8] sm:$0xff]
        %v406 = vld [vmem:[%s355] sm:$0xff]
        %v407 = vld [vmem:[%s355 + $0x8] sm:$0xff]
        %409 = vset.pattern.permute.xlu0 0
        %410 = vperm.xlu0 %409, %v400
        %v411 = vpop.permute.xlu0 %410
        %v413 = vmul.f32 %v406, %v411
        %v414 = vmul.f32 %v407, %v411
        %416 = vset.pattern.permute.xlu0 0
        %417 = vperm.xlu0 %416, %v401
        %v418 = vpop.permute.xlu0 %417
        %v420 = vadd.f32 %v413, %v418
        %v421 = vadd.f32 %v414, %v418
        %v422 = vmax.f32 %v420, 0.0
        %v423 = vmax.f32 %v421, 0.0
        %424 = vrot.lane.b32.xlu0 %v422, 17
        %v425 = vpop.permute.xlu0 %424
        %426 = vrot.lane.b32.xlu0 %v423, 17
        %v427 = vpop.permute.xlu0 %426
        %v428 = vlaneseq
        %v429 = vand.u32 %v428, 127
        %vm430 = vcmp.lt.s32.totalorder %v429, 17
        %v431 = vsel %vm430, %v425, %v427
        %v432 = vsel %vm430, %v427, %v425
        %v433 = vld [vmem:[%s1] ss:$8 sm:$0x3]
        %v435 = vperm.slane %v433, 0
        %v436 = vperm.slane %v433, 1
        %v439 = vmul.f32 %v432, %v435
        %v440 = vmul.f32 %v431, %v436
        %441 = vst [vmem:[#allocation2] sm:$0xff] %v439
        %442 = vst [vmem:[#allocation2 + $0x8] sm:$0xff] %v440
        %443 = vrot.lane.b32.xlu0 %v422, 16
        %v444 = vpop.permute.xlu0 %443
        %445 = vrot.lane.b32.xlu0 %v423, 16
        %v446 = vpop.permute.xlu0 %445
        %vm447 = vcmp.lt.s32.totalorder %v429, 16
        %v448 = vsel %vm447, %v444, %v446
        %v449 = vsel %vm447, %v446, %v444
        %s450 = scalar_lea.vmem %s1, 1
        %v451 = vld [vmem:[%s450] ss:$8 sm:$0x3]
        %v453 = vperm.slane %v451, 0
        %v454 = vperm.slane %v451, 1
        %v457 = vmul.f32 %v449, %v453
        %v458 = vmul.f32 %v448, %v454
        %459 = vst [vmem:[#allocation2 + $0x40] sm:$0xff] %v457
        %460 = vst [vmem:[#allocation2 + $0x48] sm:$0xff] %v458
        %461 = vrot.lane.b32.xlu0 %v422, 15
        %v462 = vpop.permute.xlu0 %461
        %463 = vrot.lane.b32.xlu0 %v423, 15
        %v464 = vpop.permute.xlu0 %463
        %vm465 = vcmp.lt.s32.totalorder %v429, 15
        %v466 = vsel %vm465, %v462, %v464
        %v467 = vsel %vm465, %v464, %v462
        %s468 = scalar_lea.vmem %s1, 2
        %v469 = vld [vmem:[%s468] ss:$8 sm:$0x3]
        %v471 = vperm.slane %v469, 0
        %v472 = vperm.slane %v469, 1
        %v475 = vmul.f32 %v467, %v471
        %v476 = vmul.f32 %v466, %v472
        %477 = vst [vmem:[#allocation2 + $0x80] sm:$0xff] %v475
        %478 = vst [vmem:[#allocation2 + $0x88] sm:$0xff] %v476
        %479 = vrot.lane.b32.xlu0 %v422, 1
        %v480 = vpop.permute.xlu0 %479
        %481 = vrot.lane.b32.xlu0 %v423, 1
        %v482 = vpop.permute.xlu0 %481
        %vm483 = vcmp.lt.s32.totalorder %v429, 1
        %v484 = vsel %vm483, %v480, %v482
        %v485 = vsel %vm483, %v482, %v480
        %s486 = scalar_lea.vmem %s1, 3
        %v487 = vld [vmem:[%s486] ss:$8 sm:$0x3]
        %v489 = vperm.slane %v487, 0
        %v490 = vperm.slane %v487, 1
        %v493 = vmul.f32 %v485, %v489
        %v494 = vmul.f32 %v484, %v490
        %495 = vst [vmem:[#allocation2 + $0xc0] sm:$0xff] %v493
        %496 = vst [vmem:[#allocation2 + $0xc8] sm:$0xff] %v494
        %497 = vst [vmem:[#allocation2 + $0x100] sm:$0xff] %v422
        %498 = vst [vmem:[#allocation2 + $0x108] sm:$0xff] %v423
        %499 = vrot.lane.b32.xlu0 %v422, 127
        %v500 = vpop.permute.xlu0 %499
        %501 = vrot.lane.b32.xlu0 %v423, 127
        %v502 = vpop.permute.xlu0 %501
        %vm503 = vcmp.lt.s32.totalorder %v429, 127
        %v504 = vsel %vm503, %v500, %v502
        %v505 = vsel %vm503, %v502, %v500
        %s506 = scalar_lea.vmem %s1, 5
        %v507 = vld [vmem:[%s506] ss:$8 sm:$0x3]
        %v509 = vperm.slane %v507, 0
        %v510 = vperm.slane %v507, 1
        %v513 = vmul.f32 %v504, %v509
        %v514 = vmul.f32 %v505, %v510
        %515 = vst [vmem:[#allocation2 + $0x140] sm:$0xff] %v513
        %516 = vst [vmem:[#allocation2 + $0x148] sm:$0xff] %v514
        %517 = vrot.lane.b32.xlu0 %v422, 113
        %v518 = vpop.permute.xlu0 %517
        %519 = vrot.lane.b32.xlu0 %v423, 113
        %v520 = vpop.permute.xlu0 %519
        %vm521 = vcmp.lt.s32.totalorder %v429, 113
        %v522 = vsel %vm521, %v518, %v520
        %v523 = vsel %vm521, %v520, %v518
        %s524 = scalar_lea.vmem %s1, 6
        %v525 = vld [vmem:[%s524] ss:$8 sm:$0x3]
        %v527 = vperm.slane %v525, 0
        %v528 = vperm.slane %v525, 1
        %v531 = vmul.f32 %v522, %v527
        %v532 = vmul.f32 %v523, %v528
        %533 = vst [vmem:[#allocation2 + $0x180] sm:$0xff] %v531
        %534 = vst [vmem:[#allocation2 + $0x188] sm:$0xff] %v532
        %535 = vrot.lane.b32.xlu0 %v422, 112
        %v536 = vpop.permute.xlu0 %535
        %537 = vrot.lane.b32.xlu0 %v423, 112
        %v538 = vpop.permute.xlu0 %537
        %vm539 = vcmp.lt.s32.totalorder %v429, 112
        %v540 = vsel %vm539, %v536, %v538
        %v541 = vsel %vm539, %v538, %v536
        %s542 = scalar_lea.vmem %s1, 7
        %v543 = vld [vmem:[%s542] ss:$8 sm:$0x3]
        %v545 = vperm.slane %v543, 0
        %v546 = vperm.slane %v543, 1
        %v549 = vmul.f32 %v540, %v545
        %v550 = vmul.f32 %v541, %v546
        %551 = vst [vmem:[#allocation2 + $0x1c0] sm:$0xff] %v549
        %552 = vst [vmem:[#allocation2 + $0x1c8] sm:$0xff] %v550
        %553 = vrot.lane.b32.xlu0 %v422, 111
        %v554 = vpop.permute.xlu0 %553
        %555 = vrot.lane.b32.xlu0 %v423, 111
        %v556 = vpop.permute.xlu0 %555
        %vm557 = vcmp.lt.s32.totalorder %v429, 111
        %v558 = vsel %vm557, %v554, %v556
        %v559 = vsel %vm557, %v556, %v554
        %s560 = scalar_lea.vmem %s1, 16
        %v561 = vld [vmem:[%s560] ss:$8 sm:$0x3]
        %v563 = vperm.slane %v561, 0
        %v564 = vperm.slane %v561, 1
        %v567 = vmul.f32 %v558, %v563
        %v568 = vmul.f32 %v559, %v564
        %569 = vst [vmem:[#allocation2 + $0x200] sm:$0xff] %v567
        %570 = vst [vmem:[#allocation2 + $0x208] sm:$0xff] %v568
        %s571 = scalar_lea.vmem %s355, 16 [#allocation4]
        %v572 = vld [vmem:[%s571] sm:$0xff]
        %v573 = vld [vmem:[%s571 + $0x8] sm:$0xff]
        %v574 = vmul.f32 %v572, %v411
        %v575 = vmul.f32 %v573, %v411
        %v576 = vadd.f32 %v574, %v418
        %v577 = vadd.f32 %v575, %v418
        %v578 = vmax.f32 %v576, 0.0
        %v579 = vmax.f32 %v577, 0.0
        %580 = vrot.lane.b32.xlu0 %v578, 17
        %v581 = vpop.permute.xlu0 %580
        %582 = vrot.lane.b32.xlu0 %v579, 17
        %v583 = vpop.permute.xlu0 %582
        %v584 = vsel %vm430, %v581, %v583
        %v585 = vsel %vm430, %v583, %v581
        %v586 = vld [vmem:[%s1] ss:$8 sm:$0x3]
        %v588 = vperm.slane %v586, 0
        %v589 = vperm.slane %v586, 1
        %v592 = vmul.f32 %v585, %v588
        %v593 = vmul.f32 %v584, %v589
        %594 = vst [vmem:[#allocation2 + $0x10] sm:$0xff] %v592
        %595 = vst [vmem:[#allocation2 + $0x18] sm:$0xff] %v593
        %596 = vrot.lane.b32.xlu0 %v578, 16
        %v597 = vpop.permute.xlu0 %596
        %598 = vrot.lane.b32.xlu0 %v579, 16
        %v599 = vpop.permute.xlu0 %598
        %v600 = vsel %vm447, %v597, %v599
        %v601 = vsel %vm447, %v599, %v597
        %v602 = vld [vmem:[%s450] ss:$8 sm:$0x3]
        %v604 = vperm.slane %v602, 0
        %v605 = vperm.slane %v602, 1
        %v608 = vmul.f32 %v601, %v604
        %v609 = vmul.f32 %v600, %v605
        %610 = vst [vmem:[#allocation2 + $0x50] sm:$0xff] %v608
        %611 = vst [vmem:[#allocation2 + $0x58] sm:$0xff] %v609
        %612 = vrot.lane.b32.xlu0 %v578, 15
        %v613 = vpop.permute.xlu0 %612
        %614 = vrot.lane.b32.xlu0 %v579, 15
        %v615 = vpop.permute.xlu0 %614
        %v616 = vsel %vm465, %v613, %v615
        %v617 = vsel %vm465, %v615, %v613
        %v618 = vld [vmem:[%s468] ss:$8 sm:$0x3]
        %v620 = vperm.slane %v618, 0
        %v621 = vperm.slane %v618, 1
        %v624 = vmul.f32 %v617, %v620
        %v625 = vmul.f32 %v616, %v621
        %626 = vst [vmem:[#allocation2 + $0x90] sm:$0xff] %v624
        %627 = vst [vmem:[#allocation2 + $0x98] sm:$0xff] %v625
        %628 = vrot.lane.b32.xlu0 %v578, 1
        %v629 = vpop.permute.xlu0 %628
        %630 = vrot.lane.b32.xlu0 %v579, 1
        %v631 = vpop.permute.xlu0 %630
        %v632 = vsel %vm483, %v629, %v631
        %v633 = vsel %vm483, %v631, %v629
        %v634 = vld [vmem:[%s486] ss:$8 sm:$0x3]
        %v636 = vperm.slane %v634, 0
        %v637 = vperm.slane %v634, 1
        %v640 = vmul.f32 %v633, %v636
        %v641 = vmul.f32 %v632, %v637
        %642 = vst [vmem:[#allocation2 + $0xd0] sm:$0xff] %v640
        %643 = vst [vmem:[#allocation2 + $0xd8] sm:$0xff] %v641
        %644 = vst [vmem:[#allocation2 + $0x110] sm:$0xff] %v578
        %645 = vst [vmem:[#allocation2 + $0x118] sm:$0xff] %v579
        %646 = vrot.lane.b32.xlu0 %v578, 127
        %v647 = vpop.permute.xlu0 %646
        %648 = vrot.lane.b32.xlu0 %v579, 127
        %v649 = vpop.permute.xlu0 %648
        %v650 = vsel %vm503, %v647, %v649
        %v651 = vsel %vm503, %v649, %v647
        %v652 = vld [vmem:[%s506] ss:$8 sm:$0x3]
        %v654 = vperm.slane %v652, 0
        %v655 = vperm.slane %v652, 1
        %v658 = vmul.f32 %v650, %v654
        %v659 = vmul.f32 %v651, %v655
        %660 = vst [vmem:[#allocation2 + $0x150] sm:$0xff] %v658
        %661 = vst [vmem:[#allocation2 + $0x158] sm:$0xff] %v659
        %662 = vrot.lane.b32.xlu0 %v578, 113
        %v663 = vpop.permute.xlu0 %662
        %664 = vrot.lane.b32.xlu0 %v579, 113
        %v665 = vpop.permute.xlu0 %664
        %v666 = vsel %vm521, %v663, %v665
        %v667 = vsel %vm521, %v665, %v663
        %v668 = vld [vmem:[%s524] ss:$8 sm:$0x3]
        %v670 = vperm.slane %v668, 0
        %v671 = vperm.slane %v668, 1
        %v674 = vmul.f32 %v666, %v670
        %v675 = vmul.f32 %v667, %v671
        %676 = vst [vmem:[#allocation2 + $0x190] sm:$0xff] %v674
        %677 = vst [vmem:[#allocation2 + $0x198] sm:$0xff] %v675
        %678 = vrot.lane.b32.xlu0 %v578, 112
        %v679 = vpop.permute.xlu0 %678
        %680 = vrot.lane.b32.xlu0 %v579, 112
        %v681 = vpop.permute.xlu0 %680
        %v682 = vsel %vm539, %v679, %v681
        %v683 = vsel %vm539, %v681, %v679
        %v684 = vld [vmem:[%s542] ss:$8 sm:$0x3]
        %v686 = vperm.slane %v684, 0
        %v687 = vperm.slane %v684, 1
        %v690 = vmul.f32 %v682, %v686
        %v691 = vmul.f32 %v683, %v687
        %692 = vst [vmem:[#allocation2 + $0x1d0] sm:$0xff] %v690
        %693 = vst [vmem:[#allocation2 + $0x1d8] sm:$0xff] %v691
        %694 = vrot.lane.b32.xlu0 %v578, 111
        %v695 = vpop.permute.xlu0 %694
        %696 = vrot.lane.b32.xlu0 %v579, 111
        %v697 = vpop.permute.xlu0 %696
        %v698 = vsel %vm557, %v695, %v697
        %v699 = vsel %vm557, %v697, %v695
        %v700 = vld [vmem:[%s560] ss:$8 sm:$0x3]
        %v702 = vperm.slane %v700, 0
        %v703 = vperm.slane %v700, 1
        %v706 = vmul.f32 %v698, %v702
        %v707 = vmul.f32 %v699, %v703
        %708 = vst [vmem:[#allocation2 + $0x210] sm:$0xff] %v706
        %709 = vst [vmem:[#allocation2 + $0x218] sm:$0xff] %v707
        %s710 = scalar_lea.vmem %s355, 32 [#allocation4]
        %v711 = vld [vmem:[%s710] sm:$0xff]
        %v712 = vld [vmem:[%s710 + $0x8] sm:$0xff]
        %v713 = vmul.f32 %v711, %v411
        %v714 = vmul.f32 %v712, %v411
        %v715 = vadd.f32 %v713, %v418
        %v716 = vadd.f32 %v714, %v418
        %v717 = vmax.f32 %v715, 0.0
        %v718 = vmax.f32 %v716, 0.0
        %719 = vrot.lane.b32.xlu0 %v717, 17
        %v720 = vpop.permute.xlu0 %719
        %721 = vrot.lane.b32.xlu0 %v718, 17
        %v722 = vpop.permute.xlu0 %721
        %v723 = vsel %vm430, %v720, %v722
        %v724 = vsel %vm430, %v722, %v720
        %v725 = vld [vmem:[%s1] ss:$8 sm:$0x3]
        %v727 = vperm.slane %v725, 0
        %v728 = vperm.slane %v725, 1
        %v731 = vmul.f32 %v724, %v727
        %v732 = vmul.f32 %v723, %v728
        %733 = vst [vmem:[#allocation2 + $0x20] sm:$0xff] %v731
        %734 = vst [vmem:[#allocation2 + $0x28] sm:$0xff] %v732
        %735 = vrot.lane.b32.xlu0 %v717, 16
        %v736 = vpop.permute.xlu0 %735
        %737 = vrot.lane.b32.xlu0 %v718, 16
        %v738 = vpop.permute.xlu0 %737
        %v739 = vsel %vm447, %v736, %v738
        %v740 = vsel %vm447, %v738, %v736
        %v741 = vld [vmem:[%s450] ss:$8 sm:$0x3]
        %v743 = vperm.slane %v741, 0
        %v744 = vperm.slane %v741, 1
        %v747 = vmul.f32 %v740, %v743
        %v748 = vmul.f32 %v739, %v744
        %749 = vst [vmem:[#allocation2 + $0x60] sm:$0xff] %v747
        %750 = vst [vmem:[#allocation2 + $0x68] sm:$0xff] %v748
        %751 = vrot.lane.b32.xlu0 %v717, 15
        %v752 = vpop.permute.xlu0 %751
        %753 = vrot.lane.b32.xlu0 %v718, 15
        %v754 = vpop.permute.xlu0 %753
        %v755 = vsel %vm465, %v752, %v754
        %v756 = vsel %vm465, %v754, %v752
        %v757 = vld [vmem:[%s468] ss:$8 sm:$0x3]
        %v759 = vperm.slane %v757, 0
        %v760 = vperm.slane %v757, 1
        %v763 = vmul.f32 %v756, %v759
        %v764 = vmul.f32 %v755, %v760
        %765 = vst [vmem:[#allocation2 + $0xa0] sm:$0xff] %v763
        %766 = vst [vmem:[#allocation2 + $0xa8] sm:$0xff] %v764
        %767 = vrot.lane.b32.xlu0 %v717, 1
        %v768 = vpop.permute.xlu0 %767
        %769 = vrot.lane.b32.xlu0 %v718, 1
        %v770 = vpop.permute.xlu0 %769
        %v771 = vsel %vm483, %v768, %v770
        %v772 = vsel %vm483, %v770, %v768
        %v773 = vld [vmem:[%s486] ss:$8 sm:$0x3]
        %v775 = vperm.slane %v773, 0
        %v776 = vperm.slane %v773, 1
        %v779 = vmul.f32 %v772, %v775
        %v780 = vmul.f32 %v771, %v776
        %781 = vst [vmem:[#allocation2 + $0xe0] sm:$0xff] %v779
        %782 = vst [vmem:[#allocation2 + $0xe8] sm:$0xff] %v780
        %783 = vst [vmem:[#allocation2 + $0x120] sm:$0xff] %v717
        %784 = vst [vmem:[#allocation2 + $0x128] sm:$0xff] %v718
        %785 = vrot.lane.b32.xlu0 %v717, 127
        %v786 = vpop.permute.xlu0 %785
        %787 = vrot.lane.b32.xlu0 %v718, 127
        %v788 = vpop.permute.xlu0 %787
        %v789 = vsel %vm503, %v786, %v788
        %v790 = vsel %vm503, %v788, %v786
        %v791 = vld [vmem:[%s506] ss:$8 sm:$0x3]
        %v793 = vperm.slane %v791, 0
        %v794 = vperm.slane %v791, 1
        %v797 = vmul.f32 %v789, %v793
        %v798 = vmul.f32 %v790, %v794
        %799 = vst [vmem:[#allocation2 + $0x160] sm:$0xff] %v797
        %800 = vst [vmem:[#allocation2 + $0x168] sm:$0xff] %v798
        %801 = vrot.lane.b32.xlu0 %v717, 113
        %v802 = vpop.permute.xlu0 %801
        %803 = vrot.lane.b32.xlu0 %v718, 113
        %v804 = vpop.permute.xlu0 %803
        %v805 = vsel %vm521, %v802, %v804
        %v806 = vsel %vm521, %v804, %v802
        %v807 = vld [vmem:[%s524] ss:$8 sm:$0x3]
        %v809 = vperm.slane %v807, 0
        %v810 = vperm.slane %v807, 1
        %v813 = vmul.f32 %v805, %v809
        %v814 = vmul.f32 %v806, %v810
        %815 = vst [vmem:[#allocation2 + $0x1a0] sm:$0xff] %v813
        %816 = vst [vmem:[#allocation2 + $0x1a8] sm:$0xff] %v814
        %817 = vrot.lane.b32.xlu0 %v717, 112
        %v818 = vpop.permute.xlu0 %817
        %819 = vrot.lane.b32.xlu0 %v718, 112
        %v820 = vpop.permute.xlu0 %819
        %v821 = vsel %vm539, %v818, %v820
        %v822 = vsel %vm539, %v820, %v818
        %v823 = vld [vmem:[%s542] ss:$8 sm:$0x3]
        %v825 = vperm.slane %v823, 0
        %v826 = vperm.slane %v823, 1
        %v829 = vmul.f32 %v821, %v825
        %v830 = vmul.f32 %v822, %v826
        %831 = vst [vmem:[#allocation2 + $0x1e0] sm:$0xff] %v829
        %832 = vst [vmem:[#allocation2 + $0x1e8] sm:$0xff] %v830
        %833 = vrot.lane.b32.xlu0 %v717, 111
        %v834 = vpop.permute.xlu0 %833
        %835 = vrot.lane.b32.xlu0 %v718, 111
        %v836 = vpop.permute.xlu0 %835
        %v837 = vsel %vm557, %v834, %v836
        %v838 = vsel %vm557, %v836, %v834
        %v839 = vld [vmem:[%s560] ss:$8 sm:$0x3]
        %v841 = vperm.slane %v839, 0
        %v842 = vperm.slane %v839, 1
        %v845 = vmul.f32 %v837, %v841
        %v846 = vmul.f32 %v838, %v842
        %847 = vst [vmem:[#allocation2 + $0x220] sm:$0xff] %v845
        %848 = vst [vmem:[#allocation2 + $0x228] sm:$0xff] %v846
        %s849 = scalar_lea.vmem %s355, 48 [#allocation4]
        %v850 = vld [vmem:[%s849] sm:$0xff]
        %v851 = vld [vmem:[%s849 + $0x8] sm:$0xff]
        %v852 = vmul.f32 %v850, %v411
        %v853 = vmul.f32 %v851, %v411
        %v854 = vadd.f32 %v852, %v418
        %v855 = vadd.f32 %v853, %v418
        %v856 = vmax.f32 %v854, 0.0
        %v857 = vmax.f32 %v855, 0.0
        %858 = vrot.lane.b32.xlu0 %v856, 17
        %v859 = vpop.permute.xlu0 %858
        %860 = vrot.lane.b32.xlu0 %v857, 17
        %v861 = vpop.permute.xlu0 %860
        %v862 = vsel %vm430, %v859, %v861
        %v863 = vsel %vm430, %v861, %v859
        %v864 = vld [vmem:[%s1] ss:$8 sm:$0x3]
        %v866 = vperm.slane %v864, 0
        %v867 = vperm.slane %v864, 1
        %v870 = vmul.f32 %v863, %v866
        %v871 = vmul.f32 %v862, %v867
        %872 = vst [vmem:[#allocation2 + $0x30] sm:$0xff] %v870
        %873 = vst [vmem:[#allocation2 + $0x38] sm:$0xff] %v871
        %874 = vrot.lane.b32.xlu0 %v856, 16
        %v875 = vpop.permute.xlu0 %874
        %876 = vrot.lane.b32.xlu0 %v857, 16
        %v877 = vpop.permute.xlu0 %876
        %v878 = vsel %vm447, %v875, %v877
        %v879 = vsel %vm447, %v877, %v875
        %v880 = vld [vmem:[%s450] ss:$8 sm:$0x3]
        %v882 = vperm.slane %v880, 0
        %v883 = vperm.slane %v880, 1
        %v886 = vmul.f32 %v879, %v882
        %v887 = vmul.f32 %v878, %v883
        %888 = vst [vmem:[#allocation2 + $0x70] sm:$0xff] %v886
        %889 = vst [vmem:[#allocation2 + $0x78] sm:$0xff] %v887
        %890 = vrot.lane.b32.xlu0 %v856, 15
        %v891 = vpop.permute.xlu0 %890
        %892 = vrot.lane.b32.xlu0 %v857, 15
        %v893 = vpop.permute.xlu0 %892
        %v894 = vsel %vm465, %v891, %v893
        %v895 = vsel %vm465, %v893, %v891
        %v896 = vld [vmem:[%s468] ss:$8 sm:$0x3]
        %v898 = vperm.slane %v896, 0
        %v899 = vperm.slane %v896, 1
        %v902 = vmul.f32 %v895, %v898
        %v903 = vmul.f32 %v894, %v899
        %904 = vst [vmem:[#allocation2 + $0xb0] sm:$0xff] %v902
        %905 = vst [vmem:[#allocation2 + $0xb8] sm:$0xff] %v903
        %906 = vrot.lane.b32.xlu0 %v856, 1
        %v907 = vpop.permute.xlu0 %906
        %908 = vrot.lane.b32.xlu0 %v857, 1
        %v909 = vpop.permute.xlu0 %908
        %v910 = vsel %vm483, %v907, %v909
        %v911 = vsel %vm483, %v909, %v907
        %v912 = vld [vmem:[%s486] ss:$8 sm:$0x3]
        %v914 = vperm.slane %v912, 0
        %v915 = vperm.slane %v912, 1
        %v918 = vmul.f32 %v911, %v914
        %v919 = vmul.f32 %v910, %v915
        %920 = vst [vmem:[#allocation2 + $0xf0] sm:$0xff] %v918
        %921 = vst [vmem:[#allocation2 + $0xf8] sm:$0xff] %v919
        %922 = vst [vmem:[#allocation2 + $0x130] sm:$0xff] %v856
        %923 = vst [vmem:[#allocation2 + $0x138] sm:$0xff] %v857
        %924 = vrot.lane.b32.xlu0 %v856, 127
        %v925 = vpop.permute.xlu0 %924
        %926 = vrot.lane.b32.xlu0 %v857, 127
        %v927 = vpop.permute.xlu0 %926
        %v928 = vsel %vm503, %v925, %v927
        %v929 = vsel %vm503, %v927, %v925
        %v930 = vld [vmem:[%s506] ss:$8 sm:$0x3]
        %v932 = vperm.slane %v930, 0
        %v933 = vperm.slane %v930, 1
        %v936 = vmul.f32 %v928, %v932
        %v937 = vmul.f32 %v929, %v933
        %938 = vst [vmem:[#allocation2 + $0x170] sm:$0xff] %v936
        %939 = vst [vmem:[#allocation2 + $0x178] sm:$0xff] %v937
        %940 = vrot.lane.b32.xlu0 %v856, 113
        %v941 = vpop.permute.xlu0 %940
        %942 = vrot.lane.b32.xlu0 %v857, 113
        %v943 = vpop.permute.xlu0 %942
        %v944 = vsel %vm521, %v941, %v943
        %v945 = vsel %vm521, %v943, %v941
        %v946 = vld [vmem:[%s524] ss:$8 sm:$0x3]
        %v948 = vperm.slane %v946, 0
        %v949 = vperm.slane %v946, 1
        %v952 = vmul.f32 %v944, %v948
        %v953 = vmul.f32 %v945, %v949
        %954 = vst [vmem:[#allocation2 + $0x1b0] sm:$0xff] %v952
        %955 = vst [vmem:[#allocation2 + $0x1b8] sm:$0xff] %v953
        %956 = vrot.lane.b32.xlu0 %v856, 112
        %v957 = vpop.permute.xlu0 %956
        %958 = vrot.lane.b32.xlu0 %v857, 112
        %v959 = vpop.permute.xlu0 %958
        %v960 = vsel %vm539, %v957, %v959
        %v961 = vsel %vm539, %v959, %v957
        %v962 = vld [vmem:[%s542] ss:$8 sm:$0x3]
        %v964 = vperm.slane %v962, 0
        %v965 = vperm.slane %v962, 1
        %v968 = vmul.f32 %v960, %v964
        %v969 = vmul.f32 %v961, %v965
        %970 = vst [vmem:[#allocation2 + $0x1f0] sm:$0xff] %v968
        %971 = vst [vmem:[#allocation2 + $0x1f8] sm:$0xff] %v969
        %972 = vrot.lane.b32.xlu0 %v856, 111
        %v973 = vpop.permute.xlu0 %972
        %974 = vrot.lane.b32.xlu0 %v857, 111
        %v975 = vpop.permute.xlu0 %974
        %v976 = vsel %vm557, %v973, %v975
        %v977 = vsel %vm557, %v975, %v973
        %v978 = vld [vmem:[%s560] ss:$8 sm:$0x3]
        %v980 = vperm.slane %v978, 0
        %v981 = vperm.slane %v978, 1
        %v984 = vmul.f32 %v976, %v980
        %v985 = vmul.f32 %v977, %v981
        %986 = vst [vmem:[#allocation2 + $0x230] sm:$0xff] %v984
        %987 = vst [vmem:[#allocation2 + $0x238] sm:$0xff] %v985
        %v988 = vld [vmem:[%s4] sm:$0xff]
        %v989 = vld [vmem:[%s4 + $0x8] sm:$0xff]
        %v990 = vld [vmem:[#allocation2] sm:$0xff]
        %v991 = vld [vmem:[#allocation2 + $0x8] sm:$0xff]
        %v992 = vld [vmem:[#allocation2 + $0x10] sm:$0xff]
        %v993 = vld [vmem:[#allocation2 + $0x18] sm:$0xff]
        %v994 = vld [vmem:[#allocation2 + $0x20] sm:$0xff]
        %v995 = vld [vmem:[#allocation2 + $0x28] sm:$0xff]
        %v996 = vld [vmem:[#allocation2 + $0x30] sm:$0xff]
        %v997 = vld [vmem:[#allocation2 + $0x38] sm:$0xff]
        %v998 = vld [vmem:[#allocation2 + $0x40] sm:$0xff]
        %v999 = vld [vmem:[#allocation2 + $0x48] sm:$0xff]
        %v1000 = vld [vmem:[#allocation2 + $0x50] sm:$0xff]
        %v1001 = vld [vmem:[#allocation2 + $0x58] sm:$0xff]
        %v1002 = vld [vmem:[#allocation2 + $0x60] sm:$0xff]
        %v1003 = vld [vmem:[#allocation2 + $0x68] sm:$0xff]
        %v1004 = vld [vmem:[#allocation2 + $0x70] sm:$0xff]
        %v1005 = vld [vmem:[#allocation2 + $0x78] sm:$0xff]
        %v1006 = vld [vmem:[#allocation2 + $0x80] sm:$0xff]
        %v1007 = vld [vmem:[#allocation2 + $0x88] sm:$0xff]
        %v1008 = vld [vmem:[#allocation2 + $0x90] sm:$0xff]
        %v1009 = vld [vmem:[#allocation2 + $0x98] sm:$0xff]
        %v1010 = vld [vmem:[#allocation2 + $0xa0] sm:$0xff]
        %v1011 = vld [vmem:[#allocation2 + $0xa8] sm:$0xff]
        %v1012 = vld [vmem:[#allocation2 + $0xb0] sm:$0xff]
        %v1013 = vld [vmem:[#allocation2 + $0xb8] sm:$0xff]
        %v1014 = vld [vmem:[#allocation2 + $0xc0] sm:$0xff]
        %v1015 = vld [vmem:[#allocation2 + $0xc8] sm:$0xff]
        %v1016 = vld [vmem:[#allocation2 + $0xd0] sm:$0xff]
        %v1017 = vld [vmem:[#allocation2 + $0xd8] sm:$0xff]
        %v1018 = vld [vmem:[#allocation2 + $0xe0] sm:$0xff]
        %v1019 = vld [vmem:[#allocation2 + $0xe8] sm:$0xff]
        %v1020 = vld [vmem:[#allocation2 + $0xf0] sm:$0xff]
        %v1021 = vld [vmem:[#allocation2 + $0xf8] sm:$0xff]
        %v1022 = vld [vmem:[#allocation2 + $0x100] sm:$0xff]
        %v1023 = vld [vmem:[#allocation2 + $0x108] sm:$0xff]
        %v1024 = vld [vmem:[#allocation2 + $0x110] sm:$0xff]
        %v1025 = vld [vmem:[#allocation2 + $0x118] sm:$0xff]
        %v1026 = vld [vmem:[#allocation2 + $0x120] sm:$0xff]
        %v1027 = vld [vmem:[#allocation2 + $0x128] sm:$0xff]
        %v1028 = vld [vmem:[#allocation2 + $0x130] sm:$0xff]
        %v1029 = vld [vmem:[#allocation2 + $0x138] sm:$0xff]
        %v1030 = vld [vmem:[#allocation2 + $0x140] sm:$0xff]
        %v1031 = vld [vmem:[#allocation2 + $0x148] sm:$0xff]
        %v1032 = vld [vmem:[#allocation2 + $0x150] sm:$0xff]
        %v1033 = vld [vmem:[#allocation2 + $0x158] sm:$0xff]
        %v1034 = vld [vmem:[#allocation2 + $0x160] sm:$0xff]
        %v1035 = vld [vmem:[#allocation2 + $0x168] sm:$0xff]
        %v1036 = vld [vmem:[#allocation2 + $0x170] sm:$0xff]
        %v1037 = vld [vmem:[#allocation2 + $0x178] sm:$0xff]
        %v1038 = vld [vmem:[#allocation2 + $0x180] sm:$0xff]
        %v1039 = vld [vmem:[#allocation2 + $0x188] sm:$0xff]
        %v1040 = vld [vmem:[#allocation2 + $0x190] sm:$0xff]
        %v1041 = vld [vmem:[#allocation2 + $0x198] sm:$0xff]
        %v1042 = vld [vmem:[#allocation2 + $0x1a0] sm:$0xff]
        %v1043 = vld [vmem:[#allocation2 + $0x1a8] sm:$0xff]
        %v1044 = vld [vmem:[#allocation2 + $0x1b0] sm:$0xff]
        %v1045 = vld [vmem:[#allocation2 + $0x1b8] sm:$0xff]
        %v1046 = vld [vmem:[#allocation2 + $0x1c0] sm:$0xff]
        %v1047 = vld [vmem:[#allocation2 + $0x1c8] sm:$0xff]
        %v1048 = vld [vmem:[#allocation2 + $0x1d0] sm:$0xff]
        %v1049 = vld [vmem:[#allocation2 + $0x1d8] sm:$0xff]
        %v1050 = vld [vmem:[#allocation2 + $0x1e0] sm:$0xff]
        %v1051 = vld [vmem:[#allocation2 + $0x1e8] sm:$0xff]
        %v1052 = vld [vmem:[#allocation2 + $0x1f0] sm:$0xff]
        %v1053 = vld [vmem:[#allocation2 + $0x1f8] sm:$0xff]
        %v1054 = vld [vmem:[#allocation2 + $0x200] sm:$0xff]
        %v1055 = vld [vmem:[#allocation2 + $0x208] sm:$0xff]
        %v1056 = vld [vmem:[#allocation2 + $0x210] sm:$0xff]
        %v1057 = vld [vmem:[#allocation2 + $0x218] sm:$0xff]
        %v1058 = vld [vmem:[#allocation2 + $0x220] sm:$0xff]
        %v1059 = vld [vmem:[#allocation2 + $0x228] sm:$0xff]
        %v1060 = vld [vmem:[#allocation2 + $0x230] sm:$0xff]
        %v1061 = vld [vmem:[#allocation2 + $0x238] sm:$0xff]
        %vm1062 = vcmask 588800
        %v1064 = vsel %vm1062, %v988, 0
        %v1067 = vsel %vm1062, %v989, 0
        %1069 = vmatpush.msra.mxu0 0.0
        %1070 = vmatpush.msra.mxu0 0.0
        %1071 = vmatpush.msra.mxu0 0.0
        %1072 = vmatpush.msra.mxu0 0.0
        %1073 = vmatpush.msra.mxu0 0.0
        %1074 = vmatpush.msra.mxu0 0.0
        %1075 = vmatpush.msra.mxu0 0.0
        %1076 = vmatpush.msra.mxu0 %v1054
        %1077 = vmatpush.msra.mxu0 %v1046
        %1078 = vmatpush.msra.mxu0 %v1038
        %1079 = vmatpush.msra.mxu0 %v1030
        %1080 = vmatpush.msra.mxu0 %v1022
        %1081 = vmatpush.msra.mxu0 %v1014
        %1082 = vmatpush.msra.mxu0 %v1006
        %1083 = vmatpush.msra.mxu0 %v998
        %1084 = vmatpush.msra.mxu0 %v990
        %1085 = vmatmul.f32.gmra.mxu0 %v1064
        %v1086 = vpop.f32.mrf.mxu0
        %v1087 = vadd.f32 0.0, %v1086
        %1088 = vmatmul.f32.gmra.mxu0 %v1067
        %v1089 = vpop.f32.mrf.mxu0
        %v1090 = vadd.f32 0.0, %v1089
        %1091 = vdwg.mxu0
        %1092 = vmatpush.msra.mxu0 0.0
        %1093 = vmatpush.msra.mxu0 0.0
        %1094 = vmatpush.msra.mxu0 0.0
        %1095 = vmatpush.msra.mxu0 0.0
        %1096 = vmatpush.msra.mxu0 0.0
        %1097 = vmatpush.msra.mxu0 0.0
        %1098 = vmatpush.msra.mxu0 0.0
        %1099 = vmatpush.msra.mxu0 %v1055
        %1100 = vmatpush.msra.mxu0 %v1047
        %1101 = vmatpush.msra.mxu0 %v1039
        %1102 = vmatpush.msra.mxu0 %v1031
        %1103 = vmatpush.msra.mxu0 %v1023
        %1104 = vmatpush.msra.mxu0 %v1015
        %1105 = vmatpush.msra.mxu0 %v1007
        %1106 = vmatpush.msra.mxu0 %v999
        %1107 = vmatpush.msra.mxu0 %v991
        %1108 = vmatmul.f32.gmra.mxu0 %v1064
        %v1109 = vpop.f32.mrf.mxu0
        %v1110 = vadd.f32 0.0, %v1109
        %1111 = vmatmul.f32.gmra.mxu0 %v1067
        %v1112 = vpop.f32.mrf.mxu0
        %v1113 = vadd.f32 0.0, %v1112
        %1114 = vdwg.mxu0
        %1115 = vmatpush.msra.mxu0 0.0
        %1116 = vmatpush.msra.mxu0 0.0
        %1117 = vmatpush.msra.mxu0 0.0
        %1118 = vmatpush.msra.mxu0 0.0
        %1119 = vmatpush.msra.mxu0 0.0
        %1120 = vmatpush.msra.mxu0 0.0
        %1121 = vmatpush.msra.mxu0 0.0
        %1122 = vmatpush.msra.mxu0 %v1056
        %1123 = vmatpush.msra.mxu0 %v1048
        %1124 = vmatpush.msra.mxu0 %v1040
        %1125 = vmatpush.msra.mxu0 %v1032
        %1126 = vmatpush.msra.mxu0 %v1024
        %1127 = vmatpush.msra.mxu0 %v1016
        %1128 = vmatpush.msra.mxu0 %v1008
        %1129 = vmatpush.msra.mxu0 %v1000
        %1130 = vmatpush.msra.mxu0 %v992
        %1131 = vmatmul.f32.gmra.mxu0 %v1064
        %v1132 = vpop.f32.mrf.mxu0
        %v1133 = vadd.f32 0.0, %v1132
        %1134 = vmatmul.f32.gmra.mxu0 %v1067
        %v1135 = vpop.f32.mrf.mxu0
        %v1136 = vadd.f32 0.0, %v1135
        %1137 = vdwg.mxu0
        %1138 = vmatpush.msra.mxu0 0.0
        %1139 = vmatpush.msra.mxu0 0.0
        %1140 = vmatpush.msra.mxu0 0.0
        %1141 = vmatpush.msra.mxu0 0.0
        %1142 = vmatpush.msra.mxu0 0.0
        %1143 = vmatpush.msra.mxu0 0.0
        %1144 = vmatpush.msra.mxu0 0.0
        %1145 = vmatpush.msra.mxu0 %v1057
        %1146 = vmatpush.msra.mxu0 %v1049
        %1147 = vmatpush.msra.mxu0 %v1041
        %1148 = vmatpush.msra.mxu0 %v1033
        %1149 = vmatpush.msra.mxu0 %v1025
        %1150 = vmatpush.msra.mxu0 %v1017
        %1151 = vmatpush.msra.mxu0 %v1009
        %1152 = vmatpush.msra.mxu0 %v1001
        %1153 = vmatpush.msra.mxu0 %v993
        %1154 = vmatmul.f32.gmra.mxu0 %v1064
        %v1155 = vpop.f32.mrf.mxu0
        %v1156 = vadd.f32 0.0, %v1155
        %1157 = vmatmul.f32.gmra.mxu0 %v1067
        %v1158 = vpop.f32.mrf.mxu0
        %v1159 = vadd.f32 0.0, %v1158
        %1160 = vdwg.mxu0
        %1161 = vmatpush.msra.mxu0 0.0
        %1162 = vmatpush.msra.mxu0 0.0
        %1163 = vmatpush.msra.mxu0 0.0
        %1164 = vmatpush.msra.mxu0 0.0
        %1165 = vmatpush.msra.mxu0 0.0
        %1166 = vmatpush.msra.mxu0 0.0
        %1167 = vmatpush.msra.mxu0 0.0
        %1168 = vmatpush.msra.mxu0 %v1058
        %1169 = vmatpush.msra.mxu0 %v1050
        %1170 = vmatpush.msra.mxu0 %v1042
        %1171 = vmatpush.msra.mxu0 %v1034
        %1172 = vmatpush.msra.mxu0 %v1026
        %1173 = vmatpush.msra.mxu0 %v1018
        %1174 = vmatpush.msra.mxu0 %v1010
        %1175 = vmatpush.msra.mxu0 %v1002
        %1176 = vmatpush.msra.mxu0 %v994
        %1177 = vmatmul.f32.gmra.mxu0 %v1064
        %v1178 = vpop.f32.mrf.mxu0
        %v1179 = vadd.f32 0.0, %v1178
        %1180 = vmatmul.f32.gmra.mxu0 %v1067
        %v1181 = vpop.f32.mrf.mxu0
        %v1182 = vadd.f32 0.0, %v1181
        %1183 = vdwg.mxu0
        %1184 = vmatpush.msra.mxu0 0.0
        %1185 = vmatpush.msra.mxu0 0.0
        %1186 = vmatpush.msra.mxu0 0.0
        %1187 = vmatpush.msra.mxu0 0.0
        %1188 = vmatpush.msra.mxu0 0.0
        %1189 = vmatpush.msra.mxu0 0.0
        %1190 = vmatpush.msra.mxu0 0.0
        %1191 = vmatpush.msra.mxu0 %v1059
        %1192 = vmatpush.msra.mxu0 %v1051
        %1193 = vmatpush.msra.mxu0 %v1043
        %1194 = vmatpush.msra.mxu0 %v1035
        %1195 = vmatpush.msra.mxu0 %v1027
        %1196 = vmatpush.msra.mxu0 %v1019
        %1197 = vmatpush.msra.mxu0 %v1011
        %1198 = vmatpush.msra.mxu0 %v1003
        %1199 = vmatpush.msra.mxu0 %v995
        %1200 = vmatmul.f32.gmra.mxu0 %v1064
        %v1201 = vpop.f32.mrf.mxu0
        %v1202 = vadd.f32 0.0, %v1201
        %1203 = vmatmul.f32.gmra.mxu0 %v1067
        %v1204 = vpop.f32.mrf.mxu0
        %v1205 = vadd.f32 0.0, %v1204
        %1206 = vdwg.mxu0
        %1207 = vmatpush.msra.mxu0 0.0
        %1208 = vmatpush.msra.mxu0 0.0
        %1209 = vmatpush.msra.mxu0 0.0
        %1210 = vmatpush.msra.mxu0 0.0
        %1211 = vmatpush.msra.mxu0 0.0
        %1212 = vmatpush.msra.mxu0 0.0
        %1213 = vmatpush.msra.mxu0 0.0
        %1214 = vmatpush.msra.mxu0 %v1060
        %1215 = vmatpush.msra.mxu0 %v1052
        %1216 = vmatpush.msra.mxu0 %v1044
        %1217 = vmatpush.msra.mxu0 %v1036
        %1218 = vmatpush.msra.mxu0 %v1028
        %1219 = vmatpush.msra.mxu0 %v1020
        %1220 = vmatpush.msra.mxu0 %v1012
        %1221 = vmatpush.msra.mxu0 %v1004
        %1222 = vmatpush.msra.mxu0 %v996
        %1223 = vmatmul.f32.gmra.mxu0 %v1064
        %v1224 = vpop.f32.mrf.mxu0
        %v1225 = vadd.f32 0.0, %v1224
        %1226 = vmatmul.f32.gmra.mxu0 %v1067
        %v1227 = vpop.f32.mrf.mxu0
        %v1228 = vadd.f32 0.0, %v1227
        %1229 = vdwg.mxu0
        %1230 = vmatpush.msra.mxu0 0.0
        %1231 = vmatpush.msra.mxu0 0.0
        %1232 = vmatpush.msra.mxu0 0.0
        %1233 = vmatpush.msra.mxu0 0.0
        %1234 = vmatpush.msra.mxu0 0.0
        %1235 = vmatpush.msra.mxu0 0.0
        %1236 = vmatpush.msra.mxu0 0.0
        %1237 = vmatpush.msra.mxu0 %v1061
        %1238 = vmatpush.msra.mxu0 %v1053
        %1239 = vmatpush.msra.mxu0 %v1045
        %1240 = vmatpush.msra.mxu0 %v1037
        %1241 = vmatpush.msra.mxu0 %v1029
        %1242 = vmatpush.msra.mxu0 %v1021
        %1243 = vmatpush.msra.mxu0 %v1013
        %1244 = vmatpush.msra.mxu0 %v1005
        %1245 = vmatpush.msra.mxu0 %v997
        %1246 = vmatmul.f32.gmra.mxu0 %v1064
        %v1247 = vpop.f32.mrf.mxu0
        %v1248 = vadd.f32 0.0, %v1247
        %1249 = vmatmul.f32.gmra.mxu0 %v1067
        %v1250 = vpop.f32.mrf.mxu0
        %v1251 = vadd.f32 0.0, %v1250
        %1252 = vdwg.mxu0
        %1254 = vset.pattern.permute.xlu0 0
        %1255 = vperm.xlu0 %1254, %v402
        %v1256 = vpop.permute.xlu0 %1255
        %1259 = vset.pattern.permute.xlu0 0
        %1260 = vperm.xlu0 %1259, %v403
        %v1261 = vpop.permute.xlu0 %1260
        %v1263 = vmul.f32 %v1087, %v1256
        %v1264 = vmul.f32 %v1110, %v1256
        %v1265 = vmul.f32 %v1090, %v1261
        %v1266 = vmul.f32 %v1113, %v1261
        %1268 = vset.pattern.permute.xlu0 0
        %1269 = vperm.xlu0 %1268, %v404
        %v1270 = vpop.permute.xlu0 %1269
        %1273 = vset.pattern.permute.xlu0 0
        %1274 = vperm.xlu0 %1273, %v405
        %v1275 = vpop.permute.xlu0 %1274
        %v1277 = vadd.f32 %v1263, %v1270
        %v1278 = vadd.f32 %v1264, %v1270
        %v1279 = vadd.f32 %v1265, %v1275
        %v1280 = vadd.f32 %v1266, %v1275
        %v1281 = vmax.f32 %v1277, 0.0
        %v1282 = vmax.f32 %v1278, 0.0
        %v1283 = vmax.f32 %v1279, 0.0
        %v1284 = vmax.f32 %v1280, 0.0
        %1285 = vrot.lane.b32.xlu0 %v1281, 17
        %v1286 = vpop.permute.xlu0 %1285
        %1287 = vrot.lane.b32.xlu0 %v1283, 17
        %v1288 = vpop.permute.xlu0 %1287
        %1289 = vrot.lane.b32.xlu0 %v1282, 17
        %v1290 = vpop.permute.xlu0 %1289
        %1291 = vrot.lane.b32.xlu0 %v1284, 17
        %v1292 = vpop.permute.xlu0 %1291
        %v1293 = vsel %vm430, %v1286, %v1290
        %v1294 = vsel %vm430, %v1288, %v1292
        %v1295 = vsel %vm430, %v1290, %v1286
        %v1296 = vsel %vm430, %v1292, %v1288
        %v1297 = vld [vmem:[%s1] ss:$8 sm:$0x3]
        %v1299 = vperm.slane %v1297, 0
        %v1300 = vperm.slane %v1297, 1
        %v1303 = vmul.f32 %v1295, %v1299
        %v1304 = vmul.f32 %v1293, %v1300
        %v1305 = vmul.f32 %v1296, %v1299
        %v1306 = vmul.f32 %v1294, %v1300
        %1307 = vst [vmem:[#allocation3] sm:$0xff] %v1303
        %1308 = vst [vmem:[#allocation3 + $0x8] sm:$0xff] %v1304
        %1309 = vst [vmem:[#allocation3 + $0x40] sm:$0xff] %v1305
        %1310 = vst [vmem:[#allocation3 + $0x48] sm:$0xff] %v1306
        %1311 = vrot.lane.b32.xlu0 %v1281, 16
        %v1312 = vpop.permute.xlu0 %1311
        %1313 = vrot.lane.b32.xlu0 %v1283, 16
        %v1314 = vpop.permute.xlu0 %1313
        %1315 = vrot.lane.b32.xlu0 %v1282, 16
        %v1316 = vpop.permute.xlu0 %1315
        %1317 = vrot.lane.b32.xlu0 %v1284, 16
        %v1318 = vpop.permute.xlu0 %1317
        %v1319 = vsel %vm447, %v1312, %v1316
        %v1320 = vsel %vm447, %v1314, %v1318
        %v1321 = vsel %vm447, %v1316, %v1312
        %v1322 = vsel %vm447, %v1318, %v1314
        %v1323 = vld [vmem:[%s450] ss:$8 sm:$0x3]
        %v1325 = vperm.slane %v1323, 0
        %v1326 = vperm.slane %v1323, 1
        %v1329 = vmul.f32 %v1321, %v1325
        %v1330 = vmul.f32 %v1319, %v1326
        %v1331 = vmul.f32 %v1322, %v1325
        %v1332 = vmul.f32 %v1320, %v1326
        %1333 = vst [vmem:[#allocation3 + $0x80] sm:$0xff] %v1329
        %1334 = vst [vmem:[#allocation3 + $0x88] sm:$0xff] %v1330
        %1335 = vst [vmem:[#allocation3 + $0xc0] sm:$0xff] %v1331
        %1336 = vst [vmem:[#allocation3 + $0xc8] sm:$0xff] %v1332
        %1337 = vrot.lane.b32.xlu0 %v1281, 15
        %v1338 = vpop.permute.xlu0 %1337
        %1339 = vrot.lane.b32.xlu0 %v1283, 15
        %v1340 = vpop.permute.xlu0 %1339
        %1341 = vrot.lane.b32.xlu0 %v1282, 15
        %v1342 = vpop.permute.xlu0 %1341
        %1343 = vrot.lane.b32.xlu0 %v1284, 15
        %v1344 = vpop.permute.xlu0 %1343
        %v1345 = vsel %vm465, %v1338, %v1342
        %v1346 = vsel %vm465, %v1340, %v1344
        %v1347 = vsel %vm465, %v1342, %v1338
        %v1348 = vsel %vm465, %v1344, %v1340
        %v1349 = vld [vmem:[%s468] ss:$8 sm:$0x3]
        %v1351 = vperm.slane %v1349, 0
        %v1352 = vperm.slane %v1349, 1
        %v1355 = vmul.f32 %v1347, %v1351
        %v1356 = vmul.f32 %v1345, %v1352
        %v1357 = vmul.f32 %v1348, %v1351
        %v1358 = vmul.f32 %v1346, %v1352
        %1359 = vst [vmem:[#allocation3 + $0x100] sm:$0xff] %v1355
        %1360 = vst [vmem:[#allocation3 + $0x108] sm:$0xff] %v1356
        %1361 = vst [vmem:[#allocation3 + $0x140] sm:$0xff] %v1357
        %1362 = vst [vmem:[#allocation3 + $0x148] sm:$0xff] %v1358
        %1363 = vrot.lane.b32.xlu0 %v1281, 1
        %v1364 = vpop.permute.xlu0 %1363
        %1365 = vrot.lane.b32.xlu0 %v1283, 1
        %v1366 = vpop.permute.xlu0 %1365
        %1367 = vrot.lane.b32.xlu0 %v1282, 1
        %v1368 = vpop.permute.xlu0 %1367
        %1369 = vrot.lane.b32.xlu0 %v1284, 1
        %v1370 = vpop.permute.xlu0 %1369
        %v1371 = vsel %vm483, %v1364, %v1368
        %v1372 = vsel %vm483, %v1366, %v1370
        %v1373 = vsel %vm483, %v1368, %v1364
        %v1374 = vsel %vm483, %v1370, %v1366
        %v1375 = vld [vmem:[%s486] ss:$8 sm:$0x3]
        %v1377 = vperm.slane %v1375, 0
        %v1378 = vperm.slane %v1375, 1
        %v1381 = vmul.f32 %v1373, %v1377
        %v1382 = vmul.f32 %v1371, %v1378
        %v1383 = vmul.f32 %v1374, %v1377
        %v1384 = vmul.f32 %v1372, %v1378
        %1385 = vst [vmem:[#allocation3 + $0x180] sm:$0xff] %v1381
        %1386 = vst [vmem:[#allocation3 + $0x188] sm:$0xff] %v1382
        %1387 = vst [vmem:[#allocation3 + $0x1c0] sm:$0xff] %v1383
        %1388 = vst [vmem:[#allocation3 + $0x1c8] sm:$0xff] %v1384
        %1389 = vst [vmem:[#allocation3 + $0x200] sm:$0xff] %v1281
        %1390 = vst [vmem:[#allocation3 + $0x208] sm:$0xff] %v1282
        %1391 = vst [vmem:[#allocation3 + $0x240] sm:$0xff] %v1283
        %1392 = vst [vmem:[#allocation3 + $0x248] sm:$0xff] %v1284
        %1393 = vrot.lane.b32.xlu0 %v1281, 127
        %v1394 = vpop.permute.xlu0 %1393
        %1395 = vrot.lane.b32.xlu0 %v1283, 127
        %v1396 = vpop.permute.xlu0 %1395
        %1397 = vrot.lane.b32.xlu0 %v1282, 127
        %v1398 = vpop.permute.xlu0 %1397
        %1399 = vrot.lane.b32.xlu0 %v1284, 127
        %v1400 = vpop.permute.xlu0 %1399
        %v1401 = vsel %vm503, %v1394, %v1398
        %v1402 = vsel %vm503, %v1396, %v1400
        %v1403 = vsel %vm503, %v1398, %v1394
        %v1404 = vsel %vm503, %v1400, %v1396
        %v1405 = vld [vmem:[%s506] ss:$8 sm:$0x3]
        %v1407 = vperm.slane %v1405, 0
        %v1408 = vperm.slane %v1405, 1
        %v1411 = vmul.f32 %v1401, %v1407
        %v1412 = vmul.f32 %v1403, %v1408
        %v1413 = vmul.f32 %v1402, %v1407
        %v1414 = vmul.f32 %v1404, %v1408
        %1415 = vst [vmem:[#allocation3 + $0x280] sm:$0xff] %v1411
        %1416 = vst [vmem:[#allocation3 + $0x288] sm:$0xff] %v1412
        %1417 = vst [vmem:[#allocation3 + $0x2c0] sm:$0xff] %v1413
        %1418 = vst [vmem:[#allocation3 + $0x2c8] sm:$0xff] %v1414
        %1419 = vrot.lane.b32.xlu0 %v1281, 113
        %v1420 = vpop.permute.xlu0 %1419
        %1421 = vrot.lane.b32.xlu0 %v1283, 113
        %v1422 = vpop.permute.xlu0 %1421
        %1423 = vrot.lane.b32.xlu0 %v1282, 113
        %v1424 = vpop.permute.xlu0 %1423
        %1425 = vrot.lane.b32.xlu0 %v1284, 113
        %v1426 = vpop.permute.xlu0 %1425
        %v1427 = vsel %vm521, %v1420, %v1424
        %v1428 = vsel %vm521, %v1422, %v1426
        %v1429 = vsel %vm521, %v1424, %v1420
        %v1430 = vsel %vm521, %v1426, %v1422
        %v1431 = vld [vmem:[%s524] ss:$8 sm:$0x3]
        %v1433 = vperm.slane %v1431, 0
        %v1434 = vperm.slane %v1431, 1
        %v1437 = vmul.f32 %v1427, %v1433
        %v1438 = vmul.f32 %v1429, %v1434
        %v1439 = vmul.f32 %v1428, %v1433
        %v1440 = vmul.f32 %v1430, %v1434
        %1441 = vst [vmem:[#allocation3 + $0x300] sm:$0xff] %v1437
        %1442 = vst [vmem:[#allocation3 + $0x308] sm:$0xff] %v1438
        %1443 = vst [vmem:[#allocation3 + $0x340] sm:$0xff] %v1439
        %1444 = vst [vmem:[#allocation3 + $0x348] sm:$0xff] %v1440
        %1445 = vrot.lane.b32.xlu0 %v1281, 112
        %v1446 = vpop.permute.xlu0 %1445
        %1447 = vrot.lane.b32.xlu0 %v1283, 112
        %v1448 = vpop.permute.xlu0 %1447
        %1449 = vrot.lane.b32.xlu0 %v1282, 112
        %v1450 = vpop.permute.xlu0 %1449
        %1451 = vrot.lane.b32.xlu0 %v1284, 112
        %v1452 = vpop.permute.xlu0 %1451
        %v1453 = vsel %vm539, %v1446, %v1450
        %v1454 = vsel %vm539, %v1448, %v1452
        %v1455 = vsel %vm539, %v1450, %v1446
        %v1456 = vsel %vm539, %v1452, %v1448
        %v1457 = vld [vmem:[%s542] ss:$8 sm:$0x3]
        %v1459 = vperm.slane %v1457, 0
        %v1460 = vperm.slane %v1457, 1
        %v1463 = vmul.f32 %v1453, %v1459
        %v1464 = vmul.f32 %v1455, %v1460
        %v1465 = vmul.f32 %v1454, %v1459
        %v1466 = vmul.f32 %v1456, %v1460
        %1467 = vst [vmem:[#allocation3 + $0x380] sm:$0xff] %v1463
        %1468 = vst [vmem:[#allocation3 + $0x388] sm:$0xff] %v1464
        %1469 = vst [vmem:[#allocation3 + $0x3c0] sm:$0xff] %v1465
        %1470 = vst [vmem:[#allocation3 + $0x3c8] sm:$0xff] %v1466
        %1471 = vrot.lane.b32.xlu0 %v1281, 111
        %v1472 = vpop.permute.xlu0 %1471
        %1473 = vrot.lane.b32.xlu0 %v1283, 111
        %v1474 = vpop.permute.xlu0 %1473
        %1475 = vrot.lane.b32.xlu0 %v1282, 111
        %v1476 = vpop.permute.xlu0 %1475
        %1477 = vrot.lane.b32.xlu0 %v1284, 111
        %v1478 = vpop.permute.xlu0 %1477
        %v1479 = vsel %vm557, %v1472, %v1476
        %v1480 = vsel %vm557, %v1474, %v1478
        %v1481 = vsel %vm557, %v1476, %v1472
        %v1482 = vsel %vm557, %v1478, %v1474
        %v1483 = vld [vmem:[%s560] ss:$8 sm:$0x3]
        %v1485 = vperm.slane %v1483, 0
        %v1486 = vperm.slane %v1483, 1
        %v1489 = vmul.f32 %v1479, %v1485
        %v1490 = vmul.f32 %v1481, %v1486
        %v1491 = vmul.f32 %v1480, %v1485
        %v1492 = vmul.f32 %v1482, %v1486
        %1493 = vst [vmem:[#allocation3 + $0x400] sm:$0xff] %v1489
        %1494 = vst [vmem:[#allocation3 + $0x408] sm:$0xff] %v1490
        %1495 = vst [vmem:[#allocation3 + $0x440] sm:$0xff] %v1491
        %1496 = vst [vmem:[#allocation3 + $0x448] sm:$0xff] %v1492
        %v1497 = vmul.f32 %v1133, %v1256
        %v1498 = vmul.f32 %v1156, %v1256
        %v1499 = vmul.f32 %v1136, %v1261
        %v1500 = vmul.f32 %v1159, %v1261
        %v1501 = vadd.f32 %v1497, %v1270
        %v1502 = vadd.f32 %v1498, %v1270
        %v1503 = vadd.f32 %v1499, %v1275
        %v1504 = vadd.f32 %v1500, %v1275
        %v1505 = vmax.f32 %v1501, 0.0
        %v1506 = vmax.f32 %v1502, 0.0
        %v1507 = vmax.f32 %v1503, 0.0
        %v1508 = vmax.f32 %v1504, 0.0
        %1509 = vrot.lane.b32.xlu0 %v1505, 17
        %v1510 = vpop.permute.xlu0 %1509
        %1511 = vrot.lane.b32.xlu0 %v1507, 17
        %v1512 = vpop.permute.xlu0 %1511
        %1513 = vrot.lane.b32.xlu0 %v1506, 17
        %v1514 = vpop.permute.xlu0 %1513
        %1515 = vrot.lane.b32.xlu0 %v1508, 17
        %v1516 = vpop.permute.xlu0 %1515
        %v1517 = vsel %vm430, %v1510, %v1514
        %v1518 = vsel %vm430, %v1512, %v1516
        %v1519 = vsel %vm430, %v1514, %v1510
        %v1520 = vsel %vm430, %v1516, %v1512
        %v1521 = vld [vmem:[%s1] ss:$8 sm:$0x3]
        %v1523 = vperm.slane %v1521, 0
        %v1524 = vperm.slane %v1521, 1
        %v1527 = vmul.f32 %v1519, %v1523
        %v1528 = vmul.f32 %v1517, %v1524
        %v1529 = vmul.f32 %v1520, %v1523
        %v1530 = vmul.f32 %v1518, %v1524
        %1531 = vst [vmem:[#allocation3 + $0x10] sm:$0xff] %v1527
        %1532 = vst [vmem:[#allocation3 + $0x18] sm:$0xff] %v1528
        %1533 = vst [vmem:[#allocation3 + $0x50] sm:$0xff] %v1529
        %1534 = vst [vmem:[#allocation3 + $0x58] sm:$0xff] %v1530
        %1535 = vrot.lane.b32.xlu0 %v1505, 16
        %v1536 = vpop.permute.xlu0 %1535
        %1537 = vrot.lane.b32.xlu0 %v1507, 16
        %v1538 = vpop.permute.xlu0 %1537
        %1539 = vrot.lane.b32.xlu0 %v1506, 16
        %v1540 = vpop.permute.xlu0 %1539
        %1541 = vrot.lane.b32.xlu0 %v1508, 16
        %v1542 = vpop.permute.xlu0 %1541
        %v1543 = vsel %vm447, %v1536, %v1540
        %v1544 = vsel %vm447, %v1538, %v1542
        %v1545 = vsel %vm447, %v1540, %v1536
        %v1546 = vsel %vm447, %v1542, %v1538
        %v1547 = vld [vmem:[%s450] ss:$8 sm:$0x3]
        %v1549 = vperm.slane %v1547, 0
        %v1550 = vperm.slane %v1547, 1
        %v1553 = vmul.f32 %v1545, %v1549
        %v1554 = vmul.f32 %v1543, %v1550
        %v1555 = vmul.f32 %v1546, %v1549
        %v1556 = vmul.f32 %v1544, %v1550
        %1557 = vst [vmem:[#allocation3 + $0x90] sm:$0xff] %v1553
        %1558 = vst [vmem:[#allocation3 + $0x98] sm:$0xff] %v1554
        %1559 = vst [vmem:[#allocation3 + $0xd0] sm:$0xff] %v1555
        %1560 = vst [vmem:[#allocation3 + $0xd8] sm:$0xff] %v1556
        %1561 = vrot.lane.b32.xlu0 %v1505, 15
        %v1562 = vpop.permute.xlu0 %1561
        %1563 = vrot.lane.b32.xlu0 %v1507, 15
        %v1564 = vpop.permute.xlu0 %1563
        %1565 = vrot.lane.b32.xlu0 %v1506, 15
        %v1566 = vpop.permute.xlu0 %1565
        %1567 = vrot.lane.b32.xlu0 %v1508, 15
        %v1568 = vpop.permute.xlu0 %1567
        %v1569 = vsel %vm465, %v1562, %v1566
        %v1570 = vsel %vm465, %v1564, %v1568
        %v1571 = vsel %vm465, %v1566, %v1562
        %v1572 = vsel %vm465, %v1568, %v1564
        %v1573 = vld [vmem:[%s468] ss:$8 sm:$0x3]
        %v1575 = vperm.slane %v1573, 0
        %v1576 = vperm.slane %v1573, 1
        %v1579 = vmul.f32 %v1571, %v1575
        %v1580 = vmul.f32 %v1569, %v1576
        %v1581 = vmul.f32 %v1572, %v1575
        %v1582 = vmul.f32 %v1570, %v1576
        %1583 = vst [vmem:[#allocation3 + $0x110] sm:$0xff] %v1579
        %1584 = vst [vmem:[#allocation3 + $0x118] sm:$0xff] %v1580
        %1585 = vst [vmem:[#allocation3 + $0x150] sm:$0xff] %v1581
        %1586 = vst [vmem:[#allocation3 + $0x158] sm:$0xff] %v1582
        %1587 = vrot.lane.b32.xlu0 %v1505, 1
        %v1588 = vpop.permute.xlu0 %1587
        %1589 = vrot.lane.b32.xlu0 %v1507, 1
        %v1590 = vpop.permute.xlu0 %1589
        %1591 = vrot.lane.b32.xlu0 %v1506, 1
        %v1592 = vpop.permute.xlu0 %1591
        %1593 = vrot.lane.b32.xlu0 %v1508, 1
        %v1594 = vpop.permute.xlu0 %1593
        %v1595 = vsel %vm483, %v1588, %v1592
        %v1596 = vsel %vm483, %v1590, %v1594
        %v1597 = vsel %vm483, %v1592, %v1588
        %v1598 = vsel %vm483, %v1594, %v1590
        %v1599 = vld [vmem:[%s486] ss:$8 sm:$0x3]
        %v1601 = vperm.slane %v1599, 0
        %v1602 = vperm.slane %v1599, 1
        %v1605 = vmul.f32 %v1597, %v1601
        %v1606 = vmul.f32 %v1595, %v1602
        %v1607 = vmul.f32 %v1598, %v1601
        %v1608 = vmul.f32 %v1596, %v1602
        %1609 = vst [vmem:[#allocation3 + $0x190] sm:$0xff] %v1605
        %1610 = vst [vmem:[#allocation3 + $0x198] sm:$0xff] %v1606
        %1611 = vst [vmem:[#allocation3 + $0x1d0] sm:$0xff] %v1607
        %1612 = vst [vmem:[#allocation3 + $0x1d8] sm:$0xff] %v1608
        %1613 = vst [vmem:[#allocation3 + $0x210] sm:$0xff] %v1505
        %1614 = vst [vmem:[#allocation3 + $0x218] sm:$0xff] %v1506
        %1615 = vst [vmem:[#allocation3 + $0x250] sm:$0xff] %v1507
        %1616 = vst [vmem:[#allocation3 + $0x258] sm:$0xff] %v1508
        %1617 = vrot.lane.b32.xlu0 %v1505, 127
        %v1618 = vpop.permute.xlu0 %1617
        %1619 = vrot.lane.b32.xlu0 %v1507, 127
        %v1620 = vpop.permute.xlu0 %1619
        %1621 = vrot.lane.b32.xlu0 %v1506, 127
        %v1622 = vpop.permute.xlu0 %1621
        %1623 = vrot.lane.b32.xlu0 %v1508, 127
        %v1624 = vpop.permute.xlu0 %1623
        %v1625 = vsel %vm503, %v1618, %v1622
        %v1626 = vsel %vm503, %v1620, %v1624
        %v1627 = vsel %vm503, %v1622, %v1618
        %v1628 = vsel %vm503, %v1624, %v1620
        %v1629 = vld [vmem:[%s506] ss:$8 sm:$0x3]
        %v1631 = vperm.slane %v1629, 0
        %v1632 = vperm.slane %v1629, 1
        %v1635 = vmul.f32 %v1625, %v1631
        %v1636 = vmul.f32 %v1627, %v1632
        %v1637 = vmul.f32 %v1626, %v1631
        %v1638 = vmul.f32 %v1628, %v1632
        %1639 = vst [vmem:[#allocation3 + $0x290] sm:$0xff] %v1635
        %1640 = vst [vmem:[#allocation3 + $0x298] sm:$0xff] %v1636
        %1641 = vst [vmem:[#allocation3 + $0x2d0] sm:$0xff] %v1637
        %1642 = vst [vmem:[#allocation3 + $0x2d8] sm:$0xff] %v1638
        %1643 = vrot.lane.b32.xlu0 %v1505, 113
        %v1644 = vpop.permute.xlu0 %1643
        %1645 = vrot.lane.b32.xlu0 %v1507, 113
        %v1646 = vpop.permute.xlu0 %1645
        %1647 = vrot.lane.b32.xlu0 %v1506, 113
        %v1648 = vpop.permute.xlu0 %1647
        %1649 = vrot.lane.b32.xlu0 %v1508, 113
        %v1650 = vpop.permute.xlu0 %1649
        %v1651 = vsel %vm521, %v1644, %v1648
        %v1652 = vsel %vm521, %v1646, %v1650
        %v1653 = vsel %vm521, %v1648, %v1644
        %v1654 = vsel %vm521, %v1650, %v1646
        %v1655 = vld [vmem:[%s524] ss:$8 sm:$0x3]
        %v1657 = vperm.slane %v1655, 0
        %v1658 = vperm.slane %v1655, 1
        %v1661 = vmul.f32 %v1651, %v1657
        %v1662 = vmul.f32 %v1653, %v1658
        %v1663 = vmul.f32 %v1652, %v1657
        %v1664 = vmul.f32 %v1654, %v1658
        %1665 = vst [vmem:[#allocation3 + $0x310] sm:$0xff] %v1661
        %1666 = vst [vmem:[#allocation3 + $0x318] sm:$0xff] %v1662
        %1667 = vst [vmem:[#allocation3 + $0x350] sm:$0xff] %v1663
        %1668 = vst [vmem:[#allocation3 + $0x358] sm:$0xff] %v1664
        %1669 = vrot.lane.b32.xlu0 %v1505, 112
        %v1670 = vpop.permute.xlu0 %1669
        %1671 = vrot.lane.b32.xlu0 %v1507, 112
        %v1672 = vpop.permute.xlu0 %1671
        %1673 = vrot.lane.b32.xlu0 %v1506, 112
        %v1674 = vpop.permute.xlu0 %1673
        %1675 = vrot.lane.b32.xlu0 %v1508, 112
        %v1676 = vpop.permute.xlu0 %1675
        %v1677 = vsel %vm539, %v1670, %v1674
        %v1678 = vsel %vm539, %v1672, %v1676
        %v1679 = vsel %vm539, %v1674, %v1670
        %v1680 = vsel %vm539, %v1676, %v1672
        %v1681 = vld [vmem:[%s542] ss:$8 sm:$0x3]
        %v1683 = vperm.slane %v1681, 0
        %v1684 = vperm.slane %v1681, 1
        %v1687 = vmul.f32 %v1677, %v1683
        %v1688 = vmul.f32 %v1679, %v1684
        %v1689 = vmul.f32 %v1678, %v1683
        %v1690 = vmul.f32 %v1680, %v1684
        %1691 = vst [vmem:[#allocation3 + $0x390] sm:$0xff] %v1687
        %1692 = vst [vmem:[#allocation3 + $0x398] sm:$0xff] %v1688
        %1693 = vst [vmem:[#allocation3 + $0x3d0] sm:$0xff] %v1689
        %1694 = vst [vmem:[#allocation3 + $0x3d8] sm:$0xff] %v1690
        %1695 = vrot.lane.b32.xlu0 %v1505, 111
        %v1696 = vpop.permute.xlu0 %1695
        %1697 = vrot.lane.b32.xlu0 %v1507, 111
        %v1698 = vpop.permute.xlu0 %1697
        %1699 = vrot.lane.b32.xlu0 %v1506, 111
        %v1700 = vpop.permute.xlu0 %1699
        %1701 = vrot.lane.b32.xlu0 %v1508, 111
        %v1702 = vpop.permute.xlu0 %1701
        %v1703 = vsel %vm557, %v1696, %v1700
        %v1704 = vsel %vm557, %v1698, %v1702
        %v1705 = vsel %vm557, %v1700, %v1696
        %v1706 = vsel %vm557, %v1702, %v1698
        %v1707 = vld [vmem:[%s560] ss:$8 sm:$0x3]
        %v1709 = vperm.slane %v1707, 0
        %v1710 = vperm.slane %v1707, 1
        %v1713 = vmul.f32 %v1703, %v1709
        %v1714 = vmul.f32 %v1705, %v1710
        %v1715 = vmul.f32 %v1704, %v1709
        %v1716 = vmul.f32 %v1706, %v1710
        %1717 = vst [vmem:[#allocation3 + $0x410] sm:$0xff] %v1713
        %1718 = vst [vmem:[#allocation3 + $0x418] sm:$0xff] %v1714
        %1719 = vst [vmem:[#allocation3 + $0x450] sm:$0xff] %v1715
        %1720 = vst [vmem:[#allocation3 + $0x458] sm:$0xff] %v1716
        %v1721 = vmul.f32 %v1179, %v1256
        %v1722 = vmul.f32 %v1202, %v1256
        %v1723 = vmul.f32 %v1182, %v1261
        %v1724 = vmul.f32 %v1205, %v1261
        %v1725 = vadd.f32 %v1721, %v1270
        %v1726 = vadd.f32 %v1722, %v1270
        %v1727 = vadd.f32 %v1723, %v1275
        %v1728 = vadd.f32 %v1724, %v1275
        %v1729 = vmax.f32 %v1725, 0.0
        %v1730 = vmax.f32 %v1726, 0.0
        %v1731 = vmax.f32 %v1727, 0.0
        %v1732 = vmax.f32 %v1728, 0.0
        %1733 = vrot.lane.b32.xlu0 %v1729, 17
        %v1734 = vpop.permute.xlu0 %1733
        %1735 = vrot.lane.b32.xlu0 %v1731, 17
        %v1736 = vpop.permute.xlu0 %1735
        %1737 = vrot.lane.b32.xlu0 %v1730, 17
        %v1738 = vpop.permute.xlu0 %1737
        %1739 = vrot.lane.b32.xlu0 %v1732, 17
        %v1740 = vpop.permute.xlu0 %1739
        %v1741 = vsel %vm430, %v1734, %v1738
        %v1742 = vsel %vm430, %v1736, %v1740
        %v1743 = vsel %vm430, %v1738, %v1734
        %v1744 = vsel %vm430, %v1740, %v1736
        %v1745 = vld [vmem:[%s1] ss:$8 sm:$0x3]
        %v1747 = vperm.slane %v1745, 0
        %v1748 = vperm.slane %v1745, 1
        %v1751 = vmul.f32 %v1743, %v1747
        %v1752 = vmul.f32 %v1741, %v1748
        %v1753 = vmul.f32 %v1744, %v1747
        %v1754 = vmul.f32 %v1742, %v1748
        %1755 = vst [vmem:[#allocation3 + $0x20] sm:$0xff] %v1751
        %1756 = vst [vmem:[#allocation3 + $0x28] sm:$0xff] %v1752
        %1757 = vst [vmem:[#allocation3 + $0x60] sm:$0xff] %v1753
        %1758 = vst [vmem:[#allocation3 + $0x68] sm:$0xff] %v1754
        %1759 = vrot.lane.b32.xlu0 %v1729, 16
        %v1760 = vpop.permute.xlu0 %1759
        %1761 = vrot.lane.b32.xlu0 %v1731, 16
        %v1762 = vpop.permute.xlu0 %1761
        %1763 = vrot.lane.b32.xlu0 %v1730, 16
        %v1764 = vpop.permute.xlu0 %1763
        %1765 = vrot.lane.b32.xlu0 %v1732, 16
        %v1766 = vpop.permute.xlu0 %1765
        %v1767 = vsel %vm447, %v1760, %v1764
        %v1768 = vsel %vm447, %v1762, %v1766
        %v1769 = vsel %vm447, %v1764, %v1760
        %v1770 = vsel %vm447, %v1766, %v1762
        %v1771 = vld [vmem:[%s450] ss:$8 sm:$0x3]
        %v1773 = vperm.slane %v1771, 0
        %v1774 = vperm.slane %v1771, 1
        %v1777 = vmul.f32 %v1769, %v1773
        %v1778 = vmul.f32 %v1767, %v1774
        %v1779 = vmul.f32 %v1770, %v1773
        %v1780 = vmul.f32 %v1768, %v1774
        %1781 = vst [vmem:[#allocation3 + $0xa0] sm:$0xff] %v1777
        %1782 = vst [vmem:[#allocation3 + $0xa8] sm:$0xff] %v1778
        %1783 = vst [vmem:[#allocation3 + $0xe0] sm:$0xff] %v1779
        %1784 = vst [vmem:[#allocation3 + $0xe8] sm:$0xff] %v1780
        %1785 = vrot.lane.b32.xlu0 %v1729, 15
        %v1786 = vpop.permute.xlu0 %1785
        %1787 = vrot.lane.b32.xlu0 %v1731, 15
        %v1788 = vpop.permute.xlu0 %1787
        %1789 = vrot.lane.b32.xlu0 %v1730, 15
        %v1790 = vpop.permute.xlu0 %1789
        %1791 = vrot.lane.b32.xlu0 %v1732, 15
        %v1792 = vpop.permute.xlu0 %1791
        %v1793 = vsel %vm465, %v1786, %v1790
        %v1794 = vsel %vm465, %v1788, %v1792
        %v1795 = vsel %vm465, %v1790, %v1786
        %v1796 = vsel %vm465, %v1792, %v1788
        %v1797 = vld [vmem:[%s468] ss:$8 sm:$0x3]
        %v1799 = vperm.slane %v1797, 0
        %v1800 = vperm.slane %v1797, 1
        %v1803 = vmul.f32 %v1795, %v1799
        %v1804 = vmul.f32 %v1793, %v1800
        %v1805 = vmul.f32 %v1796, %v1799
        %v1806 = vmul.f32 %v1794, %v1800
        %1807 = vst [vmem:[#allocation3 + $0x120] sm:$0xff] %v1803
        %1808 = vst [vmem:[#allocation3 + $0x128] sm:$0xff] %v1804
        %1809 = vst [vmem:[#allocation3 + $0x160] sm:$0xff] %v1805
        %1810 = vst [vmem:[#allocation3 + $0x168] sm:$0xff] %v1806
        %1811 = vrot.lane.b32.xlu0 %v1729, 1
        %v1812 = vpop.permute.xlu0 %1811
        %1813 = vrot.lane.b32.xlu0 %v1731, 1
        %v1814 = vpop.permute.xlu0 %1813
        %1815 = vrot.lane.b32.xlu0 %v1730, 1
        %v1816 = vpop.permute.xlu0 %1815
        %1817 = vrot.lane.b32.xlu0 %v1732, 1
        %v1818 = vpop.permute.xlu0 %1817
        %v1819 = vsel %vm483, %v1812, %v1816
        %v1820 = vsel %vm483, %v1814, %v1818
        %v1821 = vsel %vm483, %v1816, %v1812
        %v1822 = vsel %vm483, %v1818, %v1814
        %v1823 = vld [vmem:[%s486] ss:$8 sm:$0x3]
        %v1825 = vperm.slane %v1823, 0
        %v1826 = vperm.slane %v1823, 1
        %v1829 = vmul.f32 %v1821, %v1825
        %v1830 = vmul.f32 %v1819, %v1826
        %v1831 = vmul.f32 %v1822, %v1825
        %v1832 = vmul.f32 %v1820, %v1826
        %1833 = vst [vmem:[#allocation3 + $0x1a0] sm:$0xff] %v1829
        %1834 = vst [vmem:[#allocation3 + $0x1a8] sm:$0xff] %v1830
        %1835 = vst [vmem:[#allocation3 + $0x1e0] sm:$0xff] %v1831
        %1836 = vst [vmem:[#allocation3 + $0x1e8] sm:$0xff] %v1832
        %1837 = vst [vmem:[#allocation3 + $0x220] sm:$0xff] %v1729
        %1838 = vst [vmem:[#allocation3 + $0x228] sm:$0xff] %v1730
        %1839 = vst [vmem:[#allocation3 + $0x260] sm:$0xff] %v1731
        %1840 = vst [vmem:[#allocation3 + $0x268] sm:$0xff] %v1732
        %1841 = vrot.lane.b32.xlu0 %v1729, 127
        %v1842 = vpop.permute.xlu0 %1841
        %1843 = vrot.lane.b32.xlu0 %v1731, 127
        %v1844 = vpop.permute.xlu0 %1843
        %1845 = vrot.lane.b32.xlu0 %v1730, 127
        %v1846 = vpop.permute.xlu0 %1845
        %1847 = vrot.lane.b32.xlu0 %v1732, 127
        %v1848 = vpop.permute.xlu0 %1847
        %v1849 = vsel %vm503, %v1842, %v1846
        %v1850 = vsel %vm503, %v1844, %v1848
        %v1851 = vsel %vm503, %v1846, %v1842
        %v1852 = vsel %vm503, %v1848, %v1844
        %v1853 = vld [vmem:[%s506] ss:$8 sm:$0x3]
        %v1855 = vperm.slane %v1853, 0
        %v1856 = vperm.slane %v1853, 1
        %v1859 = vmul.f32 %v1849, %v1855
        %v1860 = vmul.f32 %v1851, %v1856
        %v1861 = vmul.f32 %v1850, %v1855
        %v1862 = vmul.f32 %v1852, %v1856
        %1863 = vst [vmem:[#allocation3 + $0x2a0] sm:$0xff] %v1859
        %1864 = vst [vmem:[#allocation3 + $0x2a8] sm:$0xff] %v1860
        %1865 = vst [vmem:[#allocation3 + $0x2e0] sm:$0xff] %v1861
        %1866 = vst [vmem:[#allocation3 + $0x2e8] sm:$0xff] %v1862
        %1867 = vrot.lane.b32.xlu0 %v1729, 113
        %v1868 = vpop.permute.xlu0 %1867
        %1869 = vrot.lane.b32.xlu0 %v1731, 113
        %v1870 = vpop.permute.xlu0 %1869
        %1871 = vrot.lane.b32.xlu0 %v1730, 113
        %v1872 = vpop.permute.xlu0 %1871
        %1873 = vrot.lane.b32.xlu0 %v1732, 113
        %v1874 = vpop.permute.xlu0 %1873
        %v1875 = vsel %vm521, %v1868, %v1872
        %v1876 = vsel %vm521, %v1870, %v1874
        %v1877 = vsel %vm521, %v1872, %v1868
        %v1878 = vsel %vm521, %v1874, %v1870
        %v1879 = vld [vmem:[%s524] ss:$8 sm:$0x3]
        %v1881 = vperm.slane %v1879, 0
        %v1882 = vperm.slane %v1879, 1
        %v1885 = vmul.f32 %v1875, %v1881
        %v1886 = vmul.f32 %v1877, %v1882
        %v1887 = vmul.f32 %v1876, %v1881
        %v1888 = vmul.f32 %v1878, %v1882
        %1889 = vst [vmem:[#allocation3 + $0x320] sm:$0xff] %v1885
        %1890 = vst [vmem:[#allocation3 + $0x328] sm:$0xff] %v1886
        %1891 = vst [vmem:[#allocation3 + $0x360] sm:$0xff] %v1887
        %1892 = vst [vmem:[#allocation3 + $0x368] sm:$0xff] %v1888
        %1893 = vrot.lane.b32.xlu0 %v1729, 112
        %v1894 = vpop.permute.xlu0 %1893
        %1895 = vrot.lane.b32.xlu0 %v1731, 112
        %v1896 = vpop.permute.xlu0 %1895
        %1897 = vrot.lane.b32.xlu0 %v1730, 112
        %v1898 = vpop.permute.xlu0 %1897
        %1899 = vrot.lane.b32.xlu0 %v1732, 112
        %v1900 = vpop.permute.xlu0 %1899
        %v1901 = vsel %vm539, %v1894, %v1898
        %v1902 = vsel %vm539, %v1896, %v1900
        %v1903 = vsel %vm539, %v1898, %v1894
        %v1904 = vsel %vm539, %v1900, %v1896
        %v1905 = vld [vmem:[%s542] ss:$8 sm:$0x3]
        %v1907 = vperm.slane %v1905, 0
        %v1908 = vperm.slane %v1905, 1
        %v1911 = vmul.f32 %v1901, %v1907
        %v1912 = vmul.f32 %v1903, %v1908
        %v1913 = vmul.f32 %v1902, %v1907
        %v1914 = vmul.f32 %v1904, %v1908
        %1915 = vst [vmem:[#allocation3 + $0x3a0] sm:$0xff] %v1911
        %1916 = vst [vmem:[#allocation3 + $0x3a8] sm:$0xff] %v1912
        %1917 = vst [vmem:[#allocation3 + $0x3e0] sm:$0xff] %v1913
        %1918 = vst [vmem:[#allocation3 + $0x3e8] sm:$0xff] %v1914
        %1919 = vrot.lane.b32.xlu0 %v1729, 111
        %v1920 = vpop.permute.xlu0 %1919
        %1921 = vrot.lane.b32.xlu0 %v1731, 111
        %v1922 = vpop.permute.xlu0 %1921
        %1923 = vrot.lane.b32.xlu0 %v1730, 111
        %v1924 = vpop.permute.xlu0 %1923
        %1925 = vrot.lane.b32.xlu0 %v1732, 111
        %v1926 = vpop.permute.xlu0 %1925
        %v1927 = vsel %vm557, %v1920, %v1924
        %v1928 = vsel %vm557, %v1922, %v1926
        %v1929 = vsel %vm557, %v1924, %v1920
        %v1930 = vsel %vm557, %v1926, %v1922
        %v1931 = vld [vmem:[%s560] ss:$8 sm:$0x3]
        %v1933 = vperm.slane %v1931, 0
        %v1934 = vperm.slane %v1931, 1
        %v1937 = vmul.f32 %v1927, %v1933
        %v1938 = vmul.f32 %v1929, %v1934
        %v1939 = vmul.f32 %v1928, %v1933
        %v1940 = vmul.f32 %v1930, %v1934
        %1941 = vst [vmem:[#allocation3 + $0x420] sm:$0xff] %v1937
        %1942 = vst [vmem:[#allocation3 + $0x428] sm:$0xff] %v1938
        %1943 = vst [vmem:[#allocation3 + $0x460] sm:$0xff] %v1939
        %1944 = vst [vmem:[#allocation3 + $0x468] sm:$0xff] %v1940
        %v1945 = vmul.f32 %v1225, %v1256
        %v1946 = vmul.f32 %v1248, %v1256
        %v1947 = vmul.f32 %v1228, %v1261
        %v1948 = vmul.f32 %v1251, %v1261
        %v1949 = vadd.f32 %v1945, %v1270
        %v1950 = vadd.f32 %v1946, %v1270
        %v1951 = vadd.f32 %v1947, %v1275
        %v1952 = vadd.f32 %v1948, %v1275
        %v1953 = vmax.f32 %v1949, 0.0
        %v1954 = vmax.f32 %v1950, 0.0
        %v1955 = vmax.f32 %v1951, 0.0
        %v1956 = vmax.f32 %v1952, 0.0
        %1957 = vrot.lane.b32.xlu0 %v1953, 17
        %v1958 = vpop.permute.xlu0 %1957
        %1959 = vrot.lane.b32.xlu0 %v1955, 17
        %v1960 = vpop.permute.xlu0 %1959
        %1961 = vrot.lane.b32.xlu0 %v1954, 17
        %v1962 = vpop.permute.xlu0 %1961
        %1963 = vrot.lane.b32.xlu0 %v1956, 17
        %v1964 = vpop.permute.xlu0 %1963
        %v1965 = vsel %vm430, %v1958, %v1962
        %v1966 = vsel %vm430, %v1960, %v1964
        %v1967 = vsel %vm430, %v1962, %v1958
        %v1968 = vsel %vm430, %v1964, %v1960
        %v1969 = vld [vmem:[%s1] ss:$8 sm:$0x3]
        %v1971 = vperm.slane %v1969, 0
        %v1972 = vperm.slane %v1969, 1
        %v1975 = vmul.f32 %v1967, %v1971
        %v1976 = vmul.f32 %v1965, %v1972
        %v1977 = vmul.f32 %v1968, %v1971
        %v1978 = vmul.f32 %v1966, %v1972
        %1979 = vst [vmem:[#allocation3 + $0x30] sm:$0xff] %v1975
        %1980 = vst [vmem:[#allocation3 + $0x38] sm:$0xff] %v1976
        %1981 = vst [vmem:[#allocation3 + $0x70] sm:$0xff] %v1977
        %1982 = vst [vmem:[#allocation3 + $0x78] sm:$0xff] %v1978
        %1983 = vrot.lane.b32.xlu0 %v1953, 16
        %v1984 = vpop.permute.xlu0 %1983
        %1985 = vrot.lane.b32.xlu0 %v1955, 16
        %v1986 = vpop.permute.xlu0 %1985
        %1987 = vrot.lane.b32.xlu0 %v1954, 16
        %v1988 = vpop.permute.xlu0 %1987
        %1989 = vrot.lane.b32.xlu0 %v1956, 16
        %v1990 = vpop.permute.xlu0 %1989
        %v1991 = vsel %vm447, %v1984, %v1988
        %v1992 = vsel %vm447, %v1986, %v1990
        %v1993 = vsel %vm447, %v1988, %v1984
        %v1994 = vsel %vm447, %v1990, %v1986
        %v1995 = vld [vmem:[%s450] ss:$8 sm:$0x3]
        %v1997 = vperm.slane %v1995, 0
        %v1998 = vperm.slane %v1995, 1
        %v2001 = vmul.f32 %v1993, %v1997
        %v2002 = vmul.f32 %v1991, %v1998
        %v2003 = vmul.f32 %v1994, %v1997
        %v2004 = vmul.f32 %v1992, %v1998
        %2005 = vst [vmem:[#allocation3 + $0xb0] sm:$0xff] %v2001
        %2006 = vst [vmem:[#allocation3 + $0xb8] sm:$0xff] %v2002
        %2007 = vst [vmem:[#allocation3 + $0xf0] sm:$0xff] %v2003
        %2008 = vst [vmem:[#allocation3 + $0xf8] sm:$0xff] %v2004
        %2009 = vrot.lane.b32.xlu0 %v1953, 15
        %v2010 = vpop.permute.xlu0 %2009
        %2011 = vrot.lane.b32.xlu0 %v1955, 15
        %v2012 = vpop.permute.xlu0 %2011
        %2013 = vrot.lane.b32.xlu0 %v1954, 15
        %v2014 = vpop.permute.xlu0 %2013
        %2015 = vrot.lane.b32.xlu0 %v1956, 15
        %v2016 = vpop.permute.xlu0 %2015
        %v2017 = vsel %vm465, %v2010, %v2014
        %v2018 = vsel %vm465, %v2012, %v2016
        %v2019 = vsel %vm465, %v2014, %v2010
        %v2020 = vsel %vm465, %v2016, %v2012
        %v2021 = vld [vmem:[%s468] ss:$8 sm:$0x3]
        %v2023 = vperm.slane %v2021, 0
        %v2024 = vperm.slane %v2021, 1
        %v2027 = vmul.f32 %v2019, %v2023
        %v2028 = vmul.f32 %v2017, %v2024
        %v2029 = vmul.f32 %v2020, %v2023
        %v2030 = vmul.f32 %v2018, %v2024
        %2031 = vst [vmem:[#allocation3 + $0x130] sm:$0xff] %v2027
        %2032 = vst [vmem:[#allocation3 + $0x138] sm:$0xff] %v2028
        %2033 = vst [vmem:[#allocation3 + $0x170] sm:$0xff] %v2029
        %2034 = vst [vmem:[#allocation3 + $0x178] sm:$0xff] %v2030
        %2035 = vrot.lane.b32.xlu0 %v1953, 1
        %v2036 = vpop.permute.xlu0 %2035
        %2037 = vrot.lane.b32.xlu0 %v1955, 1
        %v2038 = vpop.permute.xlu0 %2037
        %2039 = vrot.lane.b32.xlu0 %v1954, 1
        %v2040 = vpop.permute.xlu0 %2039
        %2041 = vrot.lane.b32.xlu0 %v1956, 1
        %v2042 = vpop.permute.xlu0 %2041
        %v2043 = vsel %vm483, %v2036, %v2040
        %v2044 = vsel %vm483, %v2038, %v2042
        %v2045 = vsel %vm483, %v2040, %v2036
        %v2046 = vsel %vm483, %v2042, %v2038
        %v2047 = vld [vmem:[%s486] ss:$8 sm:$0x3]
        %v2049 = vperm.slane %v2047, 0
        %v2050 = vperm.slane %v2047, 1
        %v2053 = vmul.f32 %v2045, %v2049
        %v2054 = vmul.f32 %v2043, %v2050
        %v2055 = vmul.f32 %v2046, %v2049
        %v2056 = vmul.f32 %v2044, %v2050
        %2057 = vst [vmem:[#allocation3 + $0x1b0] sm:$0xff] %v2053
        %2058 = vst [vmem:[#allocation3 + $0x1b8] sm:$0xff] %v2054
        %2059 = vst [vmem:[#allocation3 + $0x1f0] sm:$0xff] %v2055
        %2060 = vst [vmem:[#allocation3 + $0x1f8] sm:$0xff] %v2056
        %2061 = vst [vmem:[#allocation3 + $0x230] sm:$0xff] %v1953
        %2062 = vst [vmem:[#allocation3 + $0x238] sm:$0xff] %v1954
        %2063 = vst [vmem:[#allocation3 + $0x270] sm:$0xff] %v1955
        %2064 = vst [vmem:[#allocation3 + $0x278] sm:$0xff] %v1956
        %2065 = vrot.lane.b32.xlu0 %v1953, 127
        %v2066 = vpop.permute.xlu0 %2065
        %2067 = vrot.lane.b32.xlu0 %v1955, 127
        %v2068 = vpop.permute.xlu0 %2067
        %2069 = vrot.lane.b32.xlu0 %v1954, 127
        %v2070 = vpop.permute.xlu0 %2069
        %2071 = vrot.lane.b32.xlu0 %v1956, 127
        %v2072 = vpop.permute.xlu0 %2071
        %v2073 = vsel %vm503, %v2066, %v2070
        %v2074 = vsel %vm503, %v2068, %v2072
        %v2075 = vsel %vm503, %v2070, %v2066
        %v2076 = vsel %vm503, %v2072, %v2068
        %v2077 = vld [vmem:[%s506] ss:$8 sm:$0x3]
        %v2079 = vperm.slane %v2077, 0
        %v2080 = vperm.slane %v2077, 1
        %v2083 = vmul.f32 %v2073, %v2079
        %v2084 = vmul.f32 %v2075, %v2080
        %v2085 = vmul.f32 %v2074, %v2079
        %v2086 = vmul.f32 %v2076, %v2080
        %2087 = vst [vmem:[#allocation3 + $0x2b0] sm:$0xff] %v2083
        %2088 = vst [vmem:[#allocation3 + $0x2b8] sm:$0xff] %v2084
        %2089 = vst [vmem:[#allocation3 + $0x2f0] sm:$0xff] %v2085
        %2090 = vst [vmem:[#allocation3 + $0x2f8] sm:$0xff] %v2086
        %2091 = vrot.lane.b32.xlu0 %v1953, 113
        %v2092 = vpop.permute.xlu0 %2091
        %2093 = vrot.lane.b32.xlu0 %v1955, 113
        %v2094 = vpop.permute.xlu0 %2093
        %2095 = vrot.lane.b32.xlu0 %v1954, 113
        %v2096 = vpop.permute.xlu0 %2095
        %2097 = vrot.lane.b32.xlu0 %v1956, 113
        %v2098 = vpop.permute.xlu0 %2097
        %v2099 = vsel %vm521, %v2092, %v2096
        %v2100 = vsel %vm521, %v2094, %v2098
        %v2101 = vsel %vm521, %v2096, %v2092
        %v2102 = vsel %vm521, %v2098, %v2094
        %v2103 = vld [vmem:[%s524] ss:$8 sm:$0x3]
        %v2105 = vperm.slane %v2103, 0
        %v2106 = vperm.slane %v2103, 1
        %v2109 = vmul.f32 %v2099, %v2105
        %v2110 = vmul.f32 %v2101, %v2106
        %v2111 = vmul.f32 %v2100, %v2105
        %v2112 = vmul.f32 %v2102, %v2106
        %2113 = vst [vmem:[#allocation3 + $0x330] sm:$0xff] %v2109
        %2114 = vst [vmem:[#allocation3 + $0x338] sm:$0xff] %v2110
        %2115 = vst [vmem:[#allocation3 + $0x370] sm:$0xff] %v2111
        %2116 = vst [vmem:[#allocation3 + $0x378] sm:$0xff] %v2112
        %2117 = vrot.lane.b32.xlu0 %v1953, 112
        %v2118 = vpop.permute.xlu0 %2117
        %2119 = vrot.lane.b32.xlu0 %v1955, 112
        %v2120 = vpop.permute.xlu0 %2119
        %2121 = vrot.lane.b32.xlu0 %v1954, 112
        %v2122 = vpop.permute.xlu0 %2121
        %2123 = vrot.lane.b32.xlu0 %v1956, 112
        %v2124 = vpop.permute.xlu0 %2123
        %v2125 = vsel %vm539, %v2118, %v2122
        %v2126 = vsel %vm539, %v2120, %v2124
        %v2127 = vsel %vm539, %v2122, %v2118
        %v2128 = vsel %vm539, %v2124, %v2120
        %v2129 = vld [vmem:[%s542] ss:$8 sm:$0x3]
        %v2131 = vperm.slane %v2129, 0
        %v2132 = vperm.slane %v2129, 1
        %v2135 = vmul.f32 %v2125, %v2131
        %v2136 = vmul.f32 %v2127, %v2132
        %v2137 = vmul.f32 %v2126, %v2131
        %v2138 = vmul.f32 %v2128, %v2132
        %2139 = vst [vmem:[#allocation3 + $0x3b0] sm:$0xff] %v2135
        %2140 = vst [vmem:[#allocation3 + $0x3b8] sm:$0xff] %v2136
        %2141 = vst [vmem:[#allocation3 + $0x3f0] sm:$0xff] %v2137
        %2142 = vst [vmem:[#allocation3 + $0x3f8] sm:$0xff] %v2138
        %2143 = vrot.lane.b32.xlu0 %v1953, 111
        %v2144 = vpop.permute.xlu0 %2143
        %2145 = vrot.lane.b32.xlu0 %v1955, 111
        %v2146 = vpop.permute.xlu0 %2145
        %2147 = vrot.lane.b32.xlu0 %v1954, 111
        %v2148 = vpop.permute.xlu0 %2147
        %2149 = vrot.lane.b32.xlu0 %v1956, 111
        %v2150 = vpop.permute.xlu0 %2149
        %v2151 = vsel %vm557, %v2144, %v2148
        %v2152 = vsel %vm557, %v2146, %v2150
        %v2153 = vsel %vm557, %v2148, %v2144
        %v2154 = vsel %vm557, %v2150, %v2146
        %v2155 = vld [vmem:[%s560] ss:$8 sm:$0x3]
        %v2157 = vperm.slane %v2155, 0
        %v2158 = vperm.slane %v2155, 1
        %v2161 = vmul.f32 %v2151, %v2157
        %v2162 = vmul.f32 %v2153, %v2158
        %v2163 = vmul.f32 %v2152, %v2157
        %v2164 = vmul.f32 %v2154, %v2158
        %2165 = vst [vmem:[#allocation3 + $0x430] sm:$0xff] %v2161
        %2166 = vst [vmem:[#allocation3 + $0x438] sm:$0xff] %v2162
        %2167 = vst [vmem:[#allocation3 + $0x470] sm:$0xff] %v2163
        %2168 = vst [vmem:[#allocation3 + $0x478] sm:$0xff] %v2164
        %v2169 = vld [vmem:[#allocation7] sm:$0xff]
        %v2170 = vld [vmem:[#allocation7 + $0x8] sm:$0xff]
        %v2171 = vld [vmem:[#allocation7 + $0x10] sm:$0xff]
        %v2172 = vld [vmem:[#allocation7 + $0x18] sm:$0xff]
        %v2173 = vld [vmem:[#allocation3] sm:$0xff]
        %v2174 = vld [vmem:[#allocation3 + $0x8] sm:$0xff]
        %v2175 = vld [vmem:[#allocation3 + $0x10] sm:$0xff]
        %v2176 = vld [vmem:[#allocation3 + $0x18] sm:$0xff]
        %v2177 = vld [vmem:[#allocation3 + $0x20] sm:$0xff]
        %v2178 = vld [vmem:[#allocation3 + $0x28] sm:$0xff]
        %v2179 = vld [vmem:[#allocation3 + $0x30] sm:$0xff]
        %v2180 = vld [vmem:[#allocation3 + $0x38] sm:$0xff]
        %v2181 = vld [vmem:[#allocation3 + $0x40] sm:$0xff]
        %v2182 = vld [vmem:[#allocation3 + $0x48] sm:$0xff]
        %v2183 = vld [vmem:[#allocation3 + $0x50] sm:$0xff]
        %v2184 = vld [vmem:[#allocation3 + $0x58] sm:$0xff]
        %v2185 = vld [vmem:[#allocation3 + $0x60] sm:$0xff]
        %v2186 = vld [vmem:[#allocation3 + $0x68] sm:$0xff]
        %v2187 = vld [vmem:[#allocation3 + $0x70] sm:$0xff]
        %v2188 = vld [vmem:[#allocation3 + $0x78] sm:$0xff]
        %v2189 = vld [vmem:[#allocation3 + $0x80] sm:$0xff]
        %v2190 = vld [vmem:[#allocation3 + $0x88] sm:$0xff]
        %v2191 = vld [vmem:[#allocation3 + $0x90] sm:$0xff]
        %v2192 = vld [vmem:[#allocation3 + $0x98] sm:$0xff]
        %v2193 = vld [vmem:[#allocation3 + $0xa0] sm:$0xff]
        %v2194 = vld [vmem:[#allocation3 + $0xa8] sm:$0xff]
        %v2195 = vld [vmem:[#allocation3 + $0xb0] sm:$0xff]
        %v2196 = vld [vmem:[#allocation3 + $0xb8] sm:$0xff]
        %v2197 = vld [vmem:[#allocation3 + $0xc0] sm:$0xff]
        %v2198 = vld [vmem:[#allocation3 + $0xc8] sm:$0xff]
        %v2199 = vld [vmem:[#allocation3 + $0xd0] sm:$0xff]
        %v2200 = vld [vmem:[#allocation3 + $0xd8] sm:$0xff]
        %v2201 = vld [vmem:[#allocation3 + $0xe0] sm:$0xff]
        %v2202 = vld [vmem:[#allocation3 + $0xe8] sm:$0xff]
        %v2203 = vld [vmem:[#allocation3 + $0xf0] sm:$0xff]
        %v2204 = vld [vmem:[#allocation3 + $0xf8] sm:$0xff]
        %v2205 = vld [vmem:[#allocation3 + $0x100] sm:$0xff]
        %v2206 = vld [vmem:[#allocation3 + $0x108] sm:$0xff]
        %v2207 = vld [vmem:[#allocation3 + $0x110] sm:$0xff]
        %v2208 = vld [vmem:[#allocation3 + $0x118] sm:$0xff]
        %v2209 = vld [vmem:[#allocation3 + $0x120] sm:$0xff]
        %v2210 = vld [vmem:[#allocation3 + $0x128] sm:$0xff]
        %v2211 = vld [vmem:[#allocation3 + $0x130] sm:$0xff]
        %v2212 = vld [vmem:[#allocation3 + $0x138] sm:$0xff]
        %v2213 = vld [vmem:[#allocation3 + $0x140] sm:$0xff]
        %v2214 = vld [vmem:[#allocation3 + $0x148] sm:$0xff]
        %v2215 = vld [vmem:[#allocation3 + $0x150] sm:$0xff]
        %v2216 = vld [vmem:[#allocation3 + $0x158] sm:$0xff]
        %v2217 = vld [vmem:[#allocation3 + $0x160] sm:$0xff]
        %v2218 = vld [vmem:[#allocation3 + $0x168] sm:$0xff]
        %v2219 = vld [vmem:[#allocation3 + $0x170] sm:$0xff]
        %v2220 = vld [vmem:[#allocation3 + $0x178] sm:$0xff]
        %v2221 = vld [vmem:[#allocation3 + $0x180] sm:$0xff]
        %v2222 = vld [vmem:[#allocation3 + $0x188] sm:$0xff]
        %v2223 = vld [vmem:[#allocation3 + $0x190] sm:$0xff]
        %v2224 = vld [vmem:[#allocation3 + $0x198] sm:$0xff]
        %v2225 = vld [vmem:[#allocation3 + $0x1a0] sm:$0xff]
        %v2226 = vld [vmem:[#allocation3 + $0x1a8] sm:$0xff]
        %v2227 = vld [vmem:[#allocation3 + $0x1b0] sm:$0xff]
        %v2228 = vld [vmem:[#allocation3 + $0x1b8] sm:$0xff]
        %v2229 = vld [vmem:[#allocation3 + $0x1c0] sm:$0xff]
        %v2230 = vld [vmem:[#allocation3 + $0x1c8] sm:$0xff]
        %v2231 = vld [vmem:[#allocation3 + $0x1d0] sm:$0xff]
        %v2232 = vld [vmem:[#allocation3 + $0x1d8] sm:$0xff]
        %v2233 = vld [vmem:[#allocation3 + $0x1e0] sm:$0xff]
        %v2234 = vld [vmem:[#allocation3 + $0x1e8] sm:$0xff]
        %v2235 = vld [vmem:[#allocation3 + $0x1f0] sm:$0xff]
        %v2236 = vld [vmem:[#allocation3 + $0x1f8] sm:$0xff]
        %v2237 = vld [vmem:[#allocation3 + $0x200] sm:$0xff]
        %v2238 = vld [vmem:[#allocation3 + $0x208] sm:$0xff]
        %v2239 = vld [vmem:[#allocation3 + $0x210] sm:$0xff]
        %v2240 = vld [vmem:[#allocation3 + $0x218] sm:$0xff]
        %v2241 = vld [vmem:[#allocation3 + $0x220] sm:$0xff]
        %v2242 = vld [vmem:[#allocation3 + $0x228] sm:$0xff]
        %v2243 = vld [vmem:[#allocation3 + $0x230] sm:$0xff]
        %v2244 = vld [vmem:[#allocation3 + $0x238] sm:$0xff]
        %v2245 = vld [vmem:[#allocation3 + $0x240] sm:$0xff]
        %v2246 = vld [vmem:[#allocation3 + $0x248] sm:$0xff]
        %v2247 = vld [vmem:[#allocation3 + $0x250] sm:$0xff]
        %v2248 = vld [vmem:[#allocation3 + $0x258] sm:$0xff]
        %v2249 = vld [vmem:[#allocation3 + $0x260] sm:$0xff]
        %v2250 = vld [vmem:[#allocation3 + $0x268] sm:$0xff]
        %v2251 = vld [vmem:[#allocation3 + $0x270] sm:$0xff]
        %v2252 = vld [vmem:[#allocation3 + $0x278] sm:$0xff]
        %v2253 = vld [vmem:[#allocation3 + $0x280] sm:$0xff]
        %v2254 = vld [vmem:[#allocation3 + $0x288] sm:$0xff]
        %v2255 = vld [vmem:[#allocation3 + $0x290] sm:$0xff]
        %v2256 = vld [vmem:[#allocation3 + $0x298] sm:$0xff]
        %v2257 = vld [vmem:[#allocation3 + $0x2a0] sm:$0xff]
        %v2258 = vld [vmem:[#allocation3 + $0x2a8] sm:$0xff]
        %v2259 = vld [vmem:[#allocation3 + $0x2b0] sm:$0xff]
        %v2260 = vld [vmem:[#allocation3 + $0x2b8] sm:$0xff]
        %v2261 = vld [vmem:[#allocation3 + $0x2c0] sm:$0xff]
        %v2262 = vld [vmem:[#allocation3 + $0x2c8] sm:$0xff]
        %v2263 = vld [vmem:[#allocation3 + $0x2d0] sm:$0xff]
        %v2264 = vld [vmem:[#allocation3 + $0x2d8] sm:$0xff]
        %v2265 = vld [vmem:[#allocation3 + $0x2e0] sm:$0xff]
        %v2266 = vld [vmem:[#allocation3 + $0x2e8] sm:$0xff]
        %v2267 = vld [vmem:[#allocation3 + $0x2f0] sm:$0xff]
        %v2268 = vld [vmem:[#allocation3 + $0x2f8] sm:$0xff]
        %v2269 = vld [vmem:[#allocation3 + $0x300] sm:$0xff]
        %v2270 = vld [vmem:[#allocation3 + $0x308] sm:$0xff]
        %v2271 = vld [vmem:[#allocation3 + $0x310] sm:$0xff]
        %v2272 = vld [vmem:[#allocation3 + $0x318] sm:$0xff]
        %v2273 = vld [vmem:[#allocation3 + $0x320] sm:$0xff]
        %v2274 = vld [vmem:[#allocation3 + $0x328] sm:$0xff]
        %v2275 = vld [vmem:[#allocation3 + $0x330] sm:$0xff]
        %v2276 = vld [vmem:[#allocation3 + $0x338] sm:$0xff]
        %v2277 = vld [vmem:[#allocation3 + $0x340] sm:$0xff]
        %v2278 = vld [vmem:[#allocation3 + $0x348] sm:$0xff]
        %v2279 = vld [vmem:[#allocation3 + $0x350] sm:$0xff]
        %v2280 = vld [vmem:[#allocation3 + $0x358] sm:$0xff]
        %v2281 = vld [vmem:[#allocation3 + $0x360] sm:$0xff]
        %v2282 = vld [vmem:[#allocation3 + $0x368] sm:$0xff]
        %v2283 = vld [vmem:[#allocation3 + $0x370] sm:$0xff]
        %v2284 = vld [vmem:[#allocation3 + $0x378] sm:$0xff]
        %v2285 = vld [vmem:[#allocation3 + $0x380] sm:$0xff]
        %v2286 = vld [vmem:[#allocation3 + $0x388] sm:$0xff]
        %v2287 = vld [vmem:[#allocation3 + $0x390] sm:$0xff]
        %v2288 = vld [vmem:[#allocation3 + $0x398] sm:$0xff]
        %v2289 = vld [vmem:[#allocation3 + $0x3a0] sm:$0xff]
        %v2290 = vld [vmem:[#allocation3 + $0x3a8] sm:$0xff]
        %v2291 = vld [vmem:[#allocation3 + $0x3b0] sm:$0xff]
        %v2292 = vld [vmem:[#allocation3 + $0x3b8] sm:$0xff]
        %v2293 = vld [vmem:[#allocation3 + $0x3c0] sm:$0xff]
        %v2294 = vld [vmem:[#allocation3 + $0x3c8] sm:$0xff]
        %v2295 = vld [vmem:[#allocation3 + $0x3d0] sm:$0xff]
        %v2296 = vld [vmem:[#allocation3 + $0x3d8] sm:$0xff]
        %v2297 = vld [vmem:[#allocation3 + $0x3e0] sm:$0xff]
        %v2298 = vld [vmem:[#allocation3 + $0x3e8] sm:$0xff]
        %v2299 = vld [vmem:[#allocation3 + $0x3f0] sm:$0xff]
        %v2300 = vld [vmem:[#allocation3 + $0x3f8] sm:$0xff]
        %v2301 = vld [vmem:[#allocation3 + $0x400] sm:$0xff]
        %v2302 = vld [vmem:[#allocation3 + $0x408] sm:$0xff]
        %v2303 = vld [vmem:[#allocation3 + $0x410] sm:$0xff]
        %v2304 = vld [vmem:[#allocation3 + $0x418] sm:$0xff]
        %v2305 = vld [vmem:[#allocation3 + $0x420] sm:$0xff]
        %v2306 = vld [vmem:[#allocation3 + $0x428] sm:$0xff]
        %v2307 = vld [vmem:[#allocation3 + $0x430] sm:$0xff]
        %v2308 = vld [vmem:[#allocation3 + $0x438] sm:$0xff]
        %v2309 = vld [vmem:[#allocation3 + $0x440] sm:$0xff]
        %v2310 = vld [vmem:[#allocation3 + $0x448] sm:$0xff]
        %v2311 = vld [vmem:[#allocation3 + $0x450] sm:$0xff]
        %v2312 = vld [vmem:[#allocation3 + $0x458] sm:$0xff]
        %v2313 = vld [vmem:[#allocation3 + $0x460] sm:$0xff]
        %v2314 = vld [vmem:[#allocation3 + $0x468] sm:$0xff]
        %v2315 = vld [vmem:[#allocation3 + $0x470] sm:$0xff]
        %v2316 = vld [vmem:[#allocation3 + $0x478] sm:$0xff]
        %vm2317 = vcmask 130048
        %v2319 = vsel %vm2317, %v2170, 0
        %v2322 = vsel %vm2317, %v2172, 0
        %2324 = vmatpush.msra.mxu0 %v2293
        %2325 = vmatpush.msra.mxu0 %v2285
        %2326 = vmatpush.msra.mxu0 %v2277
        %2327 = vmatpush.msra.mxu0 %v2269
        %2328 = vmatpush.msra.mxu0 %v2261
        %2329 = vmatpush.msra.mxu0 %v2253
        %2330 = vmatpush.msra.mxu0 %v2245
        %2331 = vmatpush.msra.mxu0 %v2237
        %2332 = vmatpush.msra.mxu0 %v2229
        %2333 = vmatpush.msra.mxu0 %v2221
        %2334 = vmatpush.msra.mxu0 %v2213
        %2335 = vmatpush.msra.mxu0 %v2205
        %2336 = vmatpush.msra.mxu0 %v2197
        %2337 = vmatpush.msra.mxu0 %v2189
        %2338 = vmatpush.msra.mxu0 %v2181
        %2339 = vmatpush.msra.mxu0 %v2173
        %2340 = vmatmul.f32.gmra.mxu0 %v2169
        %v2341 = vpop.f32.mrf.mxu0
        %v2342 = vadd.f32 0.0, %v2341
        %2343 = vmatmul.f32.gmra.mxu0 %v2171
        %v2344 = vpop.f32.mrf.mxu0
        %v2345 = vadd.f32 0.0, %v2344
        %2346 = vdwg.mxu0
        %2347 = vmatpush.msra.mxu0 0.0
        %2348 = vmatpush.msra.mxu0 0.0
        %2349 = vmatpush.msra.mxu0 0.0
        %2350 = vmatpush.msra.mxu0 0.0
        %2351 = vmatpush.msra.mxu0 0.0
        %2352 = vmatpush.msra.mxu0 0.0
        %2353 = vmatpush.msra.mxu0 0.0
        %2354 = vmatpush.msra.mxu0 0.0
        %2355 = vmatpush.msra.mxu0 0.0
        %2356 = vmatpush.msra.mxu0 0.0
        %2357 = vmatpush.msra.mxu0 0.0
        %2358 = vmatpush.msra.mxu0 0.0
        %2359 = vmatpush.msra.mxu0 0.0
        %2360 = vmatpush.msra.mxu0 0.0
        %2361 = vmatpush.msra.mxu0 %v2309
        %2362 = vmatpush.msra.mxu0 %v2301
        %2363 = vmatmul.f32.gmra.mxu0 %v2319
        %v2364 = vpop.f32.mrf.mxu0
        %v2365 = vadd.f32 %v2342, %v2364
        %2366 = vmatmul.f32.gmra.mxu0 %v2322
        %v2367 = vpop.f32.mrf.mxu0
        %v2368 = vadd.f32 %v2345, %v2367
        %2369 = vdwg.mxu0
        %2370 = vmatpush.msra.mxu0 %v2294
        %2371 = vmatpush.msra.mxu0 %v2286
        %2372 = vmatpush.msra.mxu0 %v2278
        %2373 = vmatpush.msra.mxu0 %v2270
        %2374 = vmatpush.msra.mxu0 %v2262
        %2375 = vmatpush.msra.mxu0 %v2254
        %2376 = vmatpush.msra.mxu0 %v2246
        %2377 = vmatpush.msra.mxu0 %v2238
        %2378 = vmatpush.msra.mxu0 %v2230
        %2379 = vmatpush.msra.mxu0 %v2222
        %2380 = vmatpush.msra.mxu0 %v2214
        %2381 = vmatpush.msra.mxu0 %v2206
        %2382 = vmatpush.msra.mxu0 %v2198
        %2383 = vmatpush.msra.mxu0 %v2190
        %2384 = vmatpush.msra.mxu0 %v2182
        %2385 = vmatpush.msra.mxu0 %v2174
        %2386 = vmatmul.f32.gmra.mxu0 %v2169
        %v2387 = vpop.f32.mrf.mxu0
        %v2388 = vadd.f32 0.0, %v2387
        %2389 = vmatmul.f32.gmra.mxu0 %v2171
        %v2390 = vpop.f32.mrf.mxu0
        %v2391 = vadd.f32 0.0, %v2390
        %2392 = vdwg.mxu0
        %2393 = vmatpush.msra.mxu0 0.0
        %2394 = vmatpush.msra.mxu0 0.0
        %2395 = vmatpush.msra.mxu0 0.0
        %2396 = vmatpush.msra.mxu0 0.0
        %2397 = vmatpush.msra.mxu0 0.0
        %2398 = vmatpush.msra.mxu0 0.0
        %2399 = vmatpush.msra.mxu0 0.0
        %2400 = vmatpush.msra.mxu0 0.0
        %2401 = vmatpush.msra.mxu0 0.0
        %2402 = vmatpush.msra.mxu0 0.0
        %2403 = vmatpush.msra.mxu0 0.0
        %2404 = vmatpush.msra.mxu0 0.0
        %2405 = vmatpush.msra.mxu0 0.0
        %2406 = vmatpush.msra.mxu0 0.0
        %2407 = vmatpush.msra.mxu0 %v2310
        %2408 = vmatpush.msra.mxu0 %v2302
        %2409 = vmatmul.f32.gmra.mxu0 %v2319
        %v2410 = vpop.f32.mrf.mxu0
        %v2411 = vadd.f32 %v2388, %v2410
        %2412 = vmatmul.f32.gmra.mxu0 %v2322
        %v2413 = vpop.f32.mrf.mxu0
        %v2414 = vadd.f32 %v2391, %v2413
        %2415 = vdwg.mxu0
        %2416 = vmatpush.msra.mxu0 %v2295
        %2417 = vmatpush.msra.mxu0 %v2287
        %2418 = vmatpush.msra.mxu0 %v2279
        %2419 = vmatpush.msra.mxu0 %v2271
        %2420 = vmatpush.msra.mxu0 %v2263
        %2421 = vmatpush.msra.mxu0 %v2255
        %2422 = vmatpush.msra.mxu0 %v2247
        %2423 = vmatpush.msra.mxu0 %v2239
        %2424 = vmatpush.msra.mxu0 %v2231
        %2425 = vmatpush.msra.mxu0 %v2223
        %2426 = vmatpush.msra.mxu0 %v2215
        %2427 = vmatpush.msra.mxu0 %v2207
        %2428 = vmatpush.msra.mxu0 %v2199
        %2429 = vmatpush.msra.mxu0 %v2191
        %2430 = vmatpush.msra.mxu0 %v2183
        %2431 = vmatpush.msra.mxu0 %v2175
        %2432 = vmatmul.f32.gmra.mxu0 %v2169
        %v2433 = vpop.f32.mrf.mxu0
        %v2434 = vadd.f32 0.0, %v2433
        %2435 = vmatmul.f32.gmra.mxu0 %v2171
        %v2436 = vpop.f32.mrf.mxu0
        %v2437 = vadd.f32 0.0, %v2436
        %2438 = vdwg.mxu0
        %2439 = vmatpush.msra.mxu0 0.0
        %2440 = vmatpush.msra.mxu0 0.0
        %2441 = vmatpush.msra.mxu0 0.0
        %2442 = vmatpush.msra.mxu0 0.0
        %2443 = vmatpush.msra.mxu0 0.0
        %2444 = vmatpush.msra.mxu0 0.0
        %2445 = vmatpush.msra.mxu0 0.0
        %2446 = vmatpush.msra.mxu0 0.0
        %2447 = vmatpush.msra.mxu0 0.0
        %2448 = vmatpush.msra.mxu0 0.0
        %2449 = vmatpush.msra.mxu0 0.0
        %2450 = vmatpush.msra.mxu0 0.0
        %2451 = vmatpush.msra.mxu0 0.0
        %2452 = vmatpush.msra.mxu0 0.0
        %2453 = vmatpush.msra.mxu0 %v2311
        %2454 = vmatpush.msra.mxu0 %v2303
        %2455 = vmatmul.f32.gmra.mxu0 %v2319
        %v2456 = vpop.f32.mrf.mxu0
        %v2457 = vadd.f32 %v2434, %v2456
        %2458 = vmatmul.f32.gmra.mxu0 %v2322
        %v2459 = vpop.f32.mrf.mxu0
        %v2460 = vadd.f32 %v2437, %v2459
        %2461 = vdwg.mxu0
        %2462 = vmatpush.msra.mxu0 %v2296
        %2463 = vmatpush.msra.mxu0 %v2288
        %2464 = vmatpush.msra.mxu0 %v2280
        %2465 = vmatpush.msra.mxu0 %v2272
        %2466 = vmatpush.msra.mxu0 %v2264
        %2467 = vmatpush.msra.mxu0 %v2256
        %2468 = vmatpush.msra.mxu0 %v2248
        %2469 = vmatpush.msra.mxu0 %v2240
        %2470 = vmatpush.msra.mxu0 %v2232
        %2471 = vmatpush.msra.mxu0 %v2224
        %2472 = vmatpush.msra.mxu0 %v2216
        %2473 = vmatpush.msra.mxu0 %v2208
        %2474 = vmatpush.msra.mxu0 %v2200
        %2475 = vmatpush.msra.mxu0 %v2192
        %2476 = vmatpush.msra.mxu0 %v2184
        %2477 = vmatpush.msra.mxu0 %v2176
        %2478 = vmatmul.f32.gmra.mxu0 %v2169
        %v2479 = vpop.f32.mrf.mxu0
        %v2480 = vadd.f32 0.0, %v2479
        %2481 = vmatmul.f32.gmra.mxu0 %v2171
        %v2482 = vpop.f32.mrf.mxu0
        %v2483 = vadd.f32 0.0, %v2482
        %2484 = vdwg.mxu0
        %2485 = vmatpush.msra.mxu0 0.0
        %2486 = vmatpush.msra.mxu0 0.0
        %2487 = vmatpush.msra.mxu0 0.0
        %2488 = vmatpush.msra.mxu0 0.0
        %2489 = vmatpush.msra.mxu0 0.0
        %2490 = vmatpush.msra.mxu0 0.0
        %2491 = vmatpush.msra.mxu0 0.0
        %2492 = vmatpush.msra.mxu0 0.0
        %2493 = vmatpush.msra.mxu0 0.0
        %2494 = vmatpush.msra.mxu0 0.0
        %2495 = vmatpush.msra.mxu0 0.0
        %2496 = vmatpush.msra.mxu0 0.0
        %2497 = vmatpush.msra.mxu0 0.0
        %2498 = vmatpush.msra.mxu0 0.0
        %2499 = vmatpush.msra.mxu0 %v2312
        %2500 = vmatpush.msra.mxu0 %v2304
        %2501 = vmatmul.f32.gmra.mxu0 %v2319
        %v2502 = vpop.f32.mrf.mxu0
        %v2503 = vadd.f32 %v2480, %v2502
        %2504 = vmatmul.f32.gmra.mxu0 %v2322
        %v2505 = vpop.f32.mrf.mxu0
        %v2506 = vadd.f32 %v2483, %v2505
        %2507 = vdwg.mxu0
        %2508 = vmatpush.msra.mxu0 %v2297
        %2509 = vmatpush.msra.mxu0 %v2289
        %2510 = vmatpush.msra.mxu0 %v2281
        %2511 = vmatpush.msra.mxu0 %v2273
        %2512 = vmatpush.msra.mxu0 %v2265
        %2513 = vmatpush.msra.mxu0 %v2257
        %2514 = vmatpush.msra.mxu0 %v2249
        %2515 = vmatpush.msra.mxu0 %v2241
        %2516 = vmatpush.msra.mxu0 %v2233
        %2517 = vmatpush.msra.mxu0 %v2225
        %2518 = vmatpush.msra.mxu0 %v2217
        %2519 = vmatpush.msra.mxu0 %v2209
        %2520 = vmatpush.msra.mxu0 %v2201
        %2521 = vmatpush.msra.mxu0 %v2193
        %2522 = vmatpush.msra.mxu0 %v2185
        %2523 = vmatpush.msra.mxu0 %v2177
        %2524 = vmatmul.f32.gmra.mxu0 %v2169
        %v2525 = vpop.f32.mrf.mxu0
        %v2526 = vadd.f32 0.0, %v2525
        %2527 = vmatmul.f32.gmra.mxu0 %v2171
        %v2528 = vpop.f32.mrf.mxu0
        %v2529 = vadd.f32 0.0, %v2528
        %2530 = vdwg.mxu0
        %2531 = vmatpush.msra.mxu0 0.0
        %2532 = vmatpush.msra.mxu0 0.0
        %2533 = vmatpush.msra.mxu0 0.0
        %2534 = vmatpush.msra.mxu0 0.0
        %2535 = vmatpush.msra.mxu0 0.0
        %2536 = vmatpush.msra.mxu0 0.0
        %2537 = vmatpush.msra.mxu0 0.0
        %2538 = vmatpush.msra.mxu0 0.0
        %2539 = vmatpush.msra.mxu0 0.0
        %2540 = vmatpush.msra.mxu0 0.0
        %2541 = vmatpush.msra.mxu0 0.0
        %2542 = vmatpush.msra.mxu0 0.0
        %2543 = vmatpush.msra.mxu0 0.0
        %2544 = vmatpush.msra.mxu0 0.0
        %2545 = vmatpush.msra.mxu0 %v2313
        %2546 = vmatpush.msra.mxu0 %v2305
        %2547 = vmatmul.f32.gmra.mxu0 %v2319
        %v2548 = vpop.f32.mrf.mxu0
        %v2549 = vadd.f32 %v2526, %v2548
        %2550 = vmatmul.f32.gmra.mxu0 %v2322
        %v2551 = vpop.f32.mrf.mxu0
        %v2552 = vadd.f32 %v2529, %v2551
        %2553 = vdwg.mxu0
        %2554 = vmatpush.msra.mxu0 %v2298
        %2555 = vmatpush.msra.mxu0 %v2290
        %2556 = vmatpush.msra.mxu0 %v2282
        %2557 = vmatpush.msra.mxu0 %v2274
        %2558 = vmatpush.msra.mxu0 %v2266
        %2559 = vmatpush.msra.mxu0 %v2258
        %2560 = vmatpush.msra.mxu0 %v2250
        %2561 = vmatpush.msra.mxu0 %v2242
        %2562 = vmatpush.msra.mxu0 %v2234
        %2563 = vmatpush.msra.mxu0 %v2226
        %2564 = vmatpush.msra.mxu0 %v2218
        %2565 = vmatpush.msra.mxu0 %v2210
        %2566 = vmatpush.msra.mxu0 %v2202
        %2567 = vmatpush.msra.mxu0 %v2194
        %2568 = vmatpush.msra.mxu0 %v2186
        %2569 = vmatpush.msra.mxu0 %v2178
        %2570 = vmatmul.f32.gmra.mxu0 %v2169
        %v2571 = vpop.f32.mrf.mxu0
        %v2572 = vadd.f32 0.0, %v2571
        %2573 = vmatmul.f32.gmra.mxu0 %v2171
        %v2574 = vpop.f32.mrf.mxu0
        %v2575 = vadd.f32 0.0, %v2574
        %2576 = vdwg.mxu0
        %2577 = vmatpush.msra.mxu0 0.0
        %2578 = vmatpush.msra.mxu0 0.0
        %2579 = vmatpush.msra.mxu0 0.0
        %2580 = vmatpush.msra.mxu0 0.0
        %2581 = vmatpush.msra.mxu0 0.0
        %2582 = vmatpush.msra.mxu0 0.0
        %2583 = vmatpush.msra.mxu0 0.0
        %2584 = vmatpush.msra.mxu0 0.0
        %2585 = vmatpush.msra.mxu0 0.0
        %2586 = vmatpush.msra.mxu0 0.0
        %2587 = vmatpush.msra.mxu0 0.0
        %2588 = vmatpush.msra.mxu0 0.0
        %2589 = vmatpush.msra.mxu0 0.0
        %2590 = vmatpush.msra.mxu0 0.0
        %2591 = vmatpush.msra.mxu0 %v2314
        %2592 = vmatpush.msra.mxu0 %v2306
        %2593 = vmatmul.f32.gmra.mxu0 %v2319
        %v2594 = vpop.f32.mrf.mxu0
        %v2595 = vadd.f32 %v2572, %v2594
        %2596 = vmatmul.f32.gmra.mxu0 %v2322
        %v2597 = vpop.f32.mrf.mxu0
        %v2598 = vadd.f32 %v2575, %v2597
        %2599 = vdwg.mxu0
        %2600 = vmatpush.msra.mxu0 %v2299
        %2601 = vmatpush.msra.mxu0 %v2291
        %2602 = vmatpush.msra.mxu0 %v2283
        %2603 = vmatpush.msra.mxu0 %v2275
        %2604 = vmatpush.msra.mxu0 %v2267
        %2605 = vmatpush.msra.mxu0 %v2259
        %2606 = vmatpush.msra.mxu0 %v2251
        %2607 = vmatpush.msra.mxu0 %v2243
        %2608 = vmatpush.msra.mxu0 %v2235
        %2609 = vmatpush.msra.mxu0 %v2227
        %2610 = vmatpush.msra.mxu0 %v2219
        %2611 = vmatpush.msra.mxu0 %v2211
        %2612 = vmatpush.msra.mxu0 %v2203
        %2613 = vmatpush.msra.mxu0 %v2195
        %2614 = vmatpush.msra.mxu0 %v2187
        %2615 = vmatpush.msra.mxu0 %v2179
        %2616 = vmatmul.f32.gmra.mxu0 %v2169
        %v2617 = vpop.f32.mrf.mxu0
        %v2618 = vadd.f32 0.0, %v2617
        %2619 = vmatmul.f32.gmra.mxu0 %v2171
        %v2620 = vpop.f32.mrf.mxu0
        %v2621 = vadd.f32 0.0, %v2620
        %2622 = vdwg.mxu0
        %2623 = vmatpush.msra.mxu0 0.0
        %2624 = vmatpush.msra.mxu0 0.0
        %2625 = vmatpush.msra.mxu0 0.0
        %2626 = vmatpush.msra.mxu0 0.0
        %2627 = vmatpush.msra.mxu0 0.0
        %2628 = vmatpush.msra.mxu0 0.0
        %2629 = vmatpush.msra.mxu0 0.0
        %2630 = vmatpush.msra.mxu0 0.0
        %2631 = vmatpush.msra.mxu0 0.0
        %2632 = vmatpush.msra.mxu0 0.0
        %2633 = vmatpush.msra.mxu0 0.0
        %2634 = vmatpush.msra.mxu0 0.0
        %2635 = vmatpush.msra.mxu0 0.0
        %2636 = vmatpush.msra.mxu0 0.0
        %2637 = vmatpush.msra.mxu0 %v2315
        %2638 = vmatpush.msra.mxu0 %v2307
        %2639 = vmatmul.f32.gmra.mxu0 %v2319
        %v2640 = vpop.f32.mrf.mxu0
        %v2641 = vadd.f32 %v2618, %v2640
        %2642 = vmatmul.f32.gmra.mxu0 %v2322
        %v2643 = vpop.f32.mrf.mxu0
        %v2644 = vadd.f32 %v2621, %v2643
        %2645 = vdwg.mxu0
        %2646 = vmatpush.msra.mxu0 %v2300
        %2647 = vmatpush.msra.mxu0 %v2292
        %2648 = vmatpush.msra.mxu0 %v2284
        %2649 = vmatpush.msra.mxu0 %v2276
        %2650 = vmatpush.msra.mxu0 %v2268
        %2651 = vmatpush.msra.mxu0 %v2260
        %2652 = vmatpush.msra.mxu0 %v2252
        %2653 = vmatpush.msra.mxu0 %v2244
        %2654 = vmatpush.msra.mxu0 %v2236
        %2655 = vmatpush.msra.mxu0 %v2228
        %2656 = vmatpush.msra.mxu0 %v2220
        %2657 = vmatpush.msra.mxu0 %v2212
        %2658 = vmatpush.msra.mxu0 %v2204
        %2659 = vmatpush.msra.mxu0 %v2196
        %2660 = vmatpush.msra.mxu0 %v2188
        %2661 = vmatpush.msra.mxu0 %v2180
        %2662 = vmatmul.f32.gmra.mxu0 %v2169
        %v2663 = vpop.f32.mrf.mxu0
        %v2664 = vadd.f32 0.0, %v2663
        %2665 = vmatmul.f32.gmra.mxu0 %v2171
        %v2666 = vpop.f32.mrf.mxu0
        %v2667 = vadd.f32 0.0, %v2666
        %2668 = vdwg.mxu0
        %2669 = vmatpush.msra.mxu0 0.0
        %2670 = vmatpush.msra.mxu0 0.0
        %2671 = vmatpush.msra.mxu0 0.0
        %2672 = vmatpush.msra.mxu0 0.0
        %2673 = vmatpush.msra.mxu0 0.0
        %2674 = vmatpush.msra.mxu0 0.0
        %2675 = vmatpush.msra.mxu0 0.0
        %2676 = vmatpush.msra.mxu0 0.0
        %2677 = vmatpush.msra.mxu0 0.0
        %2678 = vmatpush.msra.mxu0 0.0
        %2679 = vmatpush.msra.mxu0 0.0
        %2680 = vmatpush.msra.mxu0 0.0
        %2681 = vmatpush.msra.mxu0 0.0
        %2682 = vmatpush.msra.mxu0 0.0
        %2683 = vmatpush.msra.mxu0 %v2316
        %2684 = vmatpush.msra.mxu0 %v2308
        %2685 = vmatmul.f32.gmra.mxu0 %v2319
        %v2686 = vpop.f32.mrf.mxu0
        %v2687 = vadd.f32 %v2664, %v2686
        %2688 = vmatmul.f32.gmra.mxu0 %v2322
        %v2689 = vpop.f32.mrf.mxu0
        %v2690 = vadd.f32 %v2667, %v2689
        %2691 = vdwg.mxu0
        %v2692 = vld [vmem:[%s355] sm:$0xff]
        %v2693 = vld [vmem:[%s355 + $0x8] sm:$0xff]
        %v2694 = vld [vmem:[%s8] sm:$0xff]
        %v2695 = vld [vmem:[%s8 + $0x8] sm:$0xff]
        %v2696 = vld [vmem:[%s9] sm:$0xff]
        %v2697 = vld [vmem:[%s9 + $0x8] sm:$0xff]
        %2699 = vset.pattern.permute.xlu0 0
        %2700 = vperm.xlu0 %2699, %v2696
        %v2701 = vpop.permute.xlu0 %2700
        %2704 = vset.pattern.permute.xlu0 0
        %2705 = vperm.xlu0 %2704, %v2697
        %v2706 = vpop.permute.xlu0 %2705
        %vm2708 = vcmask 64512
        %v2710 = vsel %vm2708, %v2694, 0
        %v2713 = vsel %vm2708, %v2695, 0
        %2715 = vmatpush.msra.mxu0 0.0
        %2716 = vmatpush.msra.mxu0 0.0
        %2717 = vmatpush.msra.mxu0 0.0
        %2718 = vmatpush.msra.mxu0 0.0
        %2719 = vmatpush.msra.mxu0 0.0
        %2720 = vmatpush.msra.mxu0 0.0
        %2721 = vmatpush.msra.mxu0 0.0
        %2722 = vmatpush.msra.mxu0 0.0
        %2723 = vmatpush.msra.mxu0 0.0
        %2724 = vmatpush.msra.mxu0 0.0
        %2725 = vmatpush.msra.mxu0 0.0
        %2726 = vmatpush.msra.mxu0 0.0
        %2727 = vmatpush.msra.mxu0 0.0
        %2728 = vmatpush.msra.mxu0 0.0
        %2729 = vmatpush.msra.mxu0 0.0
        %2730 = vmatpush.msra.mxu0 %v2692
        %2731 = vmatmul.f32.gmra.mxu0 %v2710
        %v2732 = vpop.f32.mrf.mxu0
        %v2733 = vadd.f32 %v2701, %v2732
        %2734 = vmatmul.f32.gmra.mxu0 %v2713
        %v2735 = vpop.f32.mrf.mxu0
        %v2736 = vadd.f32 %v2706, %v2735
        %2737 = vdwg.mxu0
        %2738 = vmatpush.msra.mxu0 0.0
        %2739 = vmatpush.msra.mxu0 0.0
        %2740 = vmatpush.msra.mxu0 0.0
        %2741 = vmatpush.msra.mxu0 0.0
        %2742 = vmatpush.msra.mxu0 0.0
        %2743 = vmatpush.msra.mxu0 0.0
        %2744 = vmatpush.msra.mxu0 0.0
        %2745 = vmatpush.msra.mxu0 0.0
        %2746 = vmatpush.msra.mxu0 0.0
        %2747 = vmatpush.msra.mxu0 0.0
        %2748 = vmatpush.msra.mxu0 0.0
        %2749 = vmatpush.msra.mxu0 0.0
        %2750 = vmatpush.msra.mxu0 0.0
        %2751 = vmatpush.msra.mxu0 0.0
        %2752 = vmatpush.msra.mxu0 0.0
        %2753 = vmatpush.msra.mxu0 %v2693
        %2754 = vmatmul.f32.gmra.mxu0 %v2710
        %v2755 = vpop.f32.mrf.mxu0
        %v2756 = vadd.f32 %v2701, %v2755
        %2757 = vmatmul.f32.gmra.mxu0 %v2713
        %v2758 = vpop.f32.mrf.mxu0
        %v2759 = vadd.f32 %v2706, %v2758
        %2760 = vdwg.mxu0
        %v2761 = vadd.f32 %v2365, %v2733
        %v2762 = vadd.f32 %v2411, %v2756
        %v2763 = vadd.f32 %v2368, %v2736
        %v2764 = vadd.f32 %v2414, %v2759
        %2765 = vst [vmem:[%s397] sm:$0xff] %v2761
        %2766 = vst [vmem:[%s397 + $0x8] sm:$0xff] %v2762
        %2767 = vst [vmem:[%s397 + $0x10] sm:$0xff] %v2763
        %2768 = vst [vmem:[%s397 + $0x18] sm:$0xff] %v2764
        %v2769 = vld [vmem:[%s571] sm:$0xff]
        %v2770 = vld [vmem:[%s571 + $0x8] sm:$0xff]
        %v2771 = vld [vmem:[%s8] sm:$0xff]
        %v2772 = vld [vmem:[%s8 + $0x8] sm:$0xff]
        %v2773 = vld [vmem:[%s9] sm:$0xff]
        %v2774 = vld [vmem:[%s9 + $0x8] sm:$0xff]
        %2776 = vset.pattern.permute.xlu0 0
        %2777 = vperm.xlu0 %2776, %v2773
        %v2778 = vpop.permute.xlu0 %2777
        %2781 = vset.pattern.permute.xlu0 0
        %2782 = vperm.xlu0 %2781, %v2774
        %v2783 = vpop.permute.xlu0 %2782
        %v2786 = vsel %vm2708, %v2771, 0
        %v2789 = vsel %vm2708, %v2772, 0
        %2791 = vmatpush.msra.mxu0 0.0
        %2792 = vmatpush.msra.mxu0 0.0
        %2793 = vmatpush.msra.mxu0 0.0
        %2794 = vmatpush.msra.mxu0 0.0
        %2795 = vmatpush.msra.mxu0 0.0
        %2796 = vmatpush.msra.mxu0 0.0
        %2797 = vmatpush.msra.mxu0 0.0
        %2798 = vmatpush.msra.mxu0 0.0
        %2799 = vmatpush.msra.mxu0 0.0
        %2800 = vmatpush.msra.mxu0 0.0
        %2801 = vmatpush.msra.mxu0 0.0
        %2802 = vmatpush.msra.mxu0 0.0
        %2803 = vmatpush.msra.mxu0 0.0
        %2804 = vmatpush.msra.mxu0 0.0
        %2805 = vmatpush.msra.mxu0 0.0
        %2806 = vmatpush.msra.mxu0 %v2769
        %2807 = vmatmul.f32.gmra.mxu0 %v2786
        %v2808 = vpop.f32.mrf.mxu0
        %v2809 = vadd.f32 %v2778, %v2808
        %2810 = vmatmul.f32.gmra.mxu0 %v2789
        %v2811 = vpop.f32.mrf.mxu0
        %v2812 = vadd.f32 %v2783, %v2811
        %2813 = vdwg.mxu0
        %2814 = vmatpush.msra.mxu0 0.0
        %2815 = vmatpush.msra.mxu0 0.0
        %2816 = vmatpush.msra.mxu0 0.0
        %2817 = vmatpush.msra.mxu0 0.0
        %2818 = vmatpush.msra.mxu0 0.0
        %2819 = vmatpush.msra.mxu0 0.0
        %2820 = vmatpush.msra.mxu0 0.0
        %2821 = vmatpush.msra.mxu0 0.0
        %2822 = vmatpush.msra.mxu0 0.0
        %2823 = vmatpush.msra.mxu0 0.0
        %2824 = vmatpush.msra.mxu0 0.0
        %2825 = vmatpush.msra.mxu0 0.0
        %2826 = vmatpush.msra.mxu0 0.0
        %2827 = vmatpush.msra.mxu0 0.0
        %2828 = vmatpush.msra.mxu0 0.0
        %2829 = vmatpush.msra.mxu0 %v2770
        %2830 = vmatmul.f32.gmra.mxu0 %v2786
        %v2831 = vpop.f32.mrf.mxu0
        %v2832 = vadd.f32 %v2778, %v2831
        %2833 = vmatmul.f32.gmra.mxu0 %v2789
        %v2834 = vpop.f32.mrf.mxu0
        %v2835 = vadd.f32 %v2783, %v2834
        %2836 = vdwg.mxu0
        %v2837 = vadd.f32 %v2457, %v2809
        %v2838 = vadd.f32 %v2503, %v2832
        %v2839 = vadd.f32 %v2460, %v2812
        %v2840 = vadd.f32 %v2506, %v2835
        %s2841 = scalar_lea.vmem %s397, 32 [#allocation9]
        %2842 = vst [vmem:[%s2841] sm:$0xff] %v2837
        %2843 = vst [vmem:[%s2841 + $0x8] sm:$0xff] %v2838
        %2844 = vst [vmem:[%s2841 + $0x10] sm:$0xff] %v2839
        %2845 = vst [vmem:[%s2841 + $0x18] sm:$0xff] %v2840
        %v2846 = vld [vmem:[%s710] sm:$0xff]
        %v2847 = vld [vmem:[%s710 + $0x8] sm:$0xff]
        %v2848 = vld [vmem:[%s8] sm:$0xff]
        %v2849 = vld [vmem:[%s8 + $0x8] sm:$0xff]
        %v2850 = vld [vmem:[%s9] sm:$0xff]
        %v2851 = vld [vmem:[%s9 + $0x8] sm:$0xff]
        %2853 = vset.pattern.permute.xlu0 0
        %2854 = vperm.xlu0 %2853, %v2850
        %v2855 = vpop.permute.xlu0 %2854
        %2858 = vset.pattern.permute.xlu0 0
        %2859 = vperm.xlu0 %2858, %v2851
        %v2860 = vpop.permute.xlu0 %2859
        %v2863 = vsel %vm2708, %v2848, 0
        %v2866 = vsel %vm2708, %v2849, 0
        %2868 = vmatpush.msra.mxu0 0.0
        %2869 = vmatpush.msra.mxu0 0.0
        %2870 = vmatpush.msra.mxu0 0.0
        %2871 = vmatpush.msra.mxu0 0.0
        %2872 = vmatpush.msra.mxu0 0.0
        %2873 = vmatpush.msra.mxu0 0.0
        %2874 = vmatpush.msra.mxu0 0.0
        %2875 = vmatpush.msra.mxu0 0.0
        %2876 = vmatpush.msra.mxu0 0.0
        %2877 = vmatpush.msra.mxu0 0.0
        %2878 = vmatpush.msra.mxu0 0.0
        %2879 = vmatpush.msra.mxu0 0.0
        %2880 = vmatpush.msra.mxu0 0.0
        %2881 = vmatpush.msra.mxu0 0.0
        %2882 = vmatpush.msra.mxu0 0.0
        %2883 = vmatpush.msra.mxu0 %v2846
        %2884 = vmatmul.f32.gmra.mxu0 %v2863
        %v2885 = vpop.f32.mrf.mxu0
        %v2886 = vadd.f32 %v2855, %v2885
        %2887 = vmatmul.f32.gmra.mxu0 %v2866
        %v2888 = vpop.f32.mrf.mxu0
        %v2889 = vadd.f32 %v2860, %v2888
        %2890 = vdwg.mxu0
        %2891 = vmatpush.msra.mxu0 0.0
        %2892 = vmatpush.msra.mxu0 0.0
        %2893 = vmatpush.msra.mxu0 0.0
        %2894 = vmatpush.msra.mxu0 0.0
        %2895 = vmatpush.msra.mxu0 0.0
        %2896 = vmatpush.msra.mxu0 0.0
        %2897 = vmatpush.msra.mxu0 0.0
        %2898 = vmatpush.msra.mxu0 0.0
        %2899 = vmatpush.msra.mxu0 0.0
        %2900 = vmatpush.msra.mxu0 0.0
        %2901 = vmatpush.msra.mxu0 0.0
        %2902 = vmatpush.msra.mxu0 0.0
        %2903 = vmatpush.msra.mxu0 0.0
        %2904 = vmatpush.msra.mxu0 0.0
        %2905 = vmatpush.msra.mxu0 0.0
        %2906 = vmatpush.msra.mxu0 %v2847
        %2907 = vmatmul.f32.gmra.mxu0 %v2863
        %v2908 = vpop.f32.mrf.mxu0
        %v2909 = vadd.f32 %v2855, %v2908
        %2910 = vmatmul.f32.gmra.mxu0 %v2866
        %v2911 = vpop.f32.mrf.mxu0
        %v2912 = vadd.f32 %v2860, %v2911
        %2913 = vdwg.mxu0
        %v2914 = vadd.f32 %v2549, %v2886
        %v2915 = vadd.f32 %v2595, %v2909
        %v2916 = vadd.f32 %v2552, %v2889
        %v2917 = vadd.f32 %v2598, %v2912
        %s2918 = scalar_lea.vmem %s397, 64 [#allocation9]
        %2919 = vst [vmem:[%s2918] sm:$0xff] %v2914
        %2920 = vst [vmem:[%s2918 + $0x8] sm:$0xff] %v2915
        %2921 = vst [vmem:[%s2918 + $0x10] sm:$0xff] %v2916
        %2922 = vst [vmem:[%s2918 + $0x18] sm:$0xff] %v2917
        %v2923 = vld [vmem:[%s849] sm:$0xff]
        %v2924 = vld [vmem:[%s849 + $0x8] sm:$0xff]
        %v2925 = vld [vmem:[%s8] sm:$0xff]
        %v2926 = vld [vmem:[%s8 + $0x8] sm:$0xff]
        %v2927 = vld [vmem:[%s9] sm:$0xff]
        %v2928 = vld [vmem:[%s9 + $0x8] sm:$0xff]
        %2930 = vset.pattern.permute.xlu0 0
        %2931 = vperm.xlu0 %2930, %v2927
        %v2932 = vpop.permute.xlu0 %2931
        %2935 = vset.pattern.permute.xlu0 0
        %2936 = vperm.xlu0 %2935, %v2928
        %v2937 = vpop.permute.xlu0 %2936
        %v2940 = vsel %vm2708, %v2925, 0
        %v2943 = vsel %vm2708, %v2926, 0
        %2945 = vmatpush.msra.mxu0 0.0
        %2946 = vmatpush.msra.mxu0 0.0
        %2947 = vmatpush.msra.mxu0 0.0
        %2948 = vmatpush.msra.mxu0 0.0
        %2949 = vmatpush.msra.mxu0 0.0
        %2950 = vmatpush.msra.mxu0 0.0
        %2951 = vmatpush.msra.mxu0 0.0
        %2952 = vmatpush.msra.mxu0 0.0
        %2953 = vmatpush.msra.mxu0 0.0
        %2954 = vmatpush.msra.mxu0 0.0
        %2955 = vmatpush.msra.mxu0 0.0
        %2956 = vmatpush.msra.mxu0 0.0
        %2957 = vmatpush.msra.mxu0 0.0
        %2958 = vmatpush.msra.mxu0 0.0
        %2959 = vmatpush.msra.mxu0 0.0
        %2960 = vmatpush.msra.mxu0 %v2923
        %2961 = vmatmul.f32.gmra.mxu0 %v2940
        %v2962 = vpop.f32.mrf.mxu0
        %v2963 = vadd.f32 %v2932, %v2962
        %2964 = vmatmul.f32.gmra.mxu0 %v2943
        %v2965 = vpop.f32.mrf.mxu0
        %v2966 = vadd.f32 %v2937, %v2965
        %2967 = vdwg.mxu0
        %2968 = vmatpush.msra.mxu0 0.0
        %2969 = vmatpush.msra.mxu0 0.0
        %2970 = vmatpush.msra.mxu0 0.0
        %2971 = vmatpush.msra.mxu0 0.0
        %2972 = vmatpush.msra.mxu0 0.0
        %2973 = vmatpush.msra.mxu0 0.0
        %2974 = vmatpush.msra.mxu0 0.0
        %2975 = vmatpush.msra.mxu0 0.0
        %2976 = vmatpush.msra.mxu0 0.0
        %2977 = vmatpush.msra.mxu0 0.0
        %2978 = vmatpush.msra.mxu0 0.0
        %2979 = vmatpush.msra.mxu0 0.0
        %2980 = vmatpush.msra.mxu0 0.0
        %2981 = vmatpush.msra.mxu0 0.0
        %2982 = vmatpush.msra.mxu0 0.0
        %2983 = vmatpush.msra.mxu0 %v2924
        %2984 = vmatmul.f32.gmra.mxu0 %v2940
        %v2985 = vpop.f32.mrf.mxu0
        %v2986 = vadd.f32 %v2932, %v2985
        %2987 = vmatmul.f32.gmra.mxu0 %v2943
        %v2988 = vpop.f32.mrf.mxu0
        %v2989 = vadd.f32 %v2937, %v2988
        %2990 = vdwg.mxu0
        %v2991 = vadd.f32 %v2641, %v2963
        %v2992 = vadd.f32 %v2687, %v2986
        %v2993 = vadd.f32 %v2644, %v2966
        %v2994 = vadd.f32 %v2690, %v2989
        %s2995 = scalar_lea.vmem %s397, 96 [#allocation9]
        %2996 = vst [vmem:[%s2995] sm:$0xff] %v2991
        %2997 = vst [vmem:[%s2995 + $0x8] sm:$0xff] %v2992
        %2998 = vst [vmem:[%s2995 + $0x10] sm:$0xff] %v2993
        %2999 = vst [vmem:[%s2995 + $0x18] sm:$0xff] %v2994
        %s3000 = sand.u32 %s251, 1
        %s3001 = scalar_lea.sflag [#allocation6], %s3000
        %s3002 = sand.u32 %s251, 1
        %s3003 = smul.addr %s3002, 128
        %s3004 = scalar_lea.vmem [#allocation9], %s3003
        // Predicated region
        $region69: #{tpu_custom_call.1} parent=59 // pred_check
          %p3005 = pneg %p261
        $region70: #{tpu_custom_call.1} parent=59 // pred_check_branch
          %3007 = sbr.rel (%p3005) target = $region72
        $region71: #{tpu_custom_call.1} parent=59 // pred_region
          %s3008 = smul.u32 4, %s28
          %3010 = vsyncadd %s3001, 0
          %s3011 = smul.addr %s3008, 4
          %s3012 = smul.addr %s3011, 8
          %s3013 = scalar_lea.hbm %s10, %s3012
          %s3014 = sshll.u32 %s3004, 4
          %s3015 = int_to_ptr.vmem [resolvable:$true] %s3014
          %s3016 = sshll.u32 %s3013, 4
          %s3017 = int_to_ptr.hbm [resolvable:$true] %s3016
          %3022 = dma.vmem_to_hbm [thread:$0]  %s3015, 2048, %s3017, %s3001, 256, 256, 16
        $region72: #{tpu_custom_call.1} parent=59 // pred_fallthru
          _
      $region60: #{tpu_custom_call.1} parent=5 // pred_fallthru
        _
      %p3023 = scmp.le.s32.totalorder 2, %s23
      // Predicated region
      $region73: #{tpu_custom_call.1} parent=5 // pred_check
        %p3024 = pneg %p3023
      $region74: #{tpu_custom_call.1} parent=5 // pred_check_branch
        %3026 = sbr.rel (%p3024) target = $region76
      $region75: #{tpu_custom_call.1} parent=5 // pred_region
        %s3027 = ssub.s32 %s23, 2
        // Predicated region
        $region77: #{tpu_custom_call.1} parent=75 // pred_check
          %p3028 = pneg %p267
        $region78: #{tpu_custom_call.1} parent=75 // pred_check_branch
          %3030 = sbr.rel (%p3028) target = $region80
        $region79: #{tpu_custom_call.1} parent=75 // pred_region
          %s3031 = sand.u32 %s252, 1
          %s3032 = scalar_lea.sflag [#allocation6], %s3031
          %s3033 = sand.u32 %s252, 1
          %s3034 = smul.addr %s3033, 128
          %s3035 = scalar_lea.vmem [#allocation9], %s3034
          %3037 = dma.done %s3032, 2048
        $region80: #{tpu_custom_call.1} parent=75 // pred_fallthru
          _
      $region76: #{tpu_custom_call.1} parent=5 // pred_fallthru
        _
    $region6: #{tpu_custom_call.1} parent=1 // loop_footer
      %s27 = sadd.s32 1, %s23
    $region7: #{tpu_custom_call.1} parent=1 // loop_footer_branch
      %22 = sbr.rel target = $region3
    $region8: #{tpu_custom_call.1} parent=1 // loop_exit
      _
    %3038 = vsyncpa [#allocation5], 1
    %s3039 = scalar_lea.sflag [#allocation5], 1
    %3040 = vsyncpa %s3039, 1
    %3041 = vsyncpa [#allocation8], 1
    %3042 = vsyncpa [#allocation6], 1
    %s3043 = scalar_lea.sflag [#allocation6], 1
    %3044 = vsyncpa %s3043, 1

</llo_original>
